<compile_context>
chip_gen: v7x
topology: tpu7x:2x2x1
jax: 0.10.0
libtpu: 0.0.40
codegen_flags: <defaults>
</compile_context>

<pallas_src>
import functools

import jax
import jax.numpy as jnp
from jax.experimental import pallas as pl
from jax.experimental.pallas import tpu as pltpu

BN_EPS = 1e-5
LANE = 128
_VMEM_LIMIT = 32 * 1024 * 1024


def _round_up(x, m):
    return (x + m - 1) // m * m


def _pick_tile_rows(h, w, max_rows=2048):
    """Largest divisor th of h with (th*w) sublane-aligned and th*w <= max_rows."""
    for align in (16, 8):  # prefer native bf16 (16,128) tiling, fall back to 8
        best = None
        for th in range(1, h + 1):
            if h % th == 0 and (th * w) % align == 0 and th * w <= max_rows:
                best = th
        if best is not None:
            return best
    raise ValueError(f"cannot tile H={h}, W={w} into 8-aligned row blocks")


# ---------------------------------------------------------------------------
# Pass A: conv (3 row-shifted matmuls) + bias, emit per-tile BN partial stats.
# ---------------------------------------------------------------------------
def _conv_stats_kernel(x_ref, w_ref, b_ref, y_ref, stats_ref, *, th, w):
    # x_ref:     (1, (th+2)*w, 3*cin)  bf16  kw-unrolled tile with 1-row halo
    # w_ref:     (3, 3*cin, coutp)     bf16  per-kh matmul weights
    # b_ref:     (1, coutp)            f32   conv bias (channel-padded)
    # y_ref:     (th*w, coutp)         bf16  pre-BN conv output tile
    # stats_ref: (1, 2, coutp)         f32   per-tile [sum; sumsq]
    rows = th * w

    y = jnp.dot(x_ref[0, 0:rows, :], w_ref[0],
                preferred_element_type=jnp.float32)
    for kh in range(1, 3):
        y += jnp.dot(x_ref[0, kh * w:kh * w + rows, :], w_ref[kh],
                     preferred_element_type=jnp.float32)
    y += b_ref[...]

    y_ref[...] = y.astype(y_ref.dtype)
    stats_ref[0, :, :] = jnp.concatenate(
        [jnp.sum(y, axis=0, keepdims=True),
         jnp.sum(y * y, axis=0, keepdims=True)], axis=0)


def _conv_bias_stats(tiles, wmat, bias_p, *, th, w, coutp):
    t, tile_rows_in, kdim = tiles.shape
    rows = th * w
    kernel = functools.partial(_conv_stats_kernel, th=th, w=w)
    return pl.pallas_call(
        kernel,
        out_shape=(
            jax.ShapeDtypeStruct((t * rows, coutp), jnp.bfloat16),
            jax.ShapeDtypeStruct((t, 2, coutp), jnp.float32),
        ),
        grid=(t,),
        in_specs=[
            pl.BlockSpec((1, tile_rows_in, kdim), lambda i: (i, 0, 0)),
            pl.BlockSpec((3, kdim, coutp), lambda i: (0, 0, 0)),
            pl.BlockSpec((1, coutp), lambda i: (0, 0)),
        ],
        out_specs=(
            pl.BlockSpec((rows, coutp), lambda i: (i, 0)),
            pl.BlockSpec((1, 2, coutp), lambda i: (i, 0, 0)),
        ),
        compiler_params=pltpu.CompilerParams(
            dimension_semantics=("parallel",),      # per-tile partial stats
            vmem_limit_bytes=_VMEM_LIMIT),
    )(tiles, wmat, bias_p)


# ---------------------------------------------------------------------------
# Pass B: normalize + affine + ReLU (lane-dense stores, megacore-parallel).
# ---------------------------------------------------------------------------
def _bn_relu_kernel(y_ref, scale_ref, shift_ref, o_ref):
    y = y_ref[...].astype(jnp.float32)
    o_ref[...] = jnp.maximum(
        y * scale_ref[...] + shift_ref[...], 0.0).astype(o_ref.dtype)


def _bn_relu(y, scale, shift, *, tile_rows, out_dtype):
    r, coutp = y.shape
    t = r // tile_rows
    return pl.pallas_call(
        _bn_relu_kernel,
        out_shape=jax.ShapeDtypeStruct((r, coutp), out_dtype),
        grid=(t,),
        in_specs=[
            pl.BlockSpec((tile_rows, coutp), lambda i: (i, 0)),
            pl.BlockSpec((1, coutp), lambda i: (0, 0)),
            pl.BlockSpec((1, coutp), lambda i: (0, 0)),
        ],
        out_specs=pl.BlockSpec((tile_rows, coutp), lambda i: (i, 0)),
        compiler_params=pltpu.CompilerParams(
            dimension_semantics=("parallel",),
            vmem_limit_bytes=_VMEM_LIMIT),
    )(y, scale, shift)


# ---------------------------------------------------------------------------
# Wrapper-side layout prep (cheap: ~3x channel unroll, tiny halo overlap).
# ---------------------------------------------------------------------------
def _prep_row_tiles(x_nhwc, th):
    """(N,H,W,C) -> (N*(H//th), (th+2)*W, 3*C) bf16 kw-unrolled halo row-tiles."""
    n, h, w, c = x_nhwc.shape
    x = x_nhwc.astype(jnp.bfloat16)
    xw = jnp.pad(x, ((0, 0), (0, 0), (1, 1), (0, 0)))           # pad W by 1
    xu = jnp.concatenate([xw[:, :, k:k + w, :] for k in range(3)], axis=-1)
    xu = jnp.pad(xu, ((0, 0), (1, 1), (0, 0), (0, 0)))          # pad H by 1
    nt = h // th
    tiles = jnp.stack([xu[:, i * th:i * th + th + 2] for i in range(nt)],
                      axis=1)                                    # (N,nt,th+2,W,3C)
    return tiles.reshape(n * nt, (th + 2) * w, 3 * c)


def _weight_to_shifted_matmul(w_oihw, coutp):
    """(Cout,Cin,3,3) -> (3, 3*Cin, Coutp) bf16 with layout [kh, kw*Cin+ci, co]."""
    cout, cin, _, _ = w_oihw.shape
    wt = jnp.transpose(w_oihw, (2, 3, 1, 0)).reshape(3, 3 * cin, cout)
    wt = jnp.pad(wt, ((0, 0), (0, 0), (0, coutp - cout)))
    return wt.astype(jnp.bfloat16)


def _pad_channels(v, coutp):
    return jnp.pad(v.astype(jnp.float32), (0, coutp - v.shape[0]))


def _conv_bn_relu_layer(x_nhwc, w_oihw, bias, gamma, beta, out_dtype):
    n, h, w, _ = x_nhwc.shape
    cout = w_oihw.shape[0]
    coutp = _round_up(cout, LANE)
    th = _pick_tile_rows(h, w)
    rows = th * w

    tiles = _prep_row_tiles(x_nhwc, th)
    wmat = _weight_to_shifted_matmul(w_oihw, coutp)
    bias_p = _pad_channels(bias, coutp).reshape(1, coutp)

    y, partials = _conv_bias_stats(tiles, wmat, bias_p, th=th, w=w, coutp=coutp)
    stats = jnp.sum(partials, axis=0)                       # (2, coutp) f32

    # Finalize training-mode BatchNorm statistics (biased var over N*H*W).
    r = float(n * h * w)
    mean = stats[0] / r
    var = jnp.maximum(stats[1] / r - mean * mean, 0.0)
    inv = jax.lax.rsqrt(var + BN_EPS)
    gp = _pad_channels(gamma, coutp)
    scale = (gp * inv).reshape(1, coutp)
    shift = (_pad_channels(beta, coutp) - mean * gp * inv).reshape(1, coutp)

    act = _bn_relu(y, scale, shift, tile_rows=rows, out_dtype=out_dtype)
    return act[:, :cout].reshape(n, h, w, cout)


@jax.jit
def double_conv(x_nchw, params):
    """Forward of DoubleConv.  Input/output are NCHW (PyTorch convention)."""
    x = jnp.transpose(x_nchw, (0, 2, 3, 1))                     # -> NHWC
    a1 = _conv_bn_relu_layer(x, params["w1"], params["b1"],
                             params["g1"], params["beta1"], jnp.bfloat16)
    a2 = _conv_bn_relu_layer(a1, params["w2"], params["b2"],
                             params["g2"], params["beta2"], jnp.float32)
    return jnp.transpose(a2, (0, 3, 1, 2))                      # -> NCHW


def init_double_conv_params(key, cin, cout):
    ks = jax.random.split(key, 8)
    scale1 = 1.0 / jnp.sqrt(cin * 9.0)
    scale2 = 1.0 / jnp.sqrt(cout * 9.0)
    return {
        "w1": jax.random.uniform(ks[0], (cout, cin, 3, 3), jnp.float32,
                                 -scale1, scale1),
        "b1": jax.random.uniform(ks[1], (cout,), jnp.float32, -scale1, scale1),
        "g1": 1.0 + 0.1 * jax.random.normal(ks[2], (cout,), jnp.float32),
        "beta1": 0.1 * jax.random.normal(ks[3], (cout,), jnp.float32),
        "w2": jax.random.uniform(ks[4], (cout, cout, 3, 3), jnp.float32,
                                 -scale2, scale2),
        "b2": jax.random.uniform(ks[5], (cout,), jnp.float32, -scale2, scale2),
        "g2": 1.0 + 0.1 * jax.random.normal(ks[6], (cout,), jnp.float32),
        "beta2": 0.1 * jax.random.normal(ks[7], (cout,), jnp.float32),
    }


def _reference_double_conv(x_nchw, params):
    """Pure-JAX f32 reference (Conv2d -> BN(train) -> ReLU) x 2."""
    def layer(x, w, b, g, beta):
        y = jax.lax.conv_general_dilated(
            x, w, window_strides=(1, 1), padding=((1, 1), (1, 1)),
            dimension_numbers=("NCHW", "OIHW", "NCHW"))
        y = y + b.reshape(1, -1, 1, 1)
        mean = jnp.mean(y, axis=(0, 2, 3), keepdims=True)
        var = jnp.mean((y - mean) ** 2, axis=(0, 2, 3), keepdims=True)
        y = (y - mean) * jax.lax.rsqrt(var + BN_EPS)
        y = y * g.reshape(1, -1, 1, 1) + beta.reshape(1, -1, 1, 1)
        return jnp.maximum(y, 0.0)

    y1 = layer(x_nchw, params["w1"], params["b1"], params["g1"], params["beta1"])
    return layer(y1, params["w2"], params["b2"], params["g2"], params["beta2"])


if __name__ == "__main__":
    key = jax.random.PRNGKey(0)
    k_x, k_p = jax.random.split(key)

    N, CIN, COUT, H, W = 2, 4, 8, 16, 16
    x = jax.random.normal(k_x, (N, CIN, H, W), jnp.float32)     # NCHW input
    params = init_double_conv_params(k_p, CIN, COUT)

    out = double_conv(x, params)
    jax.block_until_ready(out)
    assert out.shape == (N, COUT, H, W)

    # Loose tolerance: bf16 activations/weights on the MXU + bf16 intermediate.
    ref = _reference_double_conv(x, params)
    max_err = float(jnp.max(jnp.abs(out - ref)))
    assert max_err < 1e-1, f"max abs error {max_err}"

    print("KERNEL_OK")
</pallas_src>

<mosaic_0001>
module attributes {stable_mosaic.version = 11 : i64} {
  func.func @_conv_stats_kernel(%arg0: i32, %arg1: memref<1x288x12xbf16, #tpu.memory_space<vmem>>, %arg2: memref<3x12x128xbf16, #tpu.memory_space<vmem>>, %arg3: memref<1x128xf32, #tpu.memory_space<vmem>>, %arg4: memref<256x128xbf16, #tpu.memory_space<vmem>>, %arg5: memref<1x2x128xf32, #tpu.memory_space<vmem>>) attributes {dimension_semantics = [#tpu.dimension_semantics<parallel>], iteration_bounds = array<i64: 2>, scalar_prefetch = 0 : i64, scratch_operands = 0 : i64, tpu.core_type = #tpu.core_type<tc>, window_params = [{transform_indices = @transform_0, window_bounds = array<i64: 1, 288, 12>}, {pipeline_mode = #tpu.pipeline_mode<synchronous>, transform_indices = @transform_1, window_bounds = array<i64: 3, 12, 128>}, {pipeline_mode = #tpu.pipeline_mode<synchronous>, transform_indices = @transform_2, window_bounds = array<i64: 1, 128>}, {transform_indices = @transform_3, window_bounds = array<i64: 256, 128>}, {transform_indices = @transform_4, window_bounds = array<i64: 1, 2, 128>}]} {
    %c0 = arith.constant 0 : index
    %c0_0 = arith.constant 0 : index
    %c0_1 = arith.constant 0 : index
    %0 = vector.load %arg1[%c0, %c0_0, %c0_1] : memref<1x288x12xbf16, #tpu.memory_space<vmem>>, vector<1x256x12xbf16>
    %1 = vector.shape_cast %0 : vector<1x256x12xbf16> to vector<256x12xbf16>
    %c0_2 = arith.constant 0 : index
    %c0_3 = arith.constant 0 : index
    %c0_4 = arith.constant 0 : index
    %2 = vector.load %arg2[%c0_2, %c0_3, %c0_4] : memref<3x12x128xbf16, #tpu.memory_space<vmem>>, vector<1x12x128xbf16>
    %3 = vector.shape_cast %2 : vector<1x12x128xbf16> to vector<12x128xbf16>
    %cst = arith.constant dense<0.000000e+00> : vector<256x128xf32>
    %4 = tpu.matmul %1, %3, %cst {dimension_numbers = #tpu.dot_dimension_numbers<[1], [0], [0], [1], [0, 0, 1, 1], [], []>} : vector<256x12xbf16>, vector<12x128xbf16>, vector<256x128xf32> -> vector<256x128xf32>
    %c0_5 = arith.constant 0 : index
    %c16 = arith.constant 16 : index
    %c0_6 = arith.constant 0 : index
    %5 = vector.load %arg1[%c0_5, %c16, %c0_6] : memref<1x288x12xbf16, #tpu.memory_space<vmem>>, vector<1x256x12xbf16>
    %6 = vector.shape_cast %5 : vector<1x256x12xbf16> to vector<256x12xbf16>
    %c1 = arith.constant 1 : index
    %c0_7 = arith.constant 0 : index
    %c0_8 = arith.constant 0 : index
    %7 = vector.load %arg2[%c1, %c0_7, %c0_8] : memref<3x12x128xbf16, #tpu.memory_space<vmem>>, vector<1x12x128xbf16>
    %8 = vector.shape_cast %7 : vector<1x12x128xbf16> to vector<12x128xbf16>
    %cst_9 = arith.constant dense<0.000000e+00> : vector<256x128xf32>
    %9 = tpu.matmul %6, %8, %cst_9 {dimension_numbers = #tpu.dot_dimension_numbers<[1], [0], [0], [1], [0, 0, 1, 1], [], []>} : vector<256x12xbf16>, vector<12x128xbf16>, vector<256x128xf32> -> vector<256x128xf32>
    %10 = arith.addf %4, %9 : vector<256x128xf32>
    %c0_10 = arith.constant 0 : index
    %c32 = arith.constant 32 : index
    %c0_11 = arith.constant 0 : index
    %11 = vector.load %arg1[%c0_10, %c32, %c0_11] : memref<1x288x12xbf16, #tpu.memory_space<vmem>>, vector<1x256x12xbf16>
    %12 = vector.shape_cast %11 : vector<1x256x12xbf16> to vector<256x12xbf16>
    %c2 = arith.constant 2 : index
    %c0_12 = arith.constant 0 : index
    %c0_13 = arith.constant 0 : index
    %13 = vector.load %arg2[%c2, %c0_12, %c0_13] : memref<3x12x128xbf16, #tpu.memory_space<vmem>>, vector<1x12x128xbf16>
    %14 = vector.shape_cast %13 : vector<1x12x128xbf16> to vector<12x128xbf16>
    %cst_14 = arith.constant dense<0.000000e+00> : vector<256x128xf32>
    %15 = tpu.matmul %12, %14, %cst_14 {dimension_numbers = #tpu.dot_dimension_numbers<[1], [0], [0], [1], [0, 0, 1, 1], [], []>} : vector<256x12xbf16>, vector<12x128xbf16>, vector<256x128xf32> -> vector<256x128xf32>
    %16 = arith.addf %10, %15 : vector<256x128xf32>
    %c0_15 = arith.constant 0 : index
    %c0_16 = arith.constant 0 : index
    %17 = vector.load %arg3[%c0_15, %c0_16] : memref<1x128xf32, #tpu.memory_space<vmem>>, vector<1x128xf32>
    %18 = vector.broadcast %17 : vector<1x128xf32> to vector<256x128xf32>
    %19 = arith.addf %16, %18 : vector<256x128xf32>
    %20 = arith.truncf %19 : vector<256x128xf32> to vector<256x128xbf16>
    %c0_17 = arith.constant 0 : index
    %c0_18 = arith.constant 0 : index
    %21 = vector.load %arg4[%c0_17, %c0_18] : memref<256x128xbf16, #tpu.memory_space<vmem>>, vector<256x128xbf16>
    tpu.vector_store %arg4[%c0_17, %c0_18], %20 {strides = array<i32>} : memref<256x128xbf16, #tpu.memory_space<vmem>>, vector<256x128xbf16>,
    %cst_19 = arith.constant dense<0.000000e+00> : vector<128xf32>
    %22 = vector.multi_reduction <add>, %19, %cst_19 [0] : vector<256x128xf32> to vector<128xf32>
    %23 = vector.shape_cast %22 : vector<128xf32> to vector<1x128xf32>
    %24 = arith.mulf %19, %19 : vector<256x128xf32>
    %cst_20 = arith.constant dense<0.000000e+00> : vector<128xf32>
    %25 = vector.multi_reduction <add>, %24, %cst_20 [0] : vector<256x128xf32> to vector<128xf32>
    %26 = vector.shape_cast %25 : vector<128xf32> to vector<1x128xf32>
    %27 = tpu.concatenate %23, %26 in 0 : vector<1x128xf32>, vector<1x128xf32> -> vector<2x128xf32>
    %c0_21 = arith.constant 0 : index
    %c0_22 = arith.constant 0 : index
    %c0_23 = arith.constant 0 : index
    %28 = vector.load %arg5[%c0_21, %c0_22, %c0_23] : memref<1x2x128xf32, #tpu.memory_space<vmem>>, vector<1x2x128xf32>
    %29 = vector.shape_cast %28 : vector<1x2x128xf32> to vector<2x128xf32>
    %30 = vector.shape_cast %27 : vector<2x128xf32> to vector<1x2x128xf32>
    tpu.vector_store %arg5[%c0_21, %c0_22, %c0_23], %30 {strides = array<i32>} : memref<1x2x128xf32, #tpu.memory_space<vmem>>, vector<1x2x128xf32>,
    return
  }
  func.func @transform_0(%arg0: i32) -> (i32, i32, i32) {
    %c0_i32 = arith.constant 0 : i32
    %c0_i32_0 = arith.constant 0 : i32
    %c0_i32_1 = arith.constant 0 : i32
    return %arg0, %c0_i32, %c0_i32_0 : i32, i32, i32
  }
  func.func @transform_1(%arg0: i32) -> (i32, i32, i32) {
    %c0_i32 = arith.constant 0 : i32
    %c0_i32_0 = arith.constant 0 : i32
    %c0_i32_1 = arith.constant 0 : i32
    %c0_i32_2 = arith.constant 0 : i32
    return %c0_i32, %c0_i32_0, %c0_i32_1 : i32, i32, i32
  }
  func.func @transform_2(%arg0: i32) -> (i32, i32) {
    %c0_i32 = arith.constant 0 : i32
    %c0_i32_0 = arith.constant 0 : i32
    %c0_i32_1 = arith.constant 0 : i32
    return %c0_i32, %c0_i32_0 : i32, i32
  }
  func.func @transform_3(%arg0: i32) -> (i32, i32) {
    %c0_i32 = arith.constant 0 : i32
    %c0_i32_0 = arith.constant 0 : i32
    return %arg0, %c0_i32 : i32, i32
  }
  func.func @transform_4(%arg0: i32) -> (i32, i32, i32) {
    %c0_i32 = arith.constant 0 : i32
    %c0_i32_0 = arith.constant 0 : i32
    %c0_i32_1 = arith.constant 0 : i32
    return %arg0, %c0_i32, %c0_i32_0 : i32, i32, i32
  }
}

module attributes {stable_mosaic.version = 11 : i64} {
  func.func @_bn_relu_kernel(%arg0: i32, %arg1: memref<256x128xbf16, #tpu.memory_space<vmem>>, %arg2: memref<1x128xf32, #tpu.memory_space<vmem>>, %arg3: memref<1x128xf32, #tpu.memory_space<vmem>>, %arg4: memref<256x128xbf16, #tpu.memory_space<vmem>>) attributes {dimension_semantics = [#tpu.dimension_semantics<parallel>], iteration_bounds = array<i64: 2>, scalar_prefetch = 0 : i64, scratch_operands = 0 : i64, tpu.core_type = #tpu.core_type<tc>, window_params = [{transform_indices = @transform_0, window_bounds = array<i64: 256, 128>}, {pipeline_mode = #tpu.pipeline_mode<synchronous>, transform_indices = @transform_1, window_bounds = array<i64: 1, 128>}, {pipeline_mode = #tpu.pipeline_mode<synchronous>, transform_indices = @transform_2, window_bounds = array<i64: 1, 128>}, {transform_indices = @transform_3, window_bounds = array<i64: 256, 128>}]} {
    %c0 = arith.constant 0 : index
    %c0_0 = arith.constant 0 : index
    %0 = vector.load %arg1[%c0, %c0_0] : memref<256x128xbf16, #tpu.memory_space<vmem>>, vector<256x128xbf16>
    %1 = arith.extf %0 : vector<256x128xbf16> to vector<256x128xf32>
    %c0_1 = arith.constant 0 : index
    %c0_2 = arith.constant 0 : index
    %2 = vector.load %arg2[%c0_1, %c0_2] : memref<1x128xf32, #tpu.memory_space<vmem>>, vector<1x128xf32>
    %3 = vector.broadcast %2 : vector<1x128xf32> to vector<256x128xf32>
    %4 = arith.mulf %1, %3 : vector<256x128xf32>
    %c0_3 = arith.constant 0 : index
    %c0_4 = arith.constant 0 : index
    %5 = vector.load %arg3[%c0_3, %c0_4] : memref<1x128xf32, #tpu.memory_space<vmem>>, vector<1x128xf32>
    %6 = vector.broadcast %5 : vector<1x128xf32> to vector<256x128xf32>
    %7 = arith.addf %4, %6 : vector<256x128xf32>
    %cst = arith.constant 0.000000e+00 : f32
    %8 = vector.broadcast %cst : f32 to vector<256x128xf32>
    %9 = arith.maximumf %7, %8 : vector<256x128xf32>
    %10 = arith.truncf %9 : vector<256x128xf32> to vector<256x128xbf16>
    %c0_5 = arith.constant 0 : index
    %c0_6 = arith.constant 0 : index
    %11 = vector.load %arg4[%c0_5, %c0_6] : memref<256x128xbf16, #tpu.memory_space<vmem>>, vector<256x128xbf16>
    tpu.vector_store %arg4[%c0_5, %c0_6], %10 {strides = array<i32>} : memref<256x128xbf16, #tpu.memory_space<vmem>>, vector<256x128xbf16>,
    return
  }
  func.func @transform_0(%arg0: i32) -> (i32, i32) {
    %c0_i32 = arith.constant 0 : i32
    %c0_i32_0 = arith.constant 0 : i32
    return %arg0, %c0_i32 : i32, i32
  }
  func.func @transform_1(%arg0: i32) -> (i32, i32) {
    %c0_i32 = arith.constant 0 : i32
    %c0_i32_0 = arith.constant 0 : i32
    %c0_i32_1 = arith.constant 0 : i32
    return %c0_i32, %c0_i32_0 : i32, i32
  }
  func.func @transform_2(%arg0: i32) -> (i32, i32) {
    %c0_i32 = arith.constant 0 : i32
    %c0_i32_0 = arith.constant 0 : i32
    %c0_i32_1 = arith.constant 0 : i32
    return %c0_i32, %c0_i32_0 : i32, i32
  }
  func.func @transform_3(%arg0: i32) -> (i32, i32) {
    %c0_i32 = arith.constant 0 : i32
    %c0_i32_0 = arith.constant 0 : i32
    return %arg0, %c0_i32 : i32, i32
  }
}

module attributes {stable_mosaic.version = 11 : i64} {
  func.func @_bn_relu_kernel(%arg0: i32, %arg1: memref<256x128xbf16, #tpu.memory_space<vmem>>, %arg2: memref<1x128xf32, #tpu.memory_space<vmem>>, %arg3: memref<1x128xf32, #tpu.memory_space<vmem>>, %arg4: memref<256x128xf32, #tpu.memory_space<vmem>>) attributes {dimension_semantics = [#tpu.dimension_semantics<parallel>], iteration_bounds = array<i64: 2>, scalar_prefetch = 0 : i64, scratch_operands = 0 : i64, tpu.core_type = #tpu.core_type<tc>, window_params = [{transform_indices = @transform_0, window_bounds = array<i64: 256, 128>}, {pipeline_mode = #tpu.pipeline_mode<synchronous>, transform_indices = @transform_1, window_bounds = array<i64: 1, 128>}, {pipeline_mode = #tpu.pipeline_mode<synchronous>, transform_indices = @transform_2, window_bounds = array<i64: 1, 128>}, {transform_indices = @transform_3, window_bounds = array<i64: 256, 128>}]} {
    %c0 = arith.constant 0 : index
    %c0_0 = arith.constant 0 : index
    %0 = vector.load %arg1[%c0, %c0_0] : memref<256x128xbf16, #tpu.memory_space<vmem>>, vector<256x128xbf16>
    %1 = arith.extf %0 : vector<256x128xbf16> to vector<256x128xf32>
    %c0_1 = arith.constant 0 : index
    %c0_2 = arith.constant 0 : index
    %2 = vector.load %arg2[%c0_1, %c0_2] : memref<1x128xf32, #tpu.memory_space<vmem>>, vector<1x128xf32>
    %3 = vector.broadcast %2 : vector<1x128xf32> to vector<256x128xf32>
    %4 = arith.mulf %1, %3 : vector<256x128xf32>
    %c0_3 = arith.constant 0 : index
    %c0_4 = arith.constant 0 : index
    %5 = vector.load %arg3[%c0_3, %c0_4] : memref<1x128xf32, #tpu.memory_space<vmem>>, vector<1x128xf32>
    %6 = vector.broadcast %5 : vector<1x128xf32> to vector<256x128xf32>
    %7 = arith.addf %4, %6 : vector<256x128xf32>
    %cst = arith.constant 0.000000e+00 : f32
    %8 = vector.broadcast %cst : f32 to vector<256x128xf32>
    %9 = arith.maximumf %7, %8 : vector<256x128xf32>
    %c0_5 = arith.constant 0 : index
    %c0_6 = arith.constant 0 : index
    %10 = vector.load %arg4[%c0_5, %c0_6] : memref<256x128xf32, #tpu.memory_space<vmem>>, vector<256x128xf32>
    tpu.vector_store %arg4[%c0_5, %c0_6], %9 {strides = array<i32>} : memref<256x128xf32, #tpu.memory_space<vmem>>, vector<256x128xf32>,
    return
  }
  func.func @transform_0(%arg0: i32) -> (i32, i32) {
    %c0_i32 = arith.constant 0 : i32
    %c0_i32_0 = arith.constant 0 : i32
    return %arg0, %c0_i32 : i32, i32
  }
  func.func @transform_1(%arg0: i32) -> (i32, i32) {
    %c0_i32 = arith.constant 0 : i32
    %c0_i32_0 = arith.constant 0 : i32
    %c0_i32_1 = arith.constant 0 : i32
    return %c0_i32, %c0_i32_0 : i32, i32
  }
  func.func @transform_2(%arg0: i32) -> (i32, i32) {
    %c0_i32 = arith.constant 0 : i32
    %c0_i32_0 = arith.constant 0 : i32
    %c0_i32_1 = arith.constant 0 : i32
    return %c0_i32, %c0_i32_0 : i32, i32
  }
  func.func @transform_3(%arg0: i32) -> (i32, i32) {
    %c0_i32 = arith.constant 0 : i32
    %c0_i32_0 = arith.constant 0 : i32
    return %arg0, %c0_i32 : i32, i32
  }
}

module attributes {stable_mosaic.version = 11 : i64} {
  func.func @_conv_stats_kernel(%arg0: i32, %arg1: memref<1x288x24xbf16, #tpu.memory_space<vmem>>, %arg2: memref<3x24x128xbf16, #tpu.memory_space<vmem>>, %arg3: memref<1x128xf32, #tpu.memory_space<vmem>>, %arg4: memref<256x128xbf16, #tpu.memory_space<vmem>>, %arg5: memref<1x2x128xf32, #tpu.memory_space<vmem>>) attributes {dimension_semantics = [#tpu.dimension_semantics<parallel>], iteration_bounds = array<i64: 2>, scalar_prefetch = 0 : i64, scratch_operands = 0 : i64, tpu.core_type = #tpu.core_type<tc>, window_params = [{transform_indices = @transform_0, window_bounds = array<i64: 1, 288, 24>}, {pipeline_mode = #tpu.pipeline_mode<synchronous>, transform_indices = @transform_1, window_bounds = array<i64: 3, 24, 128>}, {pipeline_mode = #tpu.pipeline_mode<synchronous>, transform_indices = @transform_2, window_bounds = array<i64: 1, 128>}, {transform_indices = @transform_3, window_bounds = array<i64: 256, 128>}, {transform_indices = @transform_4, window_bounds = array<i64: 1, 2, 128>}]} {
    %c0 = arith.constant 0 : index
    %c0_0 = arith.constant 0 : index
    %c0_1 = arith.constant 0 : index
    %0 = vector.load %arg1[%c0, %c0_0, %c0_1] : memref<1x288x24xbf16, #tpu.memory_space<vmem>>, vector<1x256x24xbf16>
    %1 = vector.shape_cast %0 : vector<1x256x24xbf16> to vector<256x24xbf16>
    %c0_2 = arith.constant 0 : index
    %c0_3 = arith.constant 0 : index
    %c0_4 = arith.constant 0 : index
    %2 = vector.load %arg2[%c0_2, %c0_3, %c0_4] : memref<3x24x128xbf16, #tpu.memory_space<vmem>>, vector<1x24x128xbf16>
    %3 = vector.shape_cast %2 : vector<1x24x128xbf16> to vector<24x128xbf16>
    %cst = arith.constant dense<0.000000e+00> : vector<256x128xf32>
    %4 = tpu.matmul %1, %3, %cst {dimension_numbers = #tpu.dot_dimension_numbers<[1], [0], [0], [1], [0, 0, 1, 1], [], []>} : vector<256x24xbf16>, vector<24x128xbf16>, vector<256x128xf32> -> vector<256x128xf32>
    %c0_5 = arith.constant 0 : index
    %c16 = arith.constant 16 : index
    %c0_6 = arith.constant 0 : index
    %5 = vector.load %arg1[%c0_5, %c16, %c0_6] : memref<1x288x24xbf16, #tpu.memory_space<vmem>>, vector<1x256x24xbf16>
    %6 = vector.shape_cast %5 : vector<1x256x24xbf16> to vector<256x24xbf16>
    %c1 = arith.constant 1 : index
    %c0_7 = arith.constant 0 : index
    %c0_8 = arith.constant 0 : index
    %7 = vector.load %arg2[%c1, %c0_7, %c0_8] : memref<3x24x128xbf16, #tpu.memory_space<vmem>>, vector<1x24x128xbf16>
    %8 = vector.shape_cast %7 : vector<1x24x128xbf16> to vector<24x128xbf16>
    %cst_9 = arith.constant dense<0.000000e+00> : vector<256x128xf32>
    %9 = tpu.matmul %6, %8, %cst_9 {dimension_numbers = #tpu.dot_dimension_numbers<[1], [0], [0], [1], [0, 0, 1, 1], [], []>} : vector<256x24xbf16>, vector<24x128xbf16>, vector<256x128xf32> -> vector<256x128xf32>
    %10 = arith.addf %4, %9 : vector<256x128xf32>
    %c0_10 = arith.constant 0 : index
    %c32 = arith.constant 32 : index
    %c0_11 = arith.constant 0 : index
    %11 = vector.load %arg1[%c0_10, %c32, %c0_11] : memref<1x288x24xbf16, #tpu.memory_space<vmem>>, vector<1x256x24xbf16>
    %12 = vector.shape_cast %11 : vector<1x256x24xbf16> to vector<256x24xbf16>
    %c2 = arith.constant 2 : index
    %c0_12 = arith.constant 0 : index
    %c0_13 = arith.constant 0 : index
    %13 = vector.load %arg2[%c2, %c0_12, %c0_13] : memref<3x24x128xbf16, #tpu.memory_space<vmem>>, vector<1x24x128xbf16>
    %14 = vector.shape_cast %13 : vector<1x24x128xbf16> to vector<24x128xbf16>
    %cst_14 = arith.constant dense<0.000000e+00> : vector<256x128xf32>
    %15 = tpu.matmul %12, %14, %cst_14 {dimension_numbers = #tpu.dot_dimension_numbers<[1], [0], [0], [1], [0, 0, 1, 1], [], []>} : vector<256x24xbf16>, vector<24x128xbf16>, vector<256x128xf32> -> vector<256x128xf32>
    %16 = arith.addf %10, %15 : vector<256x128xf32>
    %c0_15 = arith.constant 0 : index
    %c0_16 = arith.constant 0 : index
    %17 = vector.load %arg3[%c0_15, %c0_16] : memref<1x128xf32, #tpu.memory_space<vmem>>, vector<1x128xf32>
    %18 = vector.broadcast %17 : vector<1x128xf32> to vector<256x128xf32>
    %19 = arith.addf %16, %18 : vector<256x128xf32>
    %20 = arith.truncf %19 : vector<256x128xf32> to vector<256x128xbf16>
    %c0_17 = arith.constant 0 : index
    %c0_18 = arith.constant 0 : index
    %21 = vector.load %arg4[%c0_17, %c0_18] : memref<256x128xbf16, #tpu.memory_space<vmem>>, vector<256x128xbf16>
    tpu.vector_store %arg4[%c0_17, %c0_18], %20 {strides = array<i32>} : memref<256x128xbf16, #tpu.memory_space<vmem>>, vector<256x128xbf16>,
    %cst_19 = arith.constant dense<0.000000e+00> : vector<128xf32>
    %22 = vector.multi_reduction <add>, %19, %cst_19 [0] : vector<256x128xf32> to vector<128xf32>
    %23 = vector.shape_cast %22 : vector<128xf32> to vector<1x128xf32>
    %24 = arith.mulf %19, %19 : vector<256x128xf32>
    %cst_20 = arith.constant dense<0.000000e+00> : vector<128xf32>
    %25 = vector.multi_reduction <add>, %24, %cst_20 [0] : vector<256x128xf32> to vector<128xf32>
    %26 = vector.shape_cast %25 : vector<128xf32> to vector<1x128xf32>
    %27 = tpu.concatenate %23, %26 in 0 : vector<1x128xf32>, vector<1x128xf32> -> vector<2x128xf32>
    %c0_21 = arith.constant 0 : index
    %c0_22 = arith.constant 0 : index
    %c0_23 = arith.constant 0 : index
    %28 = vector.load %arg5[%c0_21, %c0_22, %c0_23] : memref<1x2x128xf32, #tpu.memory_space<vmem>>, vector<1x2x128xf32>
    %29 = vector.shape_cast %28 : vector<1x2x128xf32> to vector<2x128xf32>
    %30 = vector.shape_cast %27 : vector<2x128xf32> to vector<1x2x128xf32>
    tpu.vector_store %arg5[%c0_21, %c0_22, %c0_23], %30 {strides = array<i32>} : memref<1x2x128xf32, #tpu.memory_space<vmem>>, vector<1x2x128xf32>,
    return
  }
  func.func @transform_0(%arg0: i32) -> (i32, i32, i32) {
    %c0_i32 = arith.constant 0 : i32
    %c0_i32_0 = arith.constant 0 : i32
    %c0_i32_1 = arith.constant 0 : i32
    return %arg0, %c0_i32, %c0_i32_0 : i32, i32, i32
  }
  func.func @transform_1(%arg0: i32) -> (i32, i32, i32) {
    %c0_i32 = arith.constant 0 : i32
    %c0_i32_0 = arith.constant 0 : i32
    %c0_i32_1 = arith.constant 0 : i32
    %c0_i32_2 = arith.constant 0 : i32
    return %c0_i32, %c0_i32_0, %c0_i32_1 : i32, i32, i32
  }
  func.func @transform_2(%arg0: i32) -> (i32, i32) {
    %c0_i32 = arith.constant 0 : i32
    %c0_i32_0 = arith.constant 0 : i32
    %c0_i32_1 = arith.constant 0 : i32
    return %c0_i32, %c0_i32_0 : i32, i32
  }
  func.func @transform_3(%arg0: i32) -> (i32, i32) {
    %c0_i32 = arith.constant 0 : i32
    %c0_i32_0 = arith.constant 0 : i32
    return %arg0, %c0_i32 : i32, i32
  }
  func.func @transform_4(%arg0: i32) -> (i32, i32, i32) {
    %c0_i32 = arith.constant 0 : i32
    %c0_i32_0 = arith.constant 0 : i32
    %c0_i32_1 = arith.constant 0 : i32
    return %arg0, %c0_i32, %c0_i32_0 : i32, i32, i32
  }
}

</mosaic_0001>

<llo_original>
// kernel: double_conv.5
$region0: #{double_conv.5}
  #allocation0 [shape = 'u32[]', space=smem, size = 0x4, offset = 0x4, fixed_abs, tag = 'smem constant byte address 0x4 - core index']
  #allocation1 [shape = 'u32[144,128]{1,0:T(1,128)}', space=vmem, size = 0x12000, scoped, tag = 'internal scratch']
  %s0 = inlined_call_operand.vmem [shape: bf16[512,128], index: 0, kind: input, shape index: {}]
  %s1 = inlined_call_operand.vmem [shape: f32[1,128], index: 1, kind: input, shape index: {}]
  %s2 = inlined_call_operand.vmem [shape: f32[1,128], index: 2, kind: input, shape index: {}]
  %s3 = inlined_call_operand.vmem [shape: bf16[512,128], index: 3, kind: output, shape index: {}]
  %s4 = sld [smem:[#allocation0]]
  $region45: #{double_conv.5} parent=0
    _
  %s6 = ssub.s32 1, %s4
  %s7 = scalar_select 0, %s6, %s4
  loop: start=0, step=1, limit=4
  $region2: #{double_conv.5} parent=0 // loop_pre_header
    _
  $region3: #{double_conv.5} parent=0 // loop_header
    %s9 = sphi 0, %s13
    %p10 = scmp.ge.s32.totalorder %s9, 4
    %s19 = sphi 0, %s21
    %s22 = sphi 0, %s19
    %s23 = sphi 0, %s22
    %s39 = sphi 0, %s23
    %s43 = sphi 0, %s43
    %s45 = sphi 0, %s43
    %s46 = sphi 0, %s45
    %s60 = sphi 0, %s46
    %s64 = sphi 0, %s64
    %s66 = sphi 0, %s64
    %s67 = sphi 0, %s66
    %s81 = sphi 0, %s67
    %s87 = sphi 0, %s89
    %s90 = sphi 0, %s87
    %s91 = sphi 0, %s90
    %s107 = sphi 0, %s91
  $region4: #{double_conv.5} parent=0 // loop_header_branch
    %12 = sbr.rel (%p10) target = $region8
  $region5: #{double_conv.5} parent=0 // loop_body
    %s14 = ssub.s32 %s9, 1
    %s15 = ssub.s32 %s9, 2
    %s16 = sadd.s32 %s9, 1
    %s17 = ssub.s32 %s9, %s16
    %p18 = scmp.eq.s32.totalorder %s17, 0
    %s20 = sadd.s32 %s19, 1
    %s21 = scalar_select %p18, %s19, %s20
    %p24 = pneg %p18
    %p25 = scmp.eq.s32.totalorder %s9, 1
    %p26 = por %p24, %p25
    %p27 = scmp.ne.s32.totalorder %s19, %s22
    %p28 = scmp.eq.s32.totalorder %s9, 0
    %p29 = por %p27, %p28
    %p30 = scmp.ne.s32.totalorder %s19, %s22
    %p31 = scmp.eq.s32.totalorder %s14, 1
    %p32 = por %p30, %p31
    %p33 = scmp.ne.s32.totalorder %s22, %s23
    %p34 = scmp.eq.s32.totalorder %s14, 0
    %p35 = por %p33, %p34
    %p36 = scmp.ne.s32.totalorder %s22, %s23
    %p37 = scmp.eq.s32.totalorder %s15, 1
    %p38 = por %p36, %p37
    %p40 = scmp.ne.s32.totalorder %s23, %s39
    %p41 = scmp.eq.s32.totalorder %s15, 0
    %p42 = por %p40, %p41
    %s44 = sadd.s32 %s43, 1
    %p47 = scmp.eq.s32.totalorder %s9, 1
    %p48 = scmp.ne.s32.totalorder %s43, %s45
    %p49 = scmp.eq.s32.totalorder %s9, 0
    %p50 = por %p48, %p49
    %p51 = scmp.ne.s32.totalorder %s43, %s45
    %p52 = scmp.eq.s32.totalorder %s14, 1
    %p53 = por %p51, %p52
    %p54 = scmp.ne.s32.totalorder %s45, %s46
    %p55 = scmp.eq.s32.totalorder %s14, 0
    %p56 = por %p54, %p55
    %p57 = scmp.ne.s32.totalorder %s45, %s46
    %p58 = scmp.eq.s32.totalorder %s15, 1
    %p59 = por %p57, %p58
    %p61 = scmp.ne.s32.totalorder %s46, %s60
    %p62 = scmp.eq.s32.totalorder %s15, 0
    %p63 = por %p61, %p62
    %s65 = sadd.s32 %s64, 1
    %p68 = scmp.eq.s32.totalorder %s9, 1
    %p69 = scmp.ne.s32.totalorder %s64, %s66
    %p70 = scmp.eq.s32.totalorder %s9, 0
    %p71 = por %p69, %p70
    %p72 = scmp.ne.s32.totalorder %s64, %s66
    %p73 = scmp.eq.s32.totalorder %s14, 1
    %p74 = por %p72, %p73
    %p75 = scmp.ne.s32.totalorder %s66, %s67
    %p76 = scmp.eq.s32.totalorder %s14, 0
    %p77 = por %p75, %p76
    %p78 = scmp.ne.s32.totalorder %s66, %s67
    %p79 = scmp.eq.s32.totalorder %s15, 1
    %p80 = por %p78, %p79
    %p82 = scmp.ne.s32.totalorder %s67, %s81
    %p83 = scmp.eq.s32.totalorder %s15, 0
    %p84 = por %p82, %p83
    %s85 = ssub.s32 %s9, %s16
    %p86 = scmp.eq.s32.totalorder %s85, 0
    %s88 = sadd.s32 %s87, 1
    %s89 = scalar_select %p86, %s87, %s88
    %p92 = pneg %p86
    %p93 = scmp.eq.s32.totalorder %s9, 1
    %p94 = por %p92, %p93
    %p95 = scmp.ne.s32.totalorder %s87, %s90
    %p96 = scmp.eq.s32.totalorder %s9, 0
    %p97 = por %p95, %p96
    %p98 = scmp.ne.s32.totalorder %s87, %s90
    %p99 = scmp.eq.s32.totalorder %s14, 1
    %p100 = por %p98, %p99
    %p101 = scmp.ne.s32.totalorder %s90, %s91
    %p102 = scmp.eq.s32.totalorder %s14, 0
    %p103 = por %p101, %p102
    %p104 = scmp.ne.s32.totalorder %s90, %s91
    %p105 = scmp.eq.s32.totalorder %s15, 1
    %p106 = por %p104, %p105
    %p108 = scmp.ne.s32.totalorder %s91, %s107
    %p109 = scmp.eq.s32.totalorder %s15, 0
    %p110 = por %p108, %p109
    %p111 = scmp.le.s32.totalorder 1, %s9
    %p112 = scmp.lt.s32.totalorder %s9, 3
    %p113 = pnand %p111, %p112
    %p114 = pneg %p113
    // Predicated region
    $region9: #{double_conv.5} parent=5 // pred_check
      _
    $region10: #{double_conv.5} parent=5 // pred_check_branch
      %116 = sbr.rel (%p113) target = $region12
    $region11: #{double_conv.5} parent=5 // pred_region
      %s117 = ssub.s32 %s9, 1
      // Predicated region
      $region13: #{double_conv.5} parent=11 // pred_check
        %p118 = pneg %p56
      $region14: #{double_conv.5} parent=11 // pred_check_branch
        %120 = sbr.rel (%p118) target = $region16
      $region15: #{double_conv.5} parent=11 // pred_region
        _
      $region16: #{double_conv.5} parent=11 // pred_fallthru
        _
      // Predicated region
      $region17: #{double_conv.5} parent=11 // pred_check
        %p121 = pneg %p77
      $region18: #{double_conv.5} parent=11 // pred_check_branch
        %123 = sbr.rel (%p121) target = $region20
      $region19: #{double_conv.5} parent=11 // pred_region
        _
      $region20: #{double_conv.5} parent=11 // pred_fallthru
        _
    $region12: #{double_conv.5} parent=5 // pred_fallthru
      _
    %p124 = scmp.lt.s32.totalorder %s9, 2
    // Predicated region
    $region21: #{double_conv.5} parent=5 // pred_check
      %p125 = pneg %p124
    $region22: #{double_conv.5} parent=5 // pred_check_branch
      %127 = sbr.rel (%p125) target = $region24
    $region23: #{double_conv.5} parent=5 // pred_region
      // Predicated region
      $region25: #{double_conv.5} parent=23 // pred_check
        %p128 = pneg %p29
      $region26: #{double_conv.5} parent=23 // pred_check_branch
        %130 = sbr.rel (%p128) target = $region28
      $region27: #{double_conv.5} parent=23 // pred_region
        %s131 = smul.u32 32, %s9
        %p132 = scmp.lt.s32.totalorder %s131, 63
        %s133 = scalar_select %p132, %s131, 63
        %s134 = smul.addr %s133, 4
        %s135 = scalar_lea.vmem %s0, %s134
        %s136 = smul.u32 32, %s9
      $region28: #{double_conv.5} parent=23 // pred_fallthru
        _
    $region24: #{double_conv.5} parent=5 // pred_fallthru
      _
    %p137 = scmp.le.s32.totalorder 1, %s9
    %p138 = scmp.lt.s32.totalorder %s9, 3
    %p139 = pnand %p137, %p138
    %p140 = pneg %p139
    // Predicated region
    $region29: #{double_conv.5} parent=5 // pred_check
      _
    $region30: #{double_conv.5} parent=5 // pred_check_branch
      %142 = sbr.rel (%p139) target = $region32
    $region31: #{double_conv.5} parent=5 // pred_region
      %s143 = ssub.s32 %s9, 1
      %s144 = smul.u32 32, %s14
      %p145 = scmp.lt.s32.totalorder %s144, 63
      %s146 = scalar_select %p145, %s144, 63
      %s147 = smul.addr %s146, 4
      %s148 = scalar_lea.vmem %s0, %s147
      %p149 = pneg %p35
      %p150 = pneg %p32
      %p151 = pneg %p56
      %p152 = pneg %p53
      %p153 = pneg %p77
      %p154 = pneg %p74
      %p155 = pneg %p103
      %p156 = pneg %p100
      %s157 = smul.u32 32, %s14
      %p158 = scmp.lt.s32.totalorder %s157, 63
      %s159 = scalar_select %p158, %s157, 63
      %s160 = smul.addr %s159, 4
      %s161 = scalar_lea.vmem %s3, %s160
      %s162 = smul.u32 32, %s14
      %p163 = scmp.lt.s32.totalorder %s162, 63
      %s164 = scalar_select %p163, %s162, 63
      %s165 = smul.addr %s164, 4
      %s166 = scalar_lea.vmem %s0, %s165
      %s167 = smul.u32 32, %s14
      %s168 = smul.u32 32, %s14
      %p169 = scmp.lt.s32.totalorder %s168, 63
      %s170 = scalar_select %p169, %s168, 63
      %s171 = smul.addr %s170, 4
      %s172 = scalar_lea.vmem %s3, %s171
      %s173 = smul.u32 32, %s14
      %v174 = vld [vmem:[%s166] sm:$0xf]
      %v175 = vld [vmem:[%s166 + $0x4] sm:$0xf]
      %v176 = vld [vmem:[%s166 + $0x8] sm:$0xf]
      %v177 = vld [vmem:[%s166 + $0xc] sm:$0xf]
      %v178 = vld [vmem:[%s166 + $0x10] sm:$0xf]
      %v179 = vld [vmem:[%s166 + $0x14] sm:$0xf]
      %v180 = vld [vmem:[%s166 + $0x18] sm:$0xf]
      %v181 = vld [vmem:[%s166 + $0x1c] sm:$0xf]
      %v182 = vld [vmem:[%s166 + $0x20] sm:$0xf]
      %v183 = vld [vmem:[%s166 + $0x24] sm:$0xf]
      %v184 = vld [vmem:[%s166 + $0x28] sm:$0xf]
      %v185 = vld [vmem:[%s166 + $0x2c] sm:$0xf]
      %v186 = vld [vmem:[%s166 + $0x30] sm:$0xf]
      %v187 = vld [vmem:[%s166 + $0x34] sm:$0xf]
      %v188 = vld [vmem:[%s166 + $0x38] sm:$0xf]
      %v189 = vld [vmem:[%s166 + $0x3c] sm:$0xf]
      %v190 = vld [vmem:[%s166 + $0x40] sm:$0xf]
      %v191 = vld [vmem:[%s166 + $0x44] sm:$0xf]
      %v192 = vld [vmem:[%s166 + $0x48] sm:$0xf]
      %v193 = vld [vmem:[%s166 + $0x4c] sm:$0xf]
      %v194 = vld [vmem:[%s166 + $0x50] sm:$0xf]
      %v195 = vld [vmem:[%s166 + $0x54] sm:$0xf]
      %v196 = vld [vmem:[%s166 + $0x58] sm:$0xf]
      %v197 = vld [vmem:[%s166 + $0x5c] sm:$0xf]
      %v198 = vld [vmem:[%s166 + $0x60] sm:$0xf]
      %v199 = vld [vmem:[%s166 + $0x64] sm:$0xf]
      %v200 = vld [vmem:[%s166 + $0x68] sm:$0xf]
      %v201 = vld [vmem:[%s166 + $0x6c] sm:$0xf]
      %v202 = vld [vmem:[%s166 + $0x70] sm:$0xf]
      %v203 = vld [vmem:[%s166 + $0x74] sm:$0xf]
      %v204 = vld [vmem:[%s166 + $0x78] sm:$0xf]
      %v205 = vld [vmem:[%s166 + $0x7c] sm:$0xf]
      %v206 = vunpack.c.l.bf16 %v174
      %v207 = vunpack.c.l.bf16 %v175
      %v208 = vunpack.c.l.bf16 %v176
      %v209 = vunpack.c.l.bf16 %v177
      %v210 = vunpack.c.l.bf16 %v178
      %v211 = vunpack.c.l.bf16 %v179
      %v212 = vunpack.c.l.bf16 %v180
      %v213 = vunpack.c.l.bf16 %v181
      %v214 = vunpack.c.l.bf16 %v182
      %v215 = vunpack.c.l.bf16 %v183
      %v216 = vunpack.c.l.bf16 %v184
      %v217 = vunpack.c.l.bf16 %v185
      %v218 = vunpack.c.l.bf16 %v186
      %v219 = vunpack.c.l.bf16 %v187
      %v220 = vunpack.c.l.bf16 %v188
      %v221 = vunpack.c.l.bf16 %v189
      %v222 = vunpack.c.l.bf16 %v190
      %v223 = vunpack.c.l.bf16 %v191
      %v224 = vunpack.c.l.bf16 %v192
      %v225 = vunpack.c.l.bf16 %v193
      %v226 = vunpack.c.l.bf16 %v194
      %v227 = vunpack.c.l.bf16 %v195
      %v228 = vunpack.c.l.bf16 %v196
      %v229 = vunpack.c.l.bf16 %v197
      %v230 = vunpack.c.l.bf16 %v198
      %v231 = vunpack.c.l.bf16 %v199
      %v232 = vunpack.c.l.bf16 %v200
      %v233 = vunpack.c.l.bf16 %v201
      %v234 = vunpack.c.l.bf16 %v202
      %v235 = vunpack.c.l.bf16 %v203
      %v236 = vunpack.c.l.bf16 %v204
      %v237 = vunpack.c.l.bf16 %v205
      %v238 = vld [vmem:[%s1] sm:$0x1]
      %v240 = vlaneseq
      %v241 = vshrl.u32 %v240, 7
      %v242 = vsub.s32 0, %v241
      %v243 = vrot.slane %v238, %v242
      %v245 = vmul.f32 %v206, %v243
      %v246 = vmul.f32 %v207, %v243
      %v247 = vmul.f32 %v208, %v243
      %v248 = vmul.f32 %v209, %v243
      %v249 = vmul.f32 %v210, %v243
      %v250 = vmul.f32 %v211, %v243
      %v251 = vmul.f32 %v212, %v243
      %v252 = vmul.f32 %v213, %v243
      %v253 = vmul.f32 %v214, %v243
      %v254 = vmul.f32 %v215, %v243
      %v255 = vmul.f32 %v216, %v243
      %v256 = vmul.f32 %v217, %v243
      %v257 = vmul.f32 %v218, %v243
      %v258 = vmul.f32 %v219, %v243
      %v259 = vmul.f32 %v220, %v243
      %v260 = vmul.f32 %v221, %v243
      %v261 = vmul.f32 %v222, %v243
      %v262 = vmul.f32 %v223, %v243
      %v263 = vmul.f32 %v224, %v243
      %v264 = vmul.f32 %v225, %v243
      %v265 = vmul.f32 %v226, %v243
      %v266 = vmul.f32 %v227, %v243
      %v267 = vmul.f32 %v228, %v243
      %v268 = vmul.f32 %v229, %v243
      %v269 = vmul.f32 %v230, %v243
      %v270 = vmul.f32 %v231, %v243
      %v271 = vmul.f32 %v232, %v243
      %v272 = vmul.f32 %v233, %v243
      %v273 = vmul.f32 %v234, %v243
      %v274 = vmul.f32 %v235, %v243
      %v275 = vmul.f32 %v236, %v243
      %v276 = vmul.f32 %v237, %v243
      %v277 = vld [vmem:[%s2] sm:$0x1]
      %v279 = vlaneseq
      %v280 = vshrl.u32 %v279, 7
      %v281 = vsub.s32 0, %v280
      %v282 = vrot.slane %v277, %v281
      %v284 = vadd.f32 %v245, %v282
      %v285 = vadd.f32 %v246, %v282
      %v286 = vadd.f32 %v247, %v282
      %v287 = vadd.f32 %v248, %v282
      %v288 = vadd.f32 %v249, %v282
      %v289 = vadd.f32 %v250, %v282
      %v290 = vadd.f32 %v251, %v282
      %v291 = vadd.f32 %v252, %v282
      %v292 = vadd.f32 %v253, %v282
      %v293 = vadd.f32 %v254, %v282
      %v294 = vadd.f32 %v255, %v282
      %v295 = vadd.f32 %v256, %v282
      %v296 = vadd.f32 %v257, %v282
      %v297 = vadd.f32 %v258, %v282
      %v298 = vadd.f32 %v259, %v282
      %v299 = vadd.f32 %v260, %v282
      %v300 = vadd.f32 %v261, %v282
      %v301 = vadd.f32 %v262, %v282
      %v302 = vadd.f32 %v263, %v282
      %v303 = vadd.f32 %v264, %v282
      %v304 = vadd.f32 %v265, %v282
      %v305 = vadd.f32 %v266, %v282
      %v306 = vadd.f32 %v267, %v282
      %v307 = vadd.f32 %v268, %v282
      %v308 = vadd.f32 %v269, %v282
      %v309 = vadd.f32 %v270, %v282
      %v310 = vadd.f32 %v271, %v282
      %v311 = vadd.f32 %v272, %v282
      %v312 = vadd.f32 %v273, %v282
      %v313 = vadd.f32 %v274, %v282
      %v314 = vadd.f32 %v275, %v282
      %v315 = vadd.f32 %v276, %v282
      %v316 = vmax.f32 %v284, 0.0
      %v317 = vmax.f32 %v285, 0.0
      %v318 = vmax.f32 %v286, 0.0
      %v319 = vmax.f32 %v287, 0.0
      %v320 = vmax.f32 %v288, 0.0
      %v321 = vmax.f32 %v289, 0.0
      %v322 = vmax.f32 %v290, 0.0
      %v323 = vmax.f32 %v291, 0.0
      %v324 = vmax.f32 %v292, 0.0
      %v325 = vmax.f32 %v293, 0.0
      %v326 = vmax.f32 %v294, 0.0
      %v327 = vmax.f32 %v295, 0.0
      %v328 = vmax.f32 %v296, 0.0
      %v329 = vmax.f32 %v297, 0.0
      %v330 = vmax.f32 %v298, 0.0
      %v331 = vmax.f32 %v299, 0.0
      %v332 = vmax.f32 %v300, 0.0
      %v333 = vmax.f32 %v301, 0.0
      %v334 = vmax.f32 %v302, 0.0
      %v335 = vmax.f32 %v303, 0.0
      %v336 = vmax.f32 %v304, 0.0
      %v337 = vmax.f32 %v305, 0.0
      %v338 = vmax.f32 %v306, 0.0
      %v339 = vmax.f32 %v307, 0.0
      %v340 = vmax.f32 %v308, 0.0
      %v341 = vmax.f32 %v309, 0.0
      %v342 = vmax.f32 %v310, 0.0
      %v343 = vmax.f32 %v311, 0.0
      %v344 = vmax.f32 %v312, 0.0
      %v345 = vmax.f32 %v313, 0.0
      %v346 = vmax.f32 %v314, 0.0
      %v347 = vmax.f32 %v315, 0.0
      %v348 = vpack.c.bf16 %v317, %v316
      %v349 = vpack.c.bf16 %v319, %v318
      %v350 = vpack.c.bf16 %v321, %v320
      %v351 = vpack.c.bf16 %v323, %v322
      %v352 = vpack.c.bf16 %v325, %v324
      %v353 = vpack.c.bf16 %v327, %v326
      %v354 = vpack.c.bf16 %v329, %v328
      %v355 = vpack.c.bf16 %v331, %v330
      %v356 = vpack.c.bf16 %v333, %v332
      %v357 = vpack.c.bf16 %v335, %v334
      %v358 = vpack.c.bf16 %v337, %v336
      %v359 = vpack.c.bf16 %v339, %v338
      %v360 = vpack.c.bf16 %v341, %v340
      %v361 = vpack.c.bf16 %v343, %v342
      %v362 = vpack.c.bf16 %v345, %v344
      %v363 = vpack.c.bf16 %v347, %v346
      %v380 = vunpack.c.l.b16 %v348
      %v381 = vunpack.c.h.b16 %v348
      %v382 = vunpack.c.l.b16 %v349
      %v383 = vunpack.c.h.b16 %v349
      %v384 = vunpack.c.l.b16 %v350
      %v385 = vunpack.c.h.b16 %v350
      %v386 = vunpack.c.l.b16 %v351
      %v387 = vunpack.c.h.b16 %v351
      %v388 = vunpack.c.l.b16 %v352
      %v389 = vunpack.c.h.b16 %v352
      %v390 = vunpack.c.l.b16 %v353
      %v391 = vunpack.c.h.b16 %v353
      %v392 = vunpack.c.l.b16 %v354
      %v393 = vunpack.c.h.b16 %v354
      %v394 = vunpack.c.l.b16 %v355
      %v395 = vunpack.c.h.b16 %v355
      %v396 = vunpack.c.l.b16 %v356
      %v397 = vunpack.c.h.b16 %v356
      %v398 = vunpack.c.l.b16 %v357
      %v399 = vunpack.c.h.b16 %v357
      %v400 = vunpack.c.l.b16 %v358
      %v401 = vunpack.c.h.b16 %v358
      %v402 = vunpack.c.l.b16 %v359
      %v403 = vunpack.c.h.b16 %v359
      %v404 = vunpack.c.l.b16 %v360
      %v405 = vunpack.c.h.b16 %v360
      %v406 = vunpack.c.l.b16 %v361
      %v407 = vunpack.c.h.b16 %v361
      %v408 = vunpack.c.l.b16 %v362
      %v409 = vunpack.c.h.b16 %v362
      %v410 = vunpack.c.l.b16 %v363
      %v411 = vunpack.c.h.b16 %v363
      %v412 = vpack.c.b16 %v380, %v380
      %v413 = vpack.c.b16 %v381, %v381
      %v414 = vpack.c.b16 %v382, %v382
      %v415 = vpack.c.b16 %v383, %v383
      %v416 = vpack.c.b16 %v384, %v384
      %v417 = vpack.c.b16 %v385, %v385
      %v418 = vpack.c.b16 %v386, %v386
      %v419 = vpack.c.b16 %v387, %v387
      %v420 = vpack.c.b16 %v388, %v388
      %v421 = vpack.c.b16 %v389, %v389
      %v422 = vpack.c.b16 %v390, %v390
      %v423 = vpack.c.b16 %v391, %v391
      %v424 = vpack.c.b16 %v392, %v392
      %v425 = vpack.c.b16 %v393, %v393
      %v426 = vpack.c.b16 %v394, %v394
      %v427 = vpack.c.b16 %v395, %v395
      %v428 = vpack.c.b16 %v396, %v396
      %v429 = vpack.c.b16 %v397, %v397
      %v430 = vpack.c.b16 %v398, %v398
      %v431 = vpack.c.b16 %v399, %v399
      %v432 = vpack.c.b16 %v400, %v400
      %v433 = vpack.c.b16 %v401, %v401
      %v434 = vpack.c.b16 %v402, %v402
      %v435 = vpack.c.b16 %v403, %v403
      %v436 = vpack.c.b16 %v404, %v404
      %v437 = vpack.c.b16 %v405, %v405
      %v438 = vpack.c.b16 %v406, %v406
      %v439 = vpack.c.b16 %v407, %v407
      %v440 = vpack.c.b16 %v408, %v408
      %v441 = vpack.c.b16 %v409, %v409
      %v442 = vpack.c.b16 %v410, %v410
      %v443 = vpack.c.b16 %v411, %v411
      %476 = vst [vmem:[%s172] sm:$0xf] %v412
      %477 = vst [vmem:[%s172 + $0x4] sm:$0xf] %v413
      %478 = vst [vmem:[%s172 + $0x8] sm:$0xf] %v414
      %479 = vst [vmem:[%s172 + $0xc] sm:$0xf] %v415
      %480 = vst [vmem:[%s172 + $0x10] sm:$0xf] %v416
      %481 = vst [vmem:[%s172 + $0x14] sm:$0xf] %v417
      %482 = vst [vmem:[%s172 + $0x18] sm:$0xf] %v418
      %483 = vst [vmem:[%s172 + $0x1c] sm:$0xf] %v419
      %484 = vst [vmem:[%s172 + $0x20] sm:$0xf] %v420
      %485 = vst [vmem:[%s172 + $0x24] sm:$0xf] %v421
      %486 = vst [vmem:[%s172 + $0x28] sm:$0xf] %v422
      %487 = vst [vmem:[%s172 + $0x2c] sm:$0xf] %v423
      %488 = vst [vmem:[%s172 + $0x30] sm:$0xf] %v424
      %489 = vst [vmem:[%s172 + $0x34] sm:$0xf] %v425
      %490 = vst [vmem:[%s172 + $0x38] sm:$0xf] %v426
      %491 = vst [vmem:[%s172 + $0x3c] sm:$0xf] %v427
      %492 = vst [vmem:[%s172 + $0x40] sm:$0xf] %v428
      %493 = vst [vmem:[%s172 + $0x44] sm:$0xf] %v429
      %494 = vst [vmem:[%s172 + $0x48] sm:$0xf] %v430
      %495 = vst [vmem:[%s172 + $0x4c] sm:$0xf] %v431
      %496 = vst [vmem:[%s172 + $0x50] sm:$0xf] %v432
      %497 = vst [vmem:[%s172 + $0x54] sm:$0xf] %v433
      %498 = vst [vmem:[%s172 + $0x58] sm:$0xf] %v434
      %499 = vst [vmem:[%s172 + $0x5c] sm:$0xf] %v435
      %500 = vst [vmem:[%s172 + $0x60] sm:$0xf] %v436
      %501 = vst [vmem:[%s172 + $0x64] sm:$0xf] %v437
      %502 = vst [vmem:[%s172 + $0x68] sm:$0xf] %v438
      %503 = vst [vmem:[%s172 + $0x6c] sm:$0xf] %v439
      %504 = vst [vmem:[%s172 + $0x70] sm:$0xf] %v440
      %505 = vst [vmem:[%s172 + $0x74] sm:$0xf] %v441
      %506 = vst [vmem:[%s172 + $0x78] sm:$0xf] %v442
      %507 = vst [vmem:[%s172 + $0x7c] sm:$0xf] %v443
      %s508 = smul.u32 32, %s14
      %p509 = scmp.lt.s32.totalorder %s508, 63
      %s510 = scalar_select %p509, %s508, 63
      %s511 = smul.addr %s510, 4
      %s512 = scalar_lea.vmem %s3, %s511
      // Predicated region
      $region33: #{double_conv.5} parent=31 // pred_check
        %p513 = pneg %p100
      $region34: #{double_conv.5} parent=31 // pred_check_branch
        %515 = sbr.rel (%p513) target = $region36
      $region35: #{double_conv.5} parent=31 // pred_region
        %s516 = smul.u32 32, %s14
      $region36: #{double_conv.5} parent=31 // pred_fallthru
        _
    $region32: #{double_conv.5} parent=5 // pred_fallthru
      _
    %p517 = scmp.le.s32.totalorder 2, %s9
    // Predicated region
    $region37: #{double_conv.5} parent=5 // pred_check
      %p518 = pneg %p517
    $region38: #{double_conv.5} parent=5 // pred_check_branch
      %520 = sbr.rel (%p518) target = $region40
    $region39: #{double_conv.5} parent=5 // pred_region
      %s521 = ssub.s32 %s9, 2
      // Predicated region
      $region41: #{double_conv.5} parent=39 // pred_check
        %p522 = pneg %p106
      $region42: #{double_conv.5} parent=39 // pred_check_branch
        %524 = sbr.rel (%p522) target = $region44
      $region43: #{double_conv.5} parent=39 // pred_region
        %s525 = smul.u32 32, %s15
        %p526 = scmp.lt.s32.totalorder %s525, 63
        %s527 = scalar_select %p526, %s525, 63
        %s528 = smul.addr %s527, 4
        %s529 = scalar_lea.vmem %s3, %s528
      $region44: #{double_conv.5} parent=39 // pred_fallthru
        _
    $region40: #{double_conv.5} parent=5 // pred_fallthru
      _
  $region6: #{double_conv.5} parent=0 // loop_footer
    %s13 = sadd.s32 1, %s9
  $region7: #{double_conv.5} parent=0 // loop_footer_branch
    %8 = sbr.rel target = $region3
  $region8: #{double_conv.5} parent=0 // loop_exit
    _

// kernel: double_conv.4
$region0: #{double_conv.4}
  #allocation0 [shape = 'u32[]', space=smem, size = 0x4, offset = 0x4, fixed_abs, tag = 'smem constant byte address 0x4 - core index']
  #allocation1 [shape = 'u32[144,128]{1,0:T(1,128)}', space=vmem, size = 0x12000, scoped, tag = 'internal scratch']
  %s0 = inlined_call_operand.vmem [shape: bf16[2,288,12], index: 0, kind: input, shape index: {}]
  %s1 = inlined_call_operand.vmem [shape: bf16[3,12,128], index: 1, kind: input, shape index: {}]
  %s2 = inlined_call_operand.vmem [shape: f32[1,128], index: 2, kind: input, shape index: {}]
  %s3 = inlined_call_operand.vmem [shape: bf16[512,128], index: 3, kind: output, shape index: {0}]
  %s4 = inlined_call_operand.vmem [shape: f32[2,2,128], index: 4, kind: output, shape index: {1}]
  %5 = xla_tuple %s3, %s4
  %s6 = sld [smem:[#allocation0]]
  $region53: #{double_conv.4} parent=0
    _
  %s8 = ssub.s32 1, %s6
  %s9 = scalar_select 0, %s8, %s6
  loop: start=0, step=1, limit=4
  $region2: #{double_conv.4} parent=0 // loop_pre_header
    _
  $region3: #{double_conv.4} parent=0 // loop_header
    %s11 = sphi 0, %s15
    %p12 = scmp.ge.s32.totalorder %s11, 4
    %s21 = sphi 0, %s23
    %s24 = sphi 0, %s21
    %s25 = sphi 0, %s24
    %s41 = sphi 0, %s25
    %s45 = sphi 0, %s45
    %s47 = sphi 0, %s45
    %s48 = sphi 0, %s47
    %s62 = sphi 0, %s48
    %s66 = sphi 0, %s66
    %s68 = sphi 0, %s66
    %s69 = sphi 0, %s68
    %s83 = sphi 0, %s69
    %s89 = sphi 0, %s91
    %s92 = sphi 0, %s89
    %s93 = sphi 0, %s92
    %s109 = sphi 0, %s93
    %s115 = sphi 0, %s117
    %s118 = sphi 0, %s115
    %s119 = sphi 0, %s118
    %s135 = sphi 0, %s119
  $region4: #{double_conv.4} parent=0 // loop_header_branch
    %14 = sbr.rel (%p12) target = $region8
  $region5: #{double_conv.4} parent=0 // loop_body
    %s16 = ssub.s32 %s11, 1
    %s17 = ssub.s32 %s11, 2
    %s18 = sadd.s32 %s11, 1
    %s19 = ssub.s32 %s11, %s18
    %p20 = scmp.eq.s32.totalorder %s19, 0
    %s22 = sadd.s32 %s21, 1
    %s23 = scalar_select %p20, %s21, %s22
    %p26 = pneg %p20
    %p27 = scmp.eq.s32.totalorder %s11, 1
    %p28 = por %p26, %p27
    %p29 = scmp.ne.s32.totalorder %s21, %s24
    %p30 = scmp.eq.s32.totalorder %s11, 0
    %p31 = por %p29, %p30
    %p32 = scmp.ne.s32.totalorder %s21, %s24
    %p33 = scmp.eq.s32.totalorder %s16, 1
    %p34 = por %p32, %p33
    %p35 = scmp.ne.s32.totalorder %s24, %s25
    %p36 = scmp.eq.s32.totalorder %s16, 0
    %p37 = por %p35, %p36
    %p38 = scmp.ne.s32.totalorder %s24, %s25
    %p39 = scmp.eq.s32.totalorder %s17, 1
    %p40 = por %p38, %p39
    %p42 = scmp.ne.s32.totalorder %s25, %s41
    %p43 = scmp.eq.s32.totalorder %s17, 0
    %p44 = por %p42, %p43
    %s46 = sadd.s32 %s45, 1
    %p49 = scmp.eq.s32.totalorder %s11, 1
    %p50 = scmp.ne.s32.totalorder %s45, %s47
    %p51 = scmp.eq.s32.totalorder %s11, 0
    %p52 = por %p50, %p51
    %p53 = scmp.ne.s32.totalorder %s45, %s47
    %p54 = scmp.eq.s32.totalorder %s16, 1
    %p55 = por %p53, %p54
    %p56 = scmp.ne.s32.totalorder %s47, %s48
    %p57 = scmp.eq.s32.totalorder %s16, 0
    %p58 = por %p56, %p57
    %p59 = scmp.ne.s32.totalorder %s47, %s48
    %p60 = scmp.eq.s32.totalorder %s17, 1
    %p61 = por %p59, %p60
    %p63 = scmp.ne.s32.totalorder %s48, %s62
    %p64 = scmp.eq.s32.totalorder %s17, 0
    %p65 = por %p63, %p64
    %s67 = sadd.s32 %s66, 1
    %p70 = scmp.eq.s32.totalorder %s11, 1
    %p71 = scmp.ne.s32.totalorder %s66, %s68
    %p72 = scmp.eq.s32.totalorder %s11, 0
    %p73 = por %p71, %p72
    %p74 = scmp.ne.s32.totalorder %s66, %s68
    %p75 = scmp.eq.s32.totalorder %s16, 1
    %p76 = por %p74, %p75
    %p77 = scmp.ne.s32.totalorder %s68, %s69
    %p78 = scmp.eq.s32.totalorder %s16, 0
    %p79 = por %p77, %p78
    %p80 = scmp.ne.s32.totalorder %s68, %s69
    %p81 = scmp.eq.s32.totalorder %s17, 1
    %p82 = por %p80, %p81
    %p84 = scmp.ne.s32.totalorder %s69, %s83
    %p85 = scmp.eq.s32.totalorder %s17, 0
    %p86 = por %p84, %p85
    %s87 = ssub.s32 %s11, %s18
    %p88 = scmp.eq.s32.totalorder %s87, 0
    %s90 = sadd.s32 %s89, 1
    %s91 = scalar_select %p88, %s89, %s90
    %p94 = pneg %p88
    %p95 = scmp.eq.s32.totalorder %s11, 1
    %p96 = por %p94, %p95
    %p97 = scmp.ne.s32.totalorder %s89, %s92
    %p98 = scmp.eq.s32.totalorder %s11, 0
    %p99 = por %p97, %p98
    %p100 = scmp.ne.s32.totalorder %s89, %s92
    %p101 = scmp.eq.s32.totalorder %s16, 1
    %p102 = por %p100, %p101
    %p103 = scmp.ne.s32.totalorder %s92, %s93
    %p104 = scmp.eq.s32.totalorder %s16, 0
    %p105 = por %p103, %p104
    %p106 = scmp.ne.s32.totalorder %s92, %s93
    %p107 = scmp.eq.s32.totalorder %s17, 1
    %p108 = por %p106, %p107
    %p110 = scmp.ne.s32.totalorder %s93, %s109
    %p111 = scmp.eq.s32.totalorder %s17, 0
    %p112 = por %p110, %p111
    %s113 = ssub.s32 %s11, %s18
    %p114 = scmp.eq.s32.totalorder %s113, 0
    %s116 = sadd.s32 %s115, 1
    %s117 = scalar_select %p114, %s115, %s116
    %p120 = pneg %p114
    %p121 = scmp.eq.s32.totalorder %s11, 1
    %p122 = por %p120, %p121
    %p123 = scmp.ne.s32.totalorder %s115, %s118
    %p124 = scmp.eq.s32.totalorder %s11, 0
    %p125 = por %p123, %p124
    %p126 = scmp.ne.s32.totalorder %s115, %s118
    %p127 = scmp.eq.s32.totalorder %s16, 1
    %p128 = por %p126, %p127
    %p129 = scmp.ne.s32.totalorder %s118, %s119
    %p130 = scmp.eq.s32.totalorder %s16, 0
    %p131 = por %p129, %p130
    %p132 = scmp.ne.s32.totalorder %s118, %s119
    %p133 = scmp.eq.s32.totalorder %s17, 1
    %p134 = por %p132, %p133
    %p136 = scmp.ne.s32.totalorder %s119, %s135
    %p137 = scmp.eq.s32.totalorder %s17, 0
    %p138 = por %p136, %p137
    %p139 = scmp.le.s32.totalorder 1, %s11
    %p140 = scmp.lt.s32.totalorder %s11, 3
    %p141 = pnand %p139, %p140
    %p142 = pneg %p141
    // Predicated region
    $region9: #{double_conv.4} parent=5 // pred_check
      _
    $region10: #{double_conv.4} parent=5 // pred_check_branch
      %144 = sbr.rel (%p141) target = $region12
    $region11: #{double_conv.4} parent=5 // pred_region
      %s145 = ssub.s32 %s11, 1
      // Predicated region
      $region13: #{double_conv.4} parent=11 // pred_check
        %p146 = pneg %p58
      $region14: #{double_conv.4} parent=11 // pred_check_branch
        %148 = sbr.rel (%p146) target = $region16
      $region15: #{double_conv.4} parent=11 // pred_region
        _
      $region16: #{double_conv.4} parent=11 // pred_fallthru
        _
      // Predicated region
      $region17: #{double_conv.4} parent=11 // pred_check
        %p149 = pneg %p79
      $region18: #{double_conv.4} parent=11 // pred_check_branch
        %151 = sbr.rel (%p149) target = $region20
      $region19: #{double_conv.4} parent=11 // pred_region
        _
      $region20: #{double_conv.4} parent=11 // pred_fallthru
        _
    $region12: #{double_conv.4} parent=5 // pred_fallthru
      _
    %p152 = scmp.lt.s32.totalorder %s11, 2
    // Predicated region
    $region21: #{double_conv.4} parent=5 // pred_check
      %p153 = pneg %p152
    $region22: #{double_conv.4} parent=5 // pred_check_branch
      %155 = sbr.rel (%p153) target = $region24
    $region23: #{double_conv.4} parent=5 // pred_region
      // Predicated region
      $region25: #{double_conv.4} parent=23 // pred_check
        %p156 = pneg %p31
      $region26: #{double_conv.4} parent=23 // pred_check_branch
        %158 = sbr.rel (%p156) target = $region28
      $region27: #{double_conv.4} parent=23 // pred_region
        %p159 = scmp.lt.s32.totalorder %s11, 1
        %s160 = scalar_select %p159, %s11, 1
        %s161 = smul.addr %s160, 36
        %s162 = smul.addr %s161, 4
        %s163 = scalar_lea.vmem %s0, %s162
      $region28: #{double_conv.4} parent=23 // pred_fallthru
        _
    $region24: #{double_conv.4} parent=5 // pred_fallthru
      _
    %p164 = scmp.le.s32.totalorder 1, %s11
    %p165 = scmp.lt.s32.totalorder %s11, 3
    %p166 = pnand %p164, %p165
    %p167 = pneg %p166
    // Predicated region
    $region29: #{double_conv.4} parent=5 // pred_check
      _
    $region30: #{double_conv.4} parent=5 // pred_check_branch
      %169 = sbr.rel (%p166) target = $region32
    $region31: #{double_conv.4} parent=5 // pred_region
      %s170 = ssub.s32 %s11, 1
      %p171 = scmp.lt.s32.totalorder %s16, 1
      %s172 = scalar_select %p171, %s16, 1
      %s173 = smul.addr %s172, 36
      %s174 = smul.addr %s173, 4
      %s175 = scalar_lea.vmem %s0, %s174
      %p176 = pneg %p37
      %p177 = pneg %p34
      %p178 = pneg %p58
      %p179 = pneg %p55
      %p180 = pneg %p79
      %p181 = pneg %p76
      %p182 = pneg %p105
      %p183 = pneg %p102
      %s184 = smul.u32 32, %s16
      %p185 = scmp.lt.s32.totalorder %s184, 63
      %s186 = scalar_select %p185, %s184, 63
      %s187 = smul.addr %s186, 4
      %s188 = scalar_lea.vmem %s3, %s187
      %p189 = pneg %p131
      %p190 = pneg %p128
      %p191 = scmp.lt.s32.totalorder %s16, 1
      %s192 = scalar_select %p191, %s16, 1
      %s193 = smul.addr %s192, 2
      %s194 = scalar_lea.vmem %s4, %s193
      %p195 = scmp.lt.s32.totalorder %s16, 1
      %s196 = scalar_select %p195, %s16, 1
      %s197 = smul.addr %s196, 36
      %s198 = smul.addr %s197, 4
      %s199 = scalar_lea.vmem %s0, %s198
      %s200 = smul.u32 32, %s16
      %p201 = scmp.lt.s32.totalorder %s200, 63
      %s202 = scalar_select %p201, %s200, 63
      %s203 = smul.addr %s202, 4
      %s204 = scalar_lea.vmem %s3, %s203
      %s205 = smul.u32 32, %s16
      %p206 = scmp.lt.s32.totalorder %s16, 1
      %s207 = scalar_select %p206, %s16, 1
      %s208 = smul.addr %s207, 2
      %s209 = scalar_lea.vmem %s4, %s208
      %v211 = vld [vmem:[%s199] sm:$0xf]
      %v212 = vld [vmem:[%s199 + $0x4] sm:$0xf]
      %v213 = vld [vmem:[%s199 + $0x8] sm:$0xf]
      %v214 = vld [vmem:[%s199 + $0xc] sm:$0xf]
      %v215 = vld [vmem:[%s199 + $0x10] sm:$0xf]
      %v216 = vld [vmem:[%s199 + $0x14] sm:$0xf]
      %v217 = vld [vmem:[%s199 + $0x18] sm:$0xf]
      %v218 = vld [vmem:[%s199 + $0x1c] sm:$0xf]
      %v219 = vld [vmem:[%s199 + $0x20] sm:$0xf]
      %v220 = vld [vmem:[%s199 + $0x24] sm:$0xf]
      %v221 = vld [vmem:[%s199 + $0x28] sm:$0xf]
      %v222 = vld [vmem:[%s199 + $0x2c] sm:$0xf]
      %v223 = vld [vmem:[%s199 + $0x30] sm:$0xf]
      %v224 = vld [vmem:[%s199 + $0x34] sm:$0xf]
      %v225 = vld [vmem:[%s199 + $0x38] sm:$0xf]
      %v226 = vld [vmem:[%s199 + $0x3c] sm:$0xf]
      %v227 = vld [vmem:[%s199 + $0x40] sm:$0xf]
      %v228 = vld [vmem:[%s199 + $0x44] sm:$0xf]
      %v229 = vld [vmem:[%s199 + $0x48] sm:$0xf]
      %v230 = vld [vmem:[%s199 + $0x4c] sm:$0xf]
      %v231 = vld [vmem:[%s199 + $0x50] sm:$0xf]
      %v232 = vld [vmem:[%s199 + $0x54] sm:$0xf]
      %v233 = vld [vmem:[%s199 + $0x58] sm:$0xf]
      %v234 = vld [vmem:[%s199 + $0x5c] sm:$0xf]
      %v235 = vld [vmem:[%s199 + $0x60] sm:$0xf]
      %v236 = vld [vmem:[%s199 + $0x64] sm:$0xf]
      %v237 = vld [vmem:[%s199 + $0x68] sm:$0xf]
      %v238 = vld [vmem:[%s199 + $0x6c] sm:$0xf]
      %v239 = vld [vmem:[%s199 + $0x70] sm:$0xf]
      %v240 = vld [vmem:[%s199 + $0x74] sm:$0xf]
      %v241 = vld [vmem:[%s199 + $0x78] sm:$0xf]
      %v242 = vld [vmem:[%s199 + $0x7c] sm:$0xf]
      %v243 = vld [vmem:[%s1] sm:$0xf]
      %v244 = vld [vmem:[%s1 + $0x4] sm:$0x3]
      %v245 = vld [vmem:[%s199 + $0x80] sm:$0xf]
      %v246 = vld [vmem:[%s199 + $0x84] sm:$0xf]
      %s247 = scalar_lea.vmem %s1, 8
      %v248 = vld [vmem:[%s247] sm:$0xf]
      %v249 = vld [vmem:[%s247 + $0x4] sm:$0x3]
      %v282 = vunpack.c.l.b16 %v213
      %v283 = vunpack.c.l.b16 %v214
      %v284 = vunpack.c.l.b16 %v215
      %v285 = vunpack.c.l.b16 %v216
      %v286 = vunpack.c.l.b16 %v217
      %v287 = vunpack.c.l.b16 %v218
      %v288 = vunpack.c.l.b16 %v219
      %v289 = vunpack.c.l.b16 %v220
      %v290 = vunpack.c.l.b16 %v221
      %v291 = vunpack.c.l.b16 %v222
      %v292 = vunpack.c.l.b16 %v223
      %v293 = vunpack.c.l.b16 %v224
      %v294 = vunpack.c.l.b16 %v225
      %v295 = vunpack.c.l.b16 %v226
      %v296 = vunpack.c.l.b16 %v227
      %v297 = vunpack.c.l.b16 %v228
      %v298 = vunpack.c.l.b16 %v229
      %v299 = vunpack.c.l.b16 %v230
      %v300 = vunpack.c.l.b16 %v231
      %v301 = vunpack.c.l.b16 %v232
      %v302 = vunpack.c.l.b16 %v233
      %v303 = vunpack.c.l.b16 %v234
      %v304 = vunpack.c.l.b16 %v235
      %v305 = vunpack.c.l.b16 %v236
      %v306 = vunpack.c.l.b16 %v237
      %v307 = vunpack.c.l.b16 %v238
      %v308 = vunpack.c.l.b16 %v239
      %v309 = vunpack.c.l.b16 %v240
      %v310 = vunpack.c.l.b16 %v241
      %v311 = vunpack.c.l.b16 %v242
      %v312 = vunpack.c.l.b16 %v245
      %v313 = vunpack.c.l.b16 %v246
      %v314 = vpack.c.b16 %v283, %v282
      %v315 = vpack.c.b16 %v285, %v284
      %v316 = vpack.c.b16 %v287, %v286
      %v317 = vpack.c.b16 %v289, %v288
      %v318 = vpack.c.b16 %v291, %v290
      %v319 = vpack.c.b16 %v293, %v292
      %v320 = vpack.c.b16 %v295, %v294
      %v321 = vpack.c.b16 %v297, %v296
      %v322 = vpack.c.b16 %v299, %v298
      %v323 = vpack.c.b16 %v301, %v300
      %v324 = vpack.c.b16 %v303, %v302
      %v325 = vpack.c.b16 %v305, %v304
      %v326 = vpack.c.b16 %v307, %v306
      %v327 = vpack.c.b16 %v309, %v308
      %v328 = vpack.c.b16 %v311, %v310
      %v329 = vpack.c.b16 %v313, %v312
      %v332 = vunpack.c.l.b16 %v248
      %v333 = vunpack.c.l.b16 %v249
      %v334 = vpack.c.b16 %v333, %v332
      %vm335 = vcmask 97280
      %v337 = vsel %vm335, %v314, 0
      %v340 = vsel %vm335, %v315, 0
      %v343 = vsel %vm335, %v316, 0
      %v346 = vsel %vm335, %v317, 0
      %v349 = vsel %vm335, %v318, 0
      %v352 = vsel %vm335, %v319, 0
      %v355 = vsel %vm335, %v320, 0
      %v358 = vsel %vm335, %v321, 0
      %v361 = vsel %vm335, %v322, 0
      %v364 = vsel %vm335, %v323, 0
      %v367 = vsel %vm335, %v324, 0
      %v370 = vsel %vm335, %v325, 0
      %v373 = vsel %vm335, %v326, 0
      %v376 = vsel %vm335, %v327, 0
      %v379 = vsel %vm335, %v328, 0
      %v382 = vsel %vm335, %v329, 0
      %vm384 = vcmask 1045504
      %v386 = vsel %vm384, %v334, 0
      %388 = vmatprep.subr.bf16.mxu0 0
      %389 = vmatpush1.bf16.msra.mxu0 %v386
      %390 = vmatprep.subr.bf16.mxu0 0
      %391 = vmatpush1.bf16.msra.mxu0 0
      %392 = vmatprep.subr.bf16.mxu0 0
      %393 = vmatpush1.bf16.msra.mxu0 0
      %394 = vmatprep.subr.bf16.mxu0 0
      %395 = vmatpush1.bf16.msra.mxu0 0
      %396 = vmatprep.subr.bf16.mxu0 0
      %397 = vmatpush1.bf16.msra.mxu0 0
      %398 = vmatprep.subr.bf16.mxu0 0
      %399 = vmatpush1.bf16.msra.mxu0 0
      %400 = vmatprep.subr.bf16.mxu0 0
      %401 = vmatpush1.bf16.msra.mxu0 0
      %402 = vmatprep.subr.bf16.mxu0 0
      %403 = vmatpush1.bf16.msra.mxu0 0
      %404 = vmatprep.subr.bf16.mxu0 0
      %405 = vmatpush1.bf16.msra.mxu0 0
      %406 = vmatprep.subr.bf16.mxu0 0
      %407 = vmatpush1.bf16.msra.mxu0 0
      %408 = vmatprep.subr.bf16.mxu0 0
      %409 = vmatpush1.bf16.msra.mxu0 0
      %410 = vmatprep.subr.bf16.mxu0 0
      %411 = vmatpush1.bf16.msra.mxu0 0
      %412 = vmatprep.subr.bf16.mxu0 0
      %413 = vmatpush1.bf16.msra.mxu0 0
      %414 = vmatprep.subr.bf16.mxu0 0
      %415 = vmatpush1.bf16.msra.mxu0 0
      %416 = vmatprep.subr.bf16.mxu0 0
      %417 = vmatpush1.bf16.msra.mxu0 0
      %418 = vmatprep.subr.bf16.mxu0 0
      %419 = vmatpush1.bf16.msra.mxu0 0
      %420 = vmatprep.mubr.bf16.mxu0 0
      %421 = vmatmul.mubr.bf16.gmra.mrb[0].mxu0 %v337
      %v422 = vpop.f32.mrb[0].mxu0
      %v423 = vadd.f32 0.0, %v422
      %v424 = vpop.f32.mrb[0].mxu0
      %v425 = vpop.f32.mrb[0].mxu0
      %v426 = vadd.f32 0.0, %v425
      %v427 = vpop.f32.mrb[0].mxu0
      %428 = vmatprep.mubr.bf16.mxu0 0
      %429 = vmatmul.mubr.bf16.gmra.mrb[0].mxu0 %v340
      %v430 = vpop.f32.mrb[0].mxu0
      %v431 = vadd.f32 0.0, %v430
      %v432 = vpop.f32.mrb[0].mxu0
      %v433 = vpop.f32.mrb[0].mxu0
      %v434 = vadd.f32 0.0, %v433
      %v435 = vpop.f32.mrb[0].mxu0
      %436 = vmatprep.mubr.bf16.mxu0 0
      %437 = vmatmul.mubr.bf16.gmra.mrb[0].mxu0 %v343
      %v438 = vpop.f32.mrb[0].mxu0
      %v439 = vadd.f32 0.0, %v438
      %v440 = vpop.f32.mrb[0].mxu0
      %v441 = vpop.f32.mrb[0].mxu0
      %v442 = vadd.f32 0.0, %v441
      %v443 = vpop.f32.mrb[0].mxu0
      %444 = vmatprep.mubr.bf16.mxu0 0
      %445 = vmatmul.mubr.bf16.gmra.mrb[0].mxu0 %v346
      %v446 = vpop.f32.mrb[0].mxu0
      %v447 = vadd.f32 0.0, %v446
      %v448 = vpop.f32.mrb[0].mxu0
      %v449 = vpop.f32.mrb[0].mxu0
      %v450 = vadd.f32 0.0, %v449
      %v451 = vpop.f32.mrb[0].mxu0
      %452 = vmatprep.mubr.bf16.mxu0 0
      %453 = vmatmul.mubr.bf16.gmra.mrb[0].mxu0 %v349
      %v454 = vpop.f32.mrb[0].mxu0
      %v455 = vadd.f32 0.0, %v454
      %v456 = vpop.f32.mrb[0].mxu0
      %v457 = vpop.f32.mrb[0].mxu0
      %v458 = vadd.f32 0.0, %v457
      %v459 = vpop.f32.mrb[0].mxu0
      %460 = vmatprep.mubr.bf16.mxu0 0
      %461 = vmatmul.mubr.bf16.gmra.mrb[0].mxu0 %v352
      %v462 = vpop.f32.mrb[0].mxu0
      %v463 = vadd.f32 0.0, %v462
      %v464 = vpop.f32.mrb[0].mxu0
      %v465 = vpop.f32.mrb[0].mxu0
      %v466 = vadd.f32 0.0, %v465
      %v467 = vpop.f32.mrb[0].mxu0
      %468 = vmatprep.mubr.bf16.mxu0 0
      %469 = vmatmul.mubr.bf16.gmra.mrb[0].mxu0 %v355
      %v470 = vpop.f32.mrb[0].mxu0
      %v471 = vadd.f32 0.0, %v470
      %v472 = vpop.f32.mrb[0].mxu0
      %v473 = vpop.f32.mrb[0].mxu0
      %v474 = vadd.f32 0.0, %v473
      %v475 = vpop.f32.mrb[0].mxu0
      %476 = vmatprep.mubr.bf16.mxu0 0
      %477 = vmatmul.mubr.bf16.gmra.mrb[0].mxu0 %v358
      %v478 = vpop.f32.mrb[0].mxu0
      %v479 = vadd.f32 0.0, %v478
      %v480 = vpop.f32.mrb[0].mxu0
      %v481 = vpop.f32.mrb[0].mxu0
      %v482 = vadd.f32 0.0, %v481
      %v483 = vpop.f32.mrb[0].mxu0
      %484 = vmatprep.mubr.bf16.mxu0 0
      %485 = vmatmul.mubr.bf16.gmra.mrb[0].mxu0 %v361
      %v486 = vpop.f32.mrb[0].mxu0
      %v487 = vadd.f32 0.0, %v486
      %v488 = vpop.f32.mrb[0].mxu0
      %v489 = vpop.f32.mrb[0].mxu0
      %v490 = vadd.f32 0.0, %v489
      %v491 = vpop.f32.mrb[0].mxu0
      %492 = vmatprep.mubr.bf16.mxu0 0
      %493 = vmatmul.mubr.bf16.gmra.mrb[0].mxu0 %v364
      %v494 = vpop.f32.mrb[0].mxu0
      %v495 = vadd.f32 0.0, %v494
      %v496 = vpop.f32.mrb[0].mxu0
      %v497 = vpop.f32.mrb[0].mxu0
      %v498 = vadd.f32 0.0, %v497
      %v499 = vpop.f32.mrb[0].mxu0
      %500 = vmatprep.mubr.bf16.mxu0 0
      %501 = vmatmul.mubr.bf16.gmra.mrb[0].mxu0 %v367
      %v502 = vpop.f32.mrb[0].mxu0
      %v503 = vadd.f32 0.0, %v502
      %v504 = vpop.f32.mrb[0].mxu0
      %v505 = vpop.f32.mrb[0].mxu0
      %v506 = vadd.f32 0.0, %v505
      %v507 = vpop.f32.mrb[0].mxu0
      %508 = vmatprep.mubr.bf16.mxu0 0
      %509 = vmatmul.mubr.bf16.gmra.mrb[0].mxu0 %v370
      %v510 = vpop.f32.mrb[0].mxu0
      %v511 = vadd.f32 0.0, %v510
      %v512 = vpop.f32.mrb[0].mxu0
      %v513 = vpop.f32.mrb[0].mxu0
      %v514 = vadd.f32 0.0, %v513
      %v515 = vpop.f32.mrb[0].mxu0
      %516 = vmatprep.mubr.bf16.mxu0 0
      %517 = vmatmul.mubr.bf16.gmra.mrb[0].mxu0 %v373
      %v518 = vpop.f32.mrb[0].mxu0
      %v519 = vadd.f32 0.0, %v518
      %v520 = vpop.f32.mrb[0].mxu0
      %v521 = vpop.f32.mrb[0].mxu0
      %v522 = vadd.f32 0.0, %v521
      %v523 = vpop.f32.mrb[0].mxu0
      %524 = vmatprep.mubr.bf16.mxu0 0
      %525 = vmatmul.mubr.bf16.gmra.mrb[0].mxu0 %v376
      %v526 = vpop.f32.mrb[0].mxu0
      %v527 = vadd.f32 0.0, %v526
      %v528 = vpop.f32.mrb[0].mxu0
      %v529 = vpop.f32.mrb[0].mxu0
      %v530 = vadd.f32 0.0, %v529
      %v531 = vpop.f32.mrb[0].mxu0
      %532 = vmatprep.mubr.bf16.mxu0 0
      %533 = vmatmul.mubr.bf16.gmra.mrb[0].mxu0 %v379
      %v534 = vpop.f32.mrb[0].mxu0
      %v535 = vadd.f32 0.0, %v534
      %v536 = vpop.f32.mrb[0].mxu0
      %v537 = vpop.f32.mrb[0].mxu0
      %v538 = vadd.f32 0.0, %v537
      %v539 = vpop.f32.mrb[0].mxu0
      %540 = vmatprep.mubr.bf16.mxu0 0
      %541 = vmatmul.mubr.bf16.gmra.mrb[0].mxu0 %v382
      %v542 = vpop.f32.mrb[0].mxu0
      %v543 = vadd.f32 0.0, %v542
      %v544 = vpop.f32.mrb[0].mxu0
      %v545 = vpop.f32.mrb[0].mxu0
      %v546 = vadd.f32 0.0, %v545
      %v547 = vpop.f32.mrb[0].mxu0
      %548 = vdwg.mxu0
      %v551 = vunpack.c.l.b16 %v211
      %v552 = vunpack.c.l.b16 %v212
      %v553 = vpack.c.b16 %v552, %v551
      %v556 = vunpack.c.l.b16 %v243
      %v557 = vunpack.c.l.b16 %v244
      %v558 = vpack.c.b16 %v557, %v556
      %v560 = vsel %vm335, %v553, 0
      %v563 = vsel %vm384, %v558, 0
      %565 = vmatprep.subr.bf16.mxu0 0
      %566 = vmatpush1.bf16.msra.mxu0 %v563
      %567 = vmatprep.subr.bf16.mxu0 0
      %568 = vmatpush1.bf16.msra.mxu0 0
      %569 = vmatprep.subr.bf16.mxu0 0
      %570 = vmatpush1.bf16.msra.mxu0 0
      %571 = vmatprep.subr.bf16.mxu0 0
      %572 = vmatpush1.bf16.msra.mxu0 0
      %573 = vmatprep.subr.bf16.mxu0 0
      %574 = vmatpush1.bf16.msra.mxu0 0
      %575 = vmatprep.subr.bf16.mxu0 0
      %576 = vmatpush1.bf16.msra.mxu0 0
      %577 = vmatprep.subr.bf16.mxu0 0
      %578 = vmatpush1.bf16.msra.mxu0 0
      %579 = vmatprep.subr.bf16.mxu0 0
      %580 = vmatpush1.bf16.msra.mxu0 0
      %581 = vmatprep.subr.bf16.mxu0 0
      %582 = vmatpush1.bf16.msra.mxu0 0
      %583 = vmatprep.subr.bf16.mxu0 0
      %584 = vmatpush1.bf16.msra.mxu0 0
      %585 = vmatprep.subr.bf16.mxu0 0
      %586 = vmatpush1.bf16.msra.mxu0 0
      %587 = vmatprep.subr.bf16.mxu0 0
      %588 = vmatpush1.bf16.msra.mxu0 0
      %589 = vmatprep.subr.bf16.mxu0 0
      %590 = vmatpush1.bf16.msra.mxu0 0
      %591 = vmatprep.subr.bf16.mxu0 0
      %592 = vmatpush1.bf16.msra.mxu0 0
      %593 = vmatprep.subr.bf16.mxu0 0
      %594 = vmatpush1.bf16.msra.mxu0 0
      %595 = vmatprep.subr.bf16.mxu0 0
      %596 = vmatpush1.bf16.msra.mxu0 0
      %597 = vmatprep.mubr.bf16.mxu0 0
      %598 = vmatmul.mubr.bf16.gmra.mrb[0].mxu0 %v560
      %v599 = vpop.f32.mrb[0].mxu0
      %v600 = vadd.f32 %v423, %v599
      %v601 = vpop.f32.mrb[0].mxu0
      %v602 = vpop.f32.mrb[0].mxu0
      %v603 = vadd.f32 %v426, %v602
      %v604 = vpop.f32.mrb[0].mxu0
      %605 = vmatprep.mubr.bf16.mxu0 0
      %606 = vmatmul.mubr.bf16.gmra.mrb[0].mxu0 %v337
      %v607 = vpop.f32.mrb[0].mxu0
      %v608 = vadd.f32 %v431, %v607
      %v609 = vpop.f32.mrb[0].mxu0
      %v610 = vpop.f32.mrb[0].mxu0
      %v611 = vadd.f32 %v434, %v610
      %v612 = vpop.f32.mrb[0].mxu0
      %613 = vmatprep.mubr.bf16.mxu0 0
      %614 = vmatmul.mubr.bf16.gmra.mrb[0].mxu0 %v340
      %v615 = vpop.f32.mrb[0].mxu0
      %v616 = vadd.f32 %v439, %v615
      %v617 = vpop.f32.mrb[0].mxu0
      %v618 = vpop.f32.mrb[0].mxu0
      %v619 = vadd.f32 %v442, %v618
      %v620 = vpop.f32.mrb[0].mxu0
      %621 = vmatprep.mubr.bf16.mxu0 0
      %622 = vmatmul.mubr.bf16.gmra.mrb[0].mxu0 %v343
      %v623 = vpop.f32.mrb[0].mxu0
      %v624 = vadd.f32 %v447, %v623
      %v625 = vpop.f32.mrb[0].mxu0
      %v626 = vpop.f32.mrb[0].mxu0
      %v627 = vadd.f32 %v450, %v626
      %v628 = vpop.f32.mrb[0].mxu0
      %629 = vmatprep.mubr.bf16.mxu0 0
      %630 = vmatmul.mubr.bf16.gmra.mrb[0].mxu0 %v346
      %v631 = vpop.f32.mrb[0].mxu0
      %v632 = vadd.f32 %v455, %v631
      %v633 = vpop.f32.mrb[0].mxu0
      %v634 = vpop.f32.mrb[0].mxu0
      %v635 = vadd.f32 %v458, %v634
      %v636 = vpop.f32.mrb[0].mxu0
      %637 = vmatprep.mubr.bf16.mxu0 0
      %638 = vmatmul.mubr.bf16.gmra.mrb[0].mxu0 %v349
      %v639 = vpop.f32.mrb[0].mxu0
      %v640 = vadd.f32 %v463, %v639
      %v641 = vpop.f32.mrb[0].mxu0
      %v642 = vpop.f32.mrb[0].mxu0
      %v643 = vadd.f32 %v466, %v642
      %v644 = vpop.f32.mrb[0].mxu0
      %645 = vmatprep.mubr.bf16.mxu0 0
      %646 = vmatmul.mubr.bf16.gmra.mrb[0].mxu0 %v352
      %v647 = vpop.f32.mrb[0].mxu0
      %v648 = vadd.f32 %v471, %v647
      %v649 = vpop.f32.mrb[0].mxu0
      %v650 = vpop.f32.mrb[0].mxu0
      %v651 = vadd.f32 %v474, %v650
      %v652 = vpop.f32.mrb[0].mxu0
      %653 = vmatprep.mubr.bf16.mxu0 0
      %654 = vmatmul.mubr.bf16.gmra.mrb[0].mxu0 %v355
      %v655 = vpop.f32.mrb[0].mxu0
      %v656 = vadd.f32 %v479, %v655
      %v657 = vpop.f32.mrb[0].mxu0
      %v658 = vpop.f32.mrb[0].mxu0
      %v659 = vadd.f32 %v482, %v658
      %v660 = vpop.f32.mrb[0].mxu0
      %661 = vmatprep.mubr.bf16.mxu0 0
      %662 = vmatmul.mubr.bf16.gmra.mrb[0].mxu0 %v358
      %v663 = vpop.f32.mrb[0].mxu0
      %v664 = vadd.f32 %v487, %v663
      %v665 = vpop.f32.mrb[0].mxu0
      %v666 = vpop.f32.mrb[0].mxu0
      %v667 = vadd.f32 %v490, %v666
      %v668 = vpop.f32.mrb[0].mxu0
      %669 = vmatprep.mubr.bf16.mxu0 0
      %670 = vmatmul.mubr.bf16.gmra.mrb[0].mxu0 %v361
      %v671 = vpop.f32.mrb[0].mxu0
      %v672 = vadd.f32 %v495, %v671
      %v673 = vpop.f32.mrb[0].mxu0
      %v674 = vpop.f32.mrb[0].mxu0
      %v675 = vadd.f32 %v498, %v674
      %v676 = vpop.f32.mrb[0].mxu0
      %677 = vmatprep.mubr.bf16.mxu0 0
      %678 = vmatmul.mubr.bf16.gmra.mrb[0].mxu0 %v364
      %v679 = vpop.f32.mrb[0].mxu0
      %v680 = vadd.f32 %v503, %v679
      %v681 = vpop.f32.mrb[0].mxu0
      %v682 = vpop.f32.mrb[0].mxu0
      %v683 = vadd.f32 %v506, %v682
      %v684 = vpop.f32.mrb[0].mxu0
      %685 = vmatprep.mubr.bf16.mxu0 0
      %686 = vmatmul.mubr.bf16.gmra.mrb[0].mxu0 %v367
      %v687 = vpop.f32.mrb[0].mxu0
      %v688 = vadd.f32 %v511, %v687
      %v689 = vpop.f32.mrb[0].mxu0
      %v690 = vpop.f32.mrb[0].mxu0
      %v691 = vadd.f32 %v514, %v690
      %v692 = vpop.f32.mrb[0].mxu0
      %693 = vmatprep.mubr.bf16.mxu0 0
      %694 = vmatmul.mubr.bf16.gmra.mrb[0].mxu0 %v370
      %v695 = vpop.f32.mrb[0].mxu0
      %v696 = vadd.f32 %v519, %v695
      %v697 = vpop.f32.mrb[0].mxu0
      %v698 = vpop.f32.mrb[0].mxu0
      %v699 = vadd.f32 %v522, %v698
      %v700 = vpop.f32.mrb[0].mxu0
      %701 = vmatprep.mubr.bf16.mxu0 0
      %702 = vmatmul.mubr.bf16.gmra.mrb[0].mxu0 %v373
      %v703 = vpop.f32.mrb[0].mxu0
      %v704 = vadd.f32 %v527, %v703
      %v705 = vpop.f32.mrb[0].mxu0
      %v706 = vpop.f32.mrb[0].mxu0
      %v707 = vadd.f32 %v530, %v706
      %v708 = vpop.f32.mrb[0].mxu0
      %709 = vmatprep.mubr.bf16.mxu0 0
      %710 = vmatmul.mubr.bf16.gmra.mrb[0].mxu0 %v376
      %v711 = vpop.f32.mrb[0].mxu0
      %v712 = vadd.f32 %v535, %v711
      %v713 = vpop.f32.mrb[0].mxu0
      %v714 = vpop.f32.mrb[0].mxu0
      %v715 = vadd.f32 %v538, %v714
      %v716 = vpop.f32.mrb[0].mxu0
      %717 = vmatprep.mubr.bf16.mxu0 0
      %718 = vmatmul.mubr.bf16.gmra.mrb[0].mxu0 %v379
      %v719 = vpop.f32.mrb[0].mxu0
      %v720 = vadd.f32 %v543, %v719
      %v721 = vpop.f32.mrb[0].mxu0
      %v722 = vpop.f32.mrb[0].mxu0
      %v723 = vadd.f32 %v546, %v722
      %v724 = vpop.f32.mrb[0].mxu0
      %725 = vdwg.mxu0
      %v726 = vld [vmem:[%s199 + $0x10] sm:$0xf]
      %v727 = vld [vmem:[%s199 + $0x14] sm:$0xf]
      %v728 = vld [vmem:[%s199 + $0x18] sm:$0xf]
      %v729 = vld [vmem:[%s199 + $0x1c] sm:$0xf]
      %v730 = vld [vmem:[%s199 + $0x20] sm:$0xf]
      %v731 = vld [vmem:[%s199 + $0x24] sm:$0xf]
      %v732 = vld [vmem:[%s199 + $0x28] sm:$0xf]
      %v733 = vld [vmem:[%s199 + $0x2c] sm:$0xf]
      %v734 = vld [vmem:[%s199 + $0x30] sm:$0xf]
      %v735 = vld [vmem:[%s199 + $0x34] sm:$0xf]
      %v736 = vld [vmem:[%s199 + $0x38] sm:$0xf]
      %v737 = vld [vmem:[%s199 + $0x3c] sm:$0xf]
      %v738 = vld [vmem:[%s199 + $0x40] sm:$0xf]
      %v739 = vld [vmem:[%s199 + $0x44] sm:$0xf]
      %v740 = vld [vmem:[%s199 + $0x48] sm:$0xf]
      %v741 = vld [vmem:[%s199 + $0x4c] sm:$0xf]
      %v742 = vld [vmem:[%s199 + $0x50] sm:$0xf]
      %v743 = vld [vmem:[%s199 + $0x54] sm:$0xf]
      %v744 = vld [vmem:[%s199 + $0x58] sm:$0xf]
      %v745 = vld [vmem:[%s199 + $0x5c] sm:$0xf]
      %v746 = vld [vmem:[%s199 + $0x60] sm:$0xf]
      %v747 = vld [vmem:[%s199 + $0x64] sm:$0xf]
      %v748 = vld [vmem:[%s199 + $0x68] sm:$0xf]
      %v749 = vld [vmem:[%s199 + $0x6c] sm:$0xf]
      %v750 = vld [vmem:[%s199 + $0x70] sm:$0xf]
      %v751 = vld [vmem:[%s199 + $0x74] sm:$0xf]
      %v752 = vld [vmem:[%s199 + $0x78] sm:$0xf]
      %v753 = vld [vmem:[%s199 + $0x7c] sm:$0xf]
      %v754 = vld [vmem:[%s199 + $0x80] sm:$0xf]
      %v755 = vld [vmem:[%s199 + $0x84] sm:$0xf]
      %v756 = vld [vmem:[%s199 + $0x88] sm:$0xf]
      %v757 = vld [vmem:[%s199 + $0x8c] sm:$0xf]
      %s758 = scalar_lea.vmem %s1, 16
      %v759 = vld [vmem:[%s758] sm:$0xf]
      %v760 = vld [vmem:[%s758 + $0x4] sm:$0x3]
      %v793 = vunpack.c.l.b16 %v726
      %v794 = vunpack.c.l.b16 %v727
      %v795 = vunpack.c.l.b16 %v728
      %v796 = vunpack.c.l.b16 %v729
      %v797 = vunpack.c.l.b16 %v730
      %v798 = vunpack.c.l.b16 %v731
      %v799 = vunpack.c.l.b16 %v732
      %v800 = vunpack.c.l.b16 %v733
      %v801 = vunpack.c.l.b16 %v734
      %v802 = vunpack.c.l.b16 %v735
      %v803 = vunpack.c.l.b16 %v736
      %v804 = vunpack.c.l.b16 %v737
      %v805 = vunpack.c.l.b16 %v738
      %v806 = vunpack.c.l.b16 %v739
      %v807 = vunpack.c.l.b16 %v740
      %v808 = vunpack.c.l.b16 %v741
      %v809 = vunpack.c.l.b16 %v742
      %v810 = vunpack.c.l.b16 %v743
      %v811 = vunpack.c.l.b16 %v744
      %v812 = vunpack.c.l.b16 %v745
      %v813 = vunpack.c.l.b16 %v746
      %v814 = vunpack.c.l.b16 %v747
      %v815 = vunpack.c.l.b16 %v748
      %v816 = vunpack.c.l.b16 %v749
      %v817 = vunpack.c.l.b16 %v750
      %v818 = vunpack.c.l.b16 %v751
      %v819 = vunpack.c.l.b16 %v752
      %v820 = vunpack.c.l.b16 %v753
      %v821 = vunpack.c.l.b16 %v754
      %v822 = vunpack.c.l.b16 %v755
      %v823 = vunpack.c.l.b16 %v756
      %v824 = vunpack.c.l.b16 %v757
      %v825 = vpack.c.b16 %v794, %v793
      %v826 = vpack.c.b16 %v796, %v795
      %v827 = vpack.c.b16 %v798, %v797
      %v828 = vpack.c.b16 %v800, %v799
      %v829 = vpack.c.b16 %v802, %v801
      %v830 = vpack.c.b16 %v804, %v803
      %v831 = vpack.c.b16 %v806, %v805
      %v832 = vpack.c.b16 %v808, %v807
      %v833 = vpack.c.b16 %v810, %v809
      %v834 = vpack.c.b16 %v812, %v811
      %v835 = vpack.c.b16 %v814, %v813
      %v836 = vpack.c.b16 %v816, %v815
      %v837 = vpack.c.b16 %v818, %v817
      %v838 = vpack.c.b16 %v820, %v819
      %v839 = vpack.c.b16 %v822, %v821
      %v840 = vpack.c.b16 %v824, %v823
      %v843 = vunpack.c.l.b16 %v759
      %v844 = vunpack.c.l.b16 %v760
      %v845 = vpack.c.b16 %v844, %v843
      %v847 = vsel %vm335, %v825, 0
      %v850 = vsel %vm335, %v826, 0
      %v853 = vsel %vm335, %v827, 0
      %v856 = vsel %vm335, %v828, 0
      %v859 = vsel %vm335, %v829, 0
      %v862 = vsel %vm335, %v830, 0
      %v865 = vsel %vm335, %v831, 0
      %v868 = vsel %vm335, %v832, 0
      %v871 = vsel %vm335, %v833, 0
      %v874 = vsel %vm335, %v834, 0
      %v877 = vsel %vm335, %v835, 0
      %v880 = vsel %vm335, %v836, 0
      %v883 = vsel %vm335, %v837, 0
      %v886 = vsel %vm335, %v838, 0
      %v889 = vsel %vm335, %v839, 0
      %v892 = vsel %vm335, %v840, 0
      %v895 = vsel %vm384, %v845, 0
      %897 = vmatprep.subr.bf16.mxu0 0
      %898 = vmatpush1.bf16.msra.mxu0 %v895
      %899 = vmatprep.subr.bf16.mxu0 0
      %900 = vmatpush1.bf16.msra.mxu0 0
      %901 = vmatprep.subr.bf16.mxu0 0
      %902 = vmatpush1.bf16.msra.mxu0 0
      %903 = vmatprep.subr.bf16.mxu0 0
      %904 = vmatpush1.bf16.msra.mxu0 0
      %905 = vmatprep.subr.bf16.mxu0 0
      %906 = vmatpush1.bf16.msra.mxu0 0
      %907 = vmatprep.subr.bf16.mxu0 0
      %908 = vmatpush1.bf16.msra.mxu0 0
      %909 = vmatprep.subr.bf16.mxu0 0
      %910 = vmatpush1.bf16.msra.mxu0 0
      %911 = vmatprep.subr.bf16.mxu0 0
      %912 = vmatpush1.bf16.msra.mxu0 0
      %913 = vmatprep.subr.bf16.mxu0 0
      %914 = vmatpush1.bf16.msra.mxu0 0
      %915 = vmatprep.subr.bf16.mxu0 0
      %916 = vmatpush1.bf16.msra.mxu0 0
      %917 = vmatprep.subr.bf16.mxu0 0
      %918 = vmatpush1.bf16.msra.mxu0 0
      %919 = vmatprep.subr.bf16.mxu0 0
      %920 = vmatpush1.bf16.msra.mxu0 0
      %921 = vmatprep.subr.bf16.mxu0 0
      %922 = vmatpush1.bf16.msra.mxu0 0
      %923 = vmatprep.subr.bf16.mxu0 0
      %924 = vmatpush1.bf16.msra.mxu0 0
      %925 = vmatprep.subr.bf16.mxu0 0
      %926 = vmatpush1.bf16.msra.mxu0 0
      %927 = vmatprep.subr.bf16.mxu0 0
      %928 = vmatpush1.bf16.msra.mxu0 0
      %929 = vmatprep.mubr.bf16.mxu0 0
      %930 = vmatmul.mubr.bf16.gmra.mrb[0].mxu0 %v847
      %v931 = vpop.f32.mrb[0].mxu0
      %v932 = vadd.f32 0.0, %v931
      %v933 = vpop.f32.mrb[0].mxu0
      %v934 = vpop.f32.mrb[0].mxu0
      %v935 = vadd.f32 0.0, %v934
      %v936 = vpop.f32.mrb[0].mxu0
      %937 = vmatprep.mubr.bf16.mxu0 0
      %938 = vmatmul.mubr.bf16.gmra.mrb[0].mxu0 %v850
      %v939 = vpop.f32.mrb[0].mxu0
      %v940 = vadd.f32 0.0, %v939
      %v941 = vpop.f32.mrb[0].mxu0
      %v942 = vpop.f32.mrb[0].mxu0
      %v943 = vadd.f32 0.0, %v942
      %v944 = vpop.f32.mrb[0].mxu0
      %945 = vmatprep.mubr.bf16.mxu0 0
      %946 = vmatmul.mubr.bf16.gmra.mrb[0].mxu0 %v853
      %v947 = vpop.f32.mrb[0].mxu0
      %v948 = vadd.f32 0.0, %v947
      %v949 = vpop.f32.mrb[0].mxu0
      %v950 = vpop.f32.mrb[0].mxu0
      %v951 = vadd.f32 0.0, %v950
      %v952 = vpop.f32.mrb[0].mxu0
      %953 = vmatprep.mubr.bf16.mxu0 0
      %954 = vmatmul.mubr.bf16.gmra.mrb[0].mxu0 %v856
      %v955 = vpop.f32.mrb[0].mxu0
      %v956 = vadd.f32 0.0, %v955
      %v957 = vpop.f32.mrb[0].mxu0
      %v958 = vpop.f32.mrb[0].mxu0
      %v959 = vadd.f32 0.0, %v958
      %v960 = vpop.f32.mrb[0].mxu0
      %961 = vmatprep.mubr.bf16.mxu0 0
      %962 = vmatmul.mubr.bf16.gmra.mrb[0].mxu0 %v859
      %v963 = vpop.f32.mrb[0].mxu0
      %v964 = vadd.f32 0.0, %v963
      %v965 = vpop.f32.mrb[0].mxu0
      %v966 = vpop.f32.mrb[0].mxu0
      %v967 = vadd.f32 0.0, %v966
      %v968 = vpop.f32.mrb[0].mxu0
      %969 = vmatprep.mubr.bf16.mxu0 0
      %970 = vmatmul.mubr.bf16.gmra.mrb[0].mxu0 %v862
      %v971 = vpop.f32.mrb[0].mxu0
      %v972 = vadd.f32 0.0, %v971
      %v973 = vpop.f32.mrb[0].mxu0
      %v974 = vpop.f32.mrb[0].mxu0
      %v975 = vadd.f32 0.0, %v974
      %v976 = vpop.f32.mrb[0].mxu0
      %977 = vmatprep.mubr.bf16.mxu0 0
      %978 = vmatmul.mubr.bf16.gmra.mrb[0].mxu0 %v865
      %v979 = vpop.f32.mrb[0].mxu0
      %v980 = vadd.f32 0.0, %v979
      %v981 = vpop.f32.mrb[0].mxu0
      %v982 = vpop.f32.mrb[0].mxu0
      %v983 = vadd.f32 0.0, %v982
      %v984 = vpop.f32.mrb[0].mxu0
      %985 = vmatprep.mubr.bf16.mxu0 0
      %986 = vmatmul.mubr.bf16.gmra.mrb[0].mxu0 %v868
      %v987 = vpop.f32.mrb[0].mxu0
      %v988 = vadd.f32 0.0, %v987
      %v989 = vpop.f32.mrb[0].mxu0
      %v990 = vpop.f32.mrb[0].mxu0
      %v991 = vadd.f32 0.0, %v990
      %v992 = vpop.f32.mrb[0].mxu0
      %993 = vmatprep.mubr.bf16.mxu0 0
      %994 = vmatmul.mubr.bf16.gmra.mrb[0].mxu0 %v871
      %v995 = vpop.f32.mrb[0].mxu0
      %v996 = vadd.f32 0.0, %v995
      %v997 = vpop.f32.mrb[0].mxu0
      %v998 = vpop.f32.mrb[0].mxu0
      %v999 = vadd.f32 0.0, %v998
      %v1000 = vpop.f32.mrb[0].mxu0
      %1001 = vmatprep.mubr.bf16.mxu0 0
      %1002 = vmatmul.mubr.bf16.gmra.mrb[0].mxu0 %v874
      %v1003 = vpop.f32.mrb[0].mxu0
      %v1004 = vadd.f32 0.0, %v1003
      %v1005 = vpop.f32.mrb[0].mxu0
      %v1006 = vpop.f32.mrb[0].mxu0
      %v1007 = vadd.f32 0.0, %v1006
      %v1008 = vpop.f32.mrb[0].mxu0
      %1009 = vmatprep.mubr.bf16.mxu0 0
      %1010 = vmatmul.mubr.bf16.gmra.mrb[0].mxu0 %v877
      %v1011 = vpop.f32.mrb[0].mxu0
      %v1012 = vadd.f32 0.0, %v1011
      %v1013 = vpop.f32.mrb[0].mxu0
      %v1014 = vpop.f32.mrb[0].mxu0
      %v1015 = vadd.f32 0.0, %v1014
      %v1016 = vpop.f32.mrb[0].mxu0
      %1017 = vmatprep.mubr.bf16.mxu0 0
      %1018 = vmatmul.mubr.bf16.gmra.mrb[0].mxu0 %v880
      %v1019 = vpop.f32.mrb[0].mxu0
      %v1020 = vadd.f32 0.0, %v1019
      %v1021 = vpop.f32.mrb[0].mxu0
      %v1022 = vpop.f32.mrb[0].mxu0
      %v1023 = vadd.f32 0.0, %v1022
      %v1024 = vpop.f32.mrb[0].mxu0
      %1025 = vmatprep.mubr.bf16.mxu0 0
      %1026 = vmatmul.mubr.bf16.gmra.mrb[0].mxu0 %v883
      %v1027 = vpop.f32.mrb[0].mxu0
      %v1028 = vadd.f32 0.0, %v1027
      %v1029 = vpop.f32.mrb[0].mxu0
      %v1030 = vpop.f32.mrb[0].mxu0
      %v1031 = vadd.f32 0.0, %v1030
      %v1032 = vpop.f32.mrb[0].mxu0
      %1033 = vmatprep.mubr.bf16.mxu0 0
      %1034 = vmatmul.mubr.bf16.gmra.mrb[0].mxu0 %v886
      %v1035 = vpop.f32.mrb[0].mxu0
      %v1036 = vadd.f32 0.0, %v1035
      %v1037 = vpop.f32.mrb[0].mxu0
      %v1038 = vpop.f32.mrb[0].mxu0
      %v1039 = vadd.f32 0.0, %v1038
      %v1040 = vpop.f32.mrb[0].mxu0
      %1041 = vmatprep.mubr.bf16.mxu0 0
      %1042 = vmatmul.mubr.bf16.gmra.mrb[0].mxu0 %v889
      %v1043 = vpop.f32.mrb[0].mxu0
      %v1044 = vadd.f32 0.0, %v1043
      %v1045 = vpop.f32.mrb[0].mxu0
      %v1046 = vpop.f32.mrb[0].mxu0
      %v1047 = vadd.f32 0.0, %v1046
      %v1048 = vpop.f32.mrb[0].mxu0
      %1049 = vmatprep.mubr.bf16.mxu0 0
      %1050 = vmatmul.mubr.bf16.gmra.mrb[0].mxu0 %v892
      %v1051 = vpop.f32.mrb[0].mxu0
      %v1052 = vadd.f32 0.0, %v1051
      %v1053 = vpop.f32.mrb[0].mxu0
      %v1054 = vpop.f32.mrb[0].mxu0
      %v1055 = vadd.f32 0.0, %v1054
      %v1056 = vpop.f32.mrb[0].mxu0
      %1057 = vdwg.mxu0
      %v1058 = vadd.f32 %v600, %v932
      %v1059 = vadd.f32 %v603, %v935
      %v1060 = vadd.f32 %v608, %v940
      %v1061 = vadd.f32 %v611, %v943
      %v1062 = vadd.f32 %v616, %v948
      %v1063 = vadd.f32 %v619, %v951
      %v1064 = vadd.f32 %v624, %v956
      %v1065 = vadd.f32 %v627, %v959
      %v1066 = vadd.f32 %v632, %v964
      %v1067 = vadd.f32 %v635, %v967
      %v1068 = vadd.f32 %v640, %v972
      %v1069 = vadd.f32 %v643, %v975
      %v1070 = vadd.f32 %v648, %v980
      %v1071 = vadd.f32 %v651, %v983
      %v1072 = vadd.f32 %v656, %v988
      %v1073 = vadd.f32 %v659, %v991
      %v1074 = vadd.f32 %v664, %v996
      %v1075 = vadd.f32 %v667, %v999
      %v1076 = vadd.f32 %v672, %v1004
      %v1077 = vadd.f32 %v675, %v1007
      %v1078 = vadd.f32 %v680, %v1012
      %v1079 = vadd.f32 %v683, %v1015
      %v1080 = vadd.f32 %v688, %v1020
      %v1081 = vadd.f32 %v691, %v1023
      %v1082 = vadd.f32 %v696, %v1028
      %v1083 = vadd.f32 %v699, %v1031
      %v1084 = vadd.f32 %v704, %v1036
      %v1085 = vadd.f32 %v707, %v1039
      %v1086 = vadd.f32 %v712, %v1044
      %v1087 = vadd.f32 %v715, %v1047
      %v1088 = vadd.f32 %v720, %v1052
      %v1089 = vadd.f32 %v723, %v1055
      %v1090 = vld [vmem:[%s2] sm:$0x1]
      %v1092 = vlaneseq
      %v1093 = vshrl.u32 %v1092, 7
      %v1094 = vsub.s32 0, %v1093
      %v1095 = vrot.slane %v1090, %v1094
      %v1097 = vadd.f32 %v1058, %v1095
      %v1098 = vadd.f32 %v1059, %v1095
      %v1099 = vadd.f32 %v1060, %v1095
      %v1100 = vadd.f32 %v1061, %v1095
      %v1101 = vadd.f32 %v1062, %v1095
      %v1102 = vadd.f32 %v1063, %v1095
      %v1103 = vadd.f32 %v1064, %v1095
      %v1104 = vadd.f32 %v1065, %v1095
      %v1105 = vadd.f32 %v1066, %v1095
      %v1106 = vadd.f32 %v1067, %v1095
      %v1107 = vadd.f32 %v1068, %v1095
      %v1108 = vadd.f32 %v1069, %v1095
      %v1109 = vadd.f32 %v1070, %v1095
      %v1110 = vadd.f32 %v1071, %v1095
      %v1111 = vadd.f32 %v1072, %v1095
      %v1112 = vadd.f32 %v1073, %v1095
      %v1113 = vadd.f32 %v1074, %v1095
      %v1114 = vadd.f32 %v1075, %v1095
      %v1115 = vadd.f32 %v1076, %v1095
      %v1116 = vadd.f32 %v1077, %v1095
      %v1117 = vadd.f32 %v1078, %v1095
      %v1118 = vadd.f32 %v1079, %v1095
      %v1119 = vadd.f32 %v1080, %v1095
      %v1120 = vadd.f32 %v1081, %v1095
      %v1121 = vadd.f32 %v1082, %v1095
      %v1122 = vadd.f32 %v1083, %v1095
      %v1123 = vadd.f32 %v1084, %v1095
      %v1124 = vadd.f32 %v1085, %v1095
      %v1125 = vadd.f32 %v1086, %v1095
      %v1126 = vadd.f32 %v1087, %v1095
      %v1127 = vadd.f32 %v1088, %v1095
      %v1128 = vadd.f32 %v1089, %v1095
      %v1129 = vpack.c.bf16 %v1098, %v1097
      %v1130 = vpack.c.bf16 %v1100, %v1099
      %v1131 = vpack.c.bf16 %v1102, %v1101
      %v1132 = vpack.c.bf16 %v1104, %v1103
      %v1133 = vpack.c.bf16 %v1106, %v1105
      %v1134 = vpack.c.bf16 %v1108, %v1107
      %v1135 = vpack.c.bf16 %v1110, %v1109
      %v1136 = vpack.c.bf16 %v1112, %v1111
      %v1137 = vpack.c.bf16 %v1114, %v1113
      %v1138 = vpack.c.bf16 %v1116, %v1115
      %v1139 = vpack.c.bf16 %v1118, %v1117
      %v1140 = vpack.c.bf16 %v1120, %v1119
      %v1141 = vpack.c.bf16 %v1122, %v1121
      %v1142 = vpack.c.bf16 %v1124, %v1123
      %v1143 = vpack.c.bf16 %v1126, %v1125
      %v1144 = vpack.c.bf16 %v1128, %v1127
      %v1161 = vunpack.c.l.b16 %v1129
      %v1162 = vunpack.c.h.b16 %v1129
      %v1163 = vunpack.c.l.b16 %v1130
      %v1164 = vunpack.c.h.b16 %v1130
      %v1165 = vunpack.c.l.b16 %v1131
      %v1166 = vunpack.c.h.b16 %v1131
      %v1167 = vunpack.c.l.b16 %v1132
      %v1168 = vunpack.c.h.b16 %v1132
      %v1169 = vunpack.c.l.b16 %v1133
      %v1170 = vunpack.c.h.b16 %v1133
      %v1171 = vunpack.c.l.b16 %v1134
      %v1172 = vunpack.c.h.b16 %v1134
      %v1173 = vunpack.c.l.b16 %v1135
      %v1174 = vunpack.c.h.b16 %v1135
      %v1175 = vunpack.c.l.b16 %v1136
      %v1176 = vunpack.c.h.b16 %v1136
      %v1177 = vunpack.c.l.b16 %v1137
      %v1178 = vunpack.c.h.b16 %v1137
      %v1179 = vunpack.c.l.b16 %v1138
      %v1180 = vunpack.c.h.b16 %v1138
      %v1181 = vunpack.c.l.b16 %v1139
      %v1182 = vunpack.c.h.b16 %v1139
      %v1183 = vunpack.c.l.b16 %v1140
      %v1184 = vunpack.c.h.b16 %v1140
      %v1185 = vunpack.c.l.b16 %v1141
      %v1186 = vunpack.c.h.b16 %v1141
      %v1187 = vunpack.c.l.b16 %v1142
      %v1188 = vunpack.c.h.b16 %v1142
      %v1189 = vunpack.c.l.b16 %v1143
      %v1190 = vunpack.c.h.b16 %v1143
      %v1191 = vunpack.c.l.b16 %v1144
      %v1192 = vunpack.c.h.b16 %v1144
      %v1193 = vpack.c.b16 %v1161, %v1161
      %v1194 = vpack.c.b16 %v1162, %v1162
      %v1195 = vpack.c.b16 %v1163, %v1163
      %v1196 = vpack.c.b16 %v1164, %v1164
      %v1197 = vpack.c.b16 %v1165, %v1165
      %v1198 = vpack.c.b16 %v1166, %v1166
      %v1199 = vpack.c.b16 %v1167, %v1167
      %v1200 = vpack.c.b16 %v1168, %v1168
      %v1201 = vpack.c.b16 %v1169, %v1169
      %v1202 = vpack.c.b16 %v1170, %v1170
      %v1203 = vpack.c.b16 %v1171, %v1171
      %v1204 = vpack.c.b16 %v1172, %v1172
      %v1205 = vpack.c.b16 %v1173, %v1173
      %v1206 = vpack.c.b16 %v1174, %v1174
      %v1207 = vpack.c.b16 %v1175, %v1175
      %v1208 = vpack.c.b16 %v1176, %v1176
      %v1209 = vpack.c.b16 %v1177, %v1177
      %v1210 = vpack.c.b16 %v1178, %v1178
      %v1211 = vpack.c.b16 %v1179, %v1179
      %v1212 = vpack.c.b16 %v1180, %v1180
      %v1213 = vpack.c.b16 %v1181, %v1181
      %v1214 = vpack.c.b16 %v1182, %v1182
      %v1215 = vpack.c.b16 %v1183, %v1183
      %v1216 = vpack.c.b16 %v1184, %v1184
      %v1217 = vpack.c.b16 %v1185, %v1185
      %v1218 = vpack.c.b16 %v1186, %v1186
      %v1219 = vpack.c.b16 %v1187, %v1187
      %v1220 = vpack.c.b16 %v1188, %v1188
      %v1221 = vpack.c.b16 %v1189, %v1189
      %v1222 = vpack.c.b16 %v1190, %v1190
      %v1223 = vpack.c.b16 %v1191, %v1191
      %v1224 = vpack.c.b16 %v1192, %v1192
      %1257 = vst [vmem:[%s204] sm:$0xf] %v1193
      %1258 = vst [vmem:[%s204 + $0x4] sm:$0xf] %v1194
      %1259 = vst [vmem:[%s204 + $0x8] sm:$0xf] %v1195
      %1260 = vst [vmem:[%s204 + $0xc] sm:$0xf] %v1196
      %1261 = vst [vmem:[%s204 + $0x10] sm:$0xf] %v1197
      %1262 = vst [vmem:[%s204 + $0x14] sm:$0xf] %v1198
      %1263 = vst [vmem:[%s204 + $0x18] sm:$0xf] %v1199
      %1264 = vst [vmem:[%s204 + $0x1c] sm:$0xf] %v1200
      %1265 = vst [vmem:[%s204 + $0x20] sm:$0xf] %v1201
      %1266 = vst [vmem:[%s204 + $0x24] sm:$0xf] %v1202
      %1267 = vst [vmem:[%s204 + $0x28] sm:$0xf] %v1203
      %1268 = vst [vmem:[%s204 + $0x2c] sm:$0xf] %v1204
      %1269 = vst [vmem:[%s204 + $0x30] sm:$0xf] %v1205
      %1270 = vst [vmem:[%s204 + $0x34] sm:$0xf] %v1206
      %1271 = vst [vmem:[%s204 + $0x38] sm:$0xf] %v1207
      %1272 = vst [vmem:[%s204 + $0x3c] sm:$0xf] %v1208
      %1273 = vst [vmem:[%s204 + $0x40] sm:$0xf] %v1209
      %1274 = vst [vmem:[%s204 + $0x44] sm:$0xf] %v1210
      %1275 = vst [vmem:[%s204 + $0x48] sm:$0xf] %v1211
      %1276 = vst [vmem:[%s204 + $0x4c] sm:$0xf] %v1212
      %1277 = vst [vmem:[%s204 + $0x50] sm:$0xf] %v1213
      %1278 = vst [vmem:[%s204 + $0x54] sm:$0xf] %v1214
      %1279 = vst [vmem:[%s204 + $0x58] sm:$0xf] %v1215
      %1280 = vst [vmem:[%s204 + $0x5c] sm:$0xf] %v1216
      %1281 = vst [vmem:[%s204 + $0x60] sm:$0xf] %v1217
      %1282 = vst [vmem:[%s204 + $0x64] sm:$0xf] %v1218
      %1283 = vst [vmem:[%s204 + $0x68] sm:$0xf] %v1219
      %1284 = vst [vmem:[%s204 + $0x6c] sm:$0xf] %v1220
      %1285 = vst [vmem:[%s204 + $0x70] sm:$0xf] %v1221
      %1286 = vst [vmem:[%s204 + $0x74] sm:$0xf] %v1222
      %1287 = vst [vmem:[%s204 + $0x78] sm:$0xf] %v1223
      %1288 = vst [vmem:[%s204 + $0x7c] sm:$0xf] %v1224
      %v1289 = vadd.f32 %v1097, %v1098
      %v1290 = vadd.f32 %v1289, %v1099
      %v1291 = vadd.f32 %v1290, %v1100
      %v1292 = vadd.f32 %v1291, %v1101
      %v1293 = vadd.f32 %v1292, %v1102
      %v1294 = vadd.f32 %v1293, %v1103
      %v1295 = vadd.f32 %v1294, %v1104
      %v1296 = vadd.f32 %v1295, %v1105
      %v1297 = vadd.f32 %v1296, %v1106
      %v1298 = vadd.f32 %v1297, %v1107
      %v1299 = vadd.f32 %v1298, %v1108
      %v1300 = vadd.f32 %v1299, %v1109
      %v1301 = vadd.f32 %v1300, %v1110
      %v1302 = vadd.f32 %v1301, %v1111
      %v1303 = vadd.f32 %v1302, %v1112
      %v1304 = vadd.f32 %v1303, %v1113
      %v1305 = vadd.f32 %v1304, %v1114
      %v1306 = vadd.f32 %v1305, %v1115
      %v1307 = vadd.f32 %v1306, %v1116
      %v1308 = vadd.f32 %v1307, %v1117
      %v1309 = vadd.f32 %v1308, %v1118
      %v1310 = vadd.f32 %v1309, %v1119
      %v1311 = vadd.f32 %v1310, %v1120
      %v1312 = vadd.f32 %v1311, %v1121
      %v1313 = vadd.f32 %v1312, %v1122
      %v1314 = vadd.f32 %v1313, %v1123
      %v1315 = vadd.f32 %v1314, %v1124
      %v1316 = vadd.f32 %v1315, %v1125
      %v1317 = vadd.f32 %v1316, %v1126
      %v1318 = vadd.f32 %v1317, %v1127
      %v1319 = vadd.f32 %v1318, %v1128
      %v1320 = vrot.slane %v1319, 4
      %v1321 = vadd.f32 %v1319, %v1320
      %v1322 = vrot.slane %v1321, 2
      %v1323 = vadd.f32 %v1321, %v1322
      %v1324 = vrot.slane %v1323, 1
      %v1325 = vadd.f32 %v1323, %v1324
      %v1326 = vmul.f32 %v1097, %v1097
      %v1327 = vmul.f32 %v1098, %v1098
      %v1328 = vmul.f32 %v1099, %v1099
      %v1329 = vmul.f32 %v1100, %v1100
      %v1330 = vmul.f32 %v1101, %v1101
      %v1331 = vmul.f32 %v1102, %v1102
      %v1332 = vmul.f32 %v1103, %v1103
      %v1333 = vmul.f32 %v1104, %v1104
      %v1334 = vmul.f32 %v1105, %v1105
      %v1335 = vmul.f32 %v1106, %v1106
      %v1336 = vmul.f32 %v1107, %v1107
      %v1337 = vmul.f32 %v1108, %v1108
      %v1338 = vmul.f32 %v1109, %v1109
      %v1339 = vmul.f32 %v1110, %v1110
      %v1340 = vmul.f32 %v1111, %v1111
      %v1341 = vmul.f32 %v1112, %v1112
      %v1342 = vmul.f32 %v1113, %v1113
      %v1343 = vmul.f32 %v1114, %v1114
      %v1344 = vmul.f32 %v1115, %v1115
      %v1345 = vmul.f32 %v1116, %v1116
      %v1346 = vmul.f32 %v1117, %v1117
      %v1347 = vmul.f32 %v1118, %v1118
      %v1348 = vmul.f32 %v1119, %v1119
      %v1349 = vmul.f32 %v1120, %v1120
      %v1350 = vmul.f32 %v1121, %v1121
      %v1351 = vmul.f32 %v1122, %v1122
      %v1352 = vmul.f32 %v1123, %v1123
      %v1353 = vmul.f32 %v1124, %v1124
      %v1354 = vmul.f32 %v1125, %v1125
      %v1355 = vmul.f32 %v1126, %v1126
      %v1356 = vmul.f32 %v1127, %v1127
      %v1357 = vmul.f32 %v1128, %v1128
      %v1358 = vadd.f32 %v1326, %v1327
      %v1359 = vadd.f32 %v1358, %v1328
      %v1360 = vadd.f32 %v1359, %v1329
      %v1361 = vadd.f32 %v1360, %v1330
      %v1362 = vadd.f32 %v1361, %v1331
      %v1363 = vadd.f32 %v1362, %v1332
      %v1364 = vadd.f32 %v1363, %v1333
      %v1365 = vadd.f32 %v1364, %v1334
      %v1366 = vadd.f32 %v1365, %v1335
      %v1367 = vadd.f32 %v1366, %v1336
      %v1368 = vadd.f32 %v1367, %v1337
      %v1369 = vadd.f32 %v1368, %v1338
      %v1370 = vadd.f32 %v1369, %v1339
      %v1371 = vadd.f32 %v1370, %v1340
      %v1372 = vadd.f32 %v1371, %v1341
      %v1373 = vadd.f32 %v1372, %v1342
      %v1374 = vadd.f32 %v1373, %v1343
      %v1375 = vadd.f32 %v1374, %v1344
      %v1376 = vadd.f32 %v1375, %v1345
      %v1377 = vadd.f32 %v1376, %v1346
      %v1378 = vadd.f32 %v1377, %v1347
      %v1379 = vadd.f32 %v1378, %v1348
      %v1380 = vadd.f32 %v1379, %v1349
      %v1381 = vadd.f32 %v1380, %v1350
      %v1382 = vadd.f32 %v1381, %v1351
      %v1383 = vadd.f32 %v1382, %v1352
      %v1384 = vadd.f32 %v1383, %v1353
      %v1385 = vadd.f32 %v1384, %v1354
      %v1386 = vadd.f32 %v1385, %v1355
      %v1387 = vadd.f32 %v1386, %v1356
      %v1388 = vadd.f32 %v1387, %v1357
      %v1389 = vrot.slane %v1388, 4
      %v1390 = vadd.f32 %v1388, %v1389
      %v1391 = vrot.slane %v1390, 2
      %v1392 = vadd.f32 %v1390, %v1391
      %v1393 = vrot.slane %v1392, 1
      %v1394 = vadd.f32 %v1392, %v1393
      %vm1395 = vcmask 1040384
      %v1396 = vsel %vm1395, %v1325, %v1394
      %1397 = vst [vmem:[%s209] sm:$0x3] %v1396
      %s1398 = smul.u32 32, %s16
      %p1399 = scmp.lt.s32.totalorder %s1398, 63
      %s1400 = scalar_select %p1399, %s1398, 63
      %s1401 = smul.addr %s1400, 4
      %s1402 = scalar_lea.vmem %s3, %s1401
      %p1403 = scmp.lt.s32.totalorder %s16, 1
      %s1404 = scalar_select %p1403, %s16, 1
      %s1405 = smul.addr %s1404, 2
      %s1406 = scalar_lea.vmem %s4, %s1405
      // Predicated region
      $region33: #{double_conv.4} parent=31 // pred_check
        %p1407 = pneg %p102
      $region34: #{double_conv.4} parent=31 // pred_check_branch
        %1409 = sbr.rel (%p1407) target = $region36
      $region35: #{double_conv.4} parent=31 // pred_region
        %s1410 = smul.u32 32, %s16
      $region36: #{double_conv.4} parent=31 // pred_fallthru
        _
      // Predicated region
      $region37: #{double_conv.4} parent=31 // pred_check
        %p1411 = pneg %p128
      $region38: #{double_conv.4} parent=31 // pred_check_branch
        %1413 = sbr.rel (%p1411) target = $region40
      $region39: #{double_conv.4} parent=31 // pred_region
        _
      $region40: #{double_conv.4} parent=31 // pred_fallthru
        _
    $region32: #{double_conv.4} parent=5 // pred_fallthru
      _
    %p1414 = scmp.le.s32.totalorder 2, %s11
    // Predicated region
    $region41: #{double_conv.4} parent=5 // pred_check
      %p1415 = pneg %p1414
    $region42: #{double_conv.4} parent=5 // pred_check_branch
      %1417 = sbr.rel (%p1415) target = $region44
    $region43: #{double_conv.4} parent=5 // pred_region
      %s1418 = ssub.s32 %s11, 2
      // Predicated region
      $region45: #{double_conv.4} parent=43 // pred_check
        %p1419 = pneg %p108
      $region46: #{double_conv.4} parent=43 // pred_check_branch
        %1421 = sbr.rel (%p1419) target = $region48
      $region47: #{double_conv.4} parent=43 // pred_region
        %s1422 = smul.u32 32, %s17
        %p1423 = scmp.lt.s32.totalorder %s1422, 63
        %s1424 = scalar_select %p1423, %s1422, 63
        %s1425 = smul.addr %s1424, 4
        %s1426 = scalar_lea.vmem %s3, %s1425
      $region48: #{double_conv.4} parent=43 // pred_fallthru
        _
      // Predicated region
      $region49: #{double_conv.4} parent=43 // pred_check
        %p1427 = pneg %p134
      $region50: #{double_conv.4} parent=43 // pred_check_branch
        %1429 = sbr.rel (%p1427) target = $region52
      $region51: #{double_conv.4} parent=43 // pred_region
        %p1430 = scmp.lt.s32.totalorder %s17, 1
        %s1431 = scalar_select %p1430, %s17, 1
        %s1432 = smul.addr %s1431, 2
        %s1433 = scalar_lea.vmem %s4, %s1432
      $region52: #{double_conv.4} parent=43 // pred_fallthru
        _
    $region44: #{double_conv.4} parent=5 // pred_fallthru
      _
  $region6: #{double_conv.4} parent=0 // loop_footer
    %s15 = sadd.s32 1, %s11
  $region7: #{double_conv.4} parent=0 // loop_footer_branch
    %10 = sbr.rel target = $region3
  $region8: #{double_conv.4} parent=0 // loop_exit
    _

// kernel: double_conv.7
$region0: #{double_conv.7}
  #allocation0 [shape = 'u32[]', space=smem, size = 0x4, offset = 0x4, fixed_abs, tag = 'smem constant byte address 0x4 - core index']
  #allocation1 [shape = 'u32[144,128]{1,0:T(1,128)}', space=vmem, size = 0x12000, scoped, tag = 'internal scratch']
  %s0 = inlined_call_operand.vmem [shape: bf16[512,128], index: 0, kind: input, shape index: {}]
  %s1 = inlined_call_operand.vmem [shape: f32[1,128], index: 1, kind: input, shape index: {}]
  %s2 = inlined_call_operand.vmem [shape: f32[1,128], index: 2, kind: input, shape index: {}]
  %s3 = inlined_call_operand.vmem [shape: f32[512,128], index: 3, kind: output, shape index: {}]
  %s4 = sld [smem:[#allocation0]]
  $region45: #{double_conv.7} parent=0
    _
  %s6 = ssub.s32 1, %s4
  %s7 = scalar_select 0, %s6, %s4
  loop: start=0, step=1, limit=4
  $region2: #{double_conv.7} parent=0 // loop_pre_header
    _
  $region3: #{double_conv.7} parent=0 // loop_header
    %s9 = sphi 0, %s13
    %p10 = scmp.ge.s32.totalorder %s9, 4
    %s19 = sphi 0, %s21
    %s22 = sphi 0, %s19
    %s23 = sphi 0, %s22
    %s39 = sphi 0, %s23
    %s43 = sphi 0, %s43
    %s45 = sphi 0, %s43
    %s46 = sphi 0, %s45
    %s60 = sphi 0, %s46
    %s64 = sphi 0, %s64
    %s66 = sphi 0, %s64
    %s67 = sphi 0, %s66
    %s81 = sphi 0, %s67
    %s87 = sphi 0, %s89
    %s90 = sphi 0, %s87
    %s91 = sphi 0, %s90
    %s107 = sphi 0, %s91
  $region4: #{double_conv.7} parent=0 // loop_header_branch
    %12 = sbr.rel (%p10) target = $region8
  $region5: #{double_conv.7} parent=0 // loop_body
    %s14 = ssub.s32 %s9, 1
    %s15 = ssub.s32 %s9, 2
    %s16 = sadd.s32 %s9, 1
    %s17 = ssub.s32 %s9, %s16
    %p18 = scmp.eq.s32.totalorder %s17, 0
    %s20 = sadd.s32 %s19, 1
    %s21 = scalar_select %p18, %s19, %s20
    %p24 = pneg %p18
    %p25 = scmp.eq.s32.totalorder %s9, 1
    %p26 = por %p24, %p25
    %p27 = scmp.ne.s32.totalorder %s19, %s22
    %p28 = scmp.eq.s32.totalorder %s9, 0
    %p29 = por %p27, %p28
    %p30 = scmp.ne.s32.totalorder %s19, %s22
    %p31 = scmp.eq.s32.totalorder %s14, 1
    %p32 = por %p30, %p31
    %p33 = scmp.ne.s32.totalorder %s22, %s23
    %p34 = scmp.eq.s32.totalorder %s14, 0
    %p35 = por %p33, %p34
    %p36 = scmp.ne.s32.totalorder %s22, %s23
    %p37 = scmp.eq.s32.totalorder %s15, 1
    %p38 = por %p36, %p37
    %p40 = scmp.ne.s32.totalorder %s23, %s39
    %p41 = scmp.eq.s32.totalorder %s15, 0
    %p42 = por %p40, %p41
    %s44 = sadd.s32 %s43, 1
    %p47 = scmp.eq.s32.totalorder %s9, 1
    %p48 = scmp.ne.s32.totalorder %s43, %s45
    %p49 = scmp.eq.s32.totalorder %s9, 0
    %p50 = por %p48, %p49
    %p51 = scmp.ne.s32.totalorder %s43, %s45
    %p52 = scmp.eq.s32.totalorder %s14, 1
    %p53 = por %p51, %p52
    %p54 = scmp.ne.s32.totalorder %s45, %s46
    %p55 = scmp.eq.s32.totalorder %s14, 0
    %p56 = por %p54, %p55
    %p57 = scmp.ne.s32.totalorder %s45, %s46
    %p58 = scmp.eq.s32.totalorder %s15, 1
    %p59 = por %p57, %p58
    %p61 = scmp.ne.s32.totalorder %s46, %s60
    %p62 = scmp.eq.s32.totalorder %s15, 0
    %p63 = por %p61, %p62
    %s65 = sadd.s32 %s64, 1
    %p68 = scmp.eq.s32.totalorder %s9, 1
    %p69 = scmp.ne.s32.totalorder %s64, %s66
    %p70 = scmp.eq.s32.totalorder %s9, 0
    %p71 = por %p69, %p70
    %p72 = scmp.ne.s32.totalorder %s64, %s66
    %p73 = scmp.eq.s32.totalorder %s14, 1
    %p74 = por %p72, %p73
    %p75 = scmp.ne.s32.totalorder %s66, %s67
    %p76 = scmp.eq.s32.totalorder %s14, 0
    %p77 = por %p75, %p76
    %p78 = scmp.ne.s32.totalorder %s66, %s67
    %p79 = scmp.eq.s32.totalorder %s15, 1
    %p80 = por %p78, %p79
    %p82 = scmp.ne.s32.totalorder %s67, %s81
    %p83 = scmp.eq.s32.totalorder %s15, 0
    %p84 = por %p82, %p83
    %s85 = ssub.s32 %s9, %s16
    %p86 = scmp.eq.s32.totalorder %s85, 0
    %s88 = sadd.s32 %s87, 1
    %s89 = scalar_select %p86, %s87, %s88
    %p92 = pneg %p86
    %p93 = scmp.eq.s32.totalorder %s9, 1
    %p94 = por %p92, %p93
    %p95 = scmp.ne.s32.totalorder %s87, %s90
    %p96 = scmp.eq.s32.totalorder %s9, 0
    %p97 = por %p95, %p96
    %p98 = scmp.ne.s32.totalorder %s87, %s90
    %p99 = scmp.eq.s32.totalorder %s14, 1
    %p100 = por %p98, %p99
    %p101 = scmp.ne.s32.totalorder %s90, %s91
    %p102 = scmp.eq.s32.totalorder %s14, 0
    %p103 = por %p101, %p102
    %p104 = scmp.ne.s32.totalorder %s90, %s91
    %p105 = scmp.eq.s32.totalorder %s15, 1
    %p106 = por %p104, %p105
    %p108 = scmp.ne.s32.totalorder %s91, %s107
    %p109 = scmp.eq.s32.totalorder %s15, 0
    %p110 = por %p108, %p109
    %p111 = scmp.le.s32.totalorder 1, %s9
    %p112 = scmp.lt.s32.totalorder %s9, 3
    %p113 = pnand %p111, %p112
    %p114 = pneg %p113
    // Predicated region
    $region9: #{double_conv.7} parent=5 // pred_check
      _
    $region10: #{double_conv.7} parent=5 // pred_check_branch
      %116 = sbr.rel (%p113) target = $region12
    $region11: #{double_conv.7} parent=5 // pred_region
      %s117 = ssub.s32 %s9, 1
      // Predicated region
      $region13: #{double_conv.7} parent=11 // pred_check
        %p118 = pneg %p56
      $region14: #{double_conv.7} parent=11 // pred_check_branch
        %120 = sbr.rel (%p118) target = $region16
      $region15: #{double_conv.7} parent=11 // pred_region
        _
      $region16: #{double_conv.7} parent=11 // pred_fallthru
        _
      // Predicated region
      $region17: #{double_conv.7} parent=11 // pred_check
        %p121 = pneg %p77
      $region18: #{double_conv.7} parent=11 // pred_check_branch
        %123 = sbr.rel (%p121) target = $region20
      $region19: #{double_conv.7} parent=11 // pred_region
        _
      $region20: #{double_conv.7} parent=11 // pred_fallthru
        _
    $region12: #{double_conv.7} parent=5 // pred_fallthru
      _
    %p124 = scmp.lt.s32.totalorder %s9, 2
    // Predicated region
    $region21: #{double_conv.7} parent=5 // pred_check
      %p125 = pneg %p124
    $region22: #{double_conv.7} parent=5 // pred_check_branch
      %127 = sbr.rel (%p125) target = $region24
    $region23: #{double_conv.7} parent=5 // pred_region
      // Predicated region
      $region25: #{double_conv.7} parent=23 // pred_check
        %p128 = pneg %p29
      $region26: #{double_conv.7} parent=23 // pred_check_branch
        %130 = sbr.rel (%p128) target = $region28
      $region27: #{double_conv.7} parent=23 // pred_region
        %s131 = smul.u32 32, %s9
        %p132 = scmp.lt.s32.totalorder %s131, 63
        %s133 = scalar_select %p132, %s131, 63
        %s134 = smul.addr %s133, 4
        %s135 = scalar_lea.vmem %s0, %s134
        %s136 = smul.u32 32, %s9
      $region28: #{double_conv.7} parent=23 // pred_fallthru
        _
    $region24: #{double_conv.7} parent=5 // pred_fallthru
      _
    %p137 = scmp.le.s32.totalorder 1, %s9
    %p138 = scmp.lt.s32.totalorder %s9, 3
    %p139 = pnand %p137, %p138
    %p140 = pneg %p139
    // Predicated region
    $region29: #{double_conv.7} parent=5 // pred_check
      _
    $region30: #{double_conv.7} parent=5 // pred_check_branch
      %142 = sbr.rel (%p139) target = $region32
    $region31: #{double_conv.7} parent=5 // pred_region
      %s143 = ssub.s32 %s9, 1
      %s144 = smul.u32 32, %s14
      %p145 = scmp.lt.s32.totalorder %s144, 63
      %s146 = scalar_select %p145, %s144, 63
      %s147 = smul.addr %s146, 4
      %s148 = scalar_lea.vmem %s0, %s147
      %p149 = pneg %p35
      %p150 = pneg %p32
      %p151 = pneg %p56
      %p152 = pneg %p53
      %p153 = pneg %p77
      %p154 = pneg %p74
      %p155 = pneg %p103
      %p156 = pneg %p100
      %s157 = smul.u32 32, %s14
      %p158 = scmp.lt.s32.totalorder %s157, 63
      %s159 = scalar_select %p158, %s157, 63
      %s160 = smul.addr %s159, 8
      %s161 = scalar_lea.vmem %s3, %s160
      %s162 = smul.u32 32, %s14
      %p163 = scmp.lt.s32.totalorder %s162, 63
      %s164 = scalar_select %p163, %s162, 63
      %s165 = smul.addr %s164, 4
      %s166 = scalar_lea.vmem %s0, %s165
      %s167 = smul.u32 32, %s14
      %s168 = smul.u32 32, %s14
      %p169 = scmp.lt.s32.totalorder %s168, 63
      %s170 = scalar_select %p169, %s168, 63
      %s171 = smul.addr %s170, 8
      %s172 = scalar_lea.vmem %s3, %s171
      %s173 = smul.u32 32, %s14
      %v174 = vld [vmem:[%s166] sm:$0xf]
      %v175 = vld [vmem:[%s166 + $0x4] sm:$0xf]
      %v176 = vld [vmem:[%s166 + $0x8] sm:$0xf]
      %v177 = vld [vmem:[%s166 + $0xc] sm:$0xf]
      %v178 = vld [vmem:[%s166 + $0x10] sm:$0xf]
      %v179 = vld [vmem:[%s166 + $0x14] sm:$0xf]
      %v180 = vld [vmem:[%s166 + $0x18] sm:$0xf]
      %v181 = vld [vmem:[%s166 + $0x1c] sm:$0xf]
      %v182 = vld [vmem:[%s166 + $0x20] sm:$0xf]
      %v183 = vld [vmem:[%s166 + $0x24] sm:$0xf]
      %v184 = vld [vmem:[%s166 + $0x28] sm:$0xf]
      %v185 = vld [vmem:[%s166 + $0x2c] sm:$0xf]
      %v186 = vld [vmem:[%s166 + $0x30] sm:$0xf]
      %v187 = vld [vmem:[%s166 + $0x34] sm:$0xf]
      %v188 = vld [vmem:[%s166 + $0x38] sm:$0xf]
      %v189 = vld [vmem:[%s166 + $0x3c] sm:$0xf]
      %v190 = vld [vmem:[%s166 + $0x40] sm:$0xf]
      %v191 = vld [vmem:[%s166 + $0x44] sm:$0xf]
      %v192 = vld [vmem:[%s166 + $0x48] sm:$0xf]
      %v193 = vld [vmem:[%s166 + $0x4c] sm:$0xf]
      %v194 = vld [vmem:[%s166 + $0x50] sm:$0xf]
      %v195 = vld [vmem:[%s166 + $0x54] sm:$0xf]
      %v196 = vld [vmem:[%s166 + $0x58] sm:$0xf]
      %v197 = vld [vmem:[%s166 + $0x5c] sm:$0xf]
      %v198 = vld [vmem:[%s166 + $0x60] sm:$0xf]
      %v199 = vld [vmem:[%s166 + $0x64] sm:$0xf]
      %v200 = vld [vmem:[%s166 + $0x68] sm:$0xf]
      %v201 = vld [vmem:[%s166 + $0x6c] sm:$0xf]
      %v202 = vld [vmem:[%s166 + $0x70] sm:$0xf]
      %v203 = vld [vmem:[%s166 + $0x74] sm:$0xf]
      %v204 = vld [vmem:[%s166 + $0x78] sm:$0xf]
      %v205 = vld [vmem:[%s166 + $0x7c] sm:$0xf]
      %v206 = vunpack.c.l.bf16 %v174
      %v207 = vunpack.c.l.bf16 %v175
      %v208 = vunpack.c.l.bf16 %v176
      %v209 = vunpack.c.l.bf16 %v177
      %v210 = vunpack.c.l.bf16 %v178
      %v211 = vunpack.c.l.bf16 %v179
      %v212 = vunpack.c.l.bf16 %v180
      %v213 = vunpack.c.l.bf16 %v181
      %v214 = vunpack.c.l.bf16 %v182
      %v215 = vunpack.c.l.bf16 %v183
      %v216 = vunpack.c.l.bf16 %v184
      %v217 = vunpack.c.l.bf16 %v185
      %v218 = vunpack.c.l.bf16 %v186
      %v219 = vunpack.c.l.bf16 %v187
      %v220 = vunpack.c.l.bf16 %v188
      %v221 = vunpack.c.l.bf16 %v189
      %v222 = vunpack.c.l.bf16 %v190
      %v223 = vunpack.c.l.bf16 %v191
      %v224 = vunpack.c.l.bf16 %v192
      %v225 = vunpack.c.l.bf16 %v193
      %v226 = vunpack.c.l.bf16 %v194
      %v227 = vunpack.c.l.bf16 %v195
      %v228 = vunpack.c.l.bf16 %v196
      %v229 = vunpack.c.l.bf16 %v197
      %v230 = vunpack.c.l.bf16 %v198
      %v231 = vunpack.c.l.bf16 %v199
      %v232 = vunpack.c.l.bf16 %v200
      %v233 = vunpack.c.l.bf16 %v201
      %v234 = vunpack.c.l.bf16 %v202
      %v235 = vunpack.c.l.bf16 %v203
      %v236 = vunpack.c.l.bf16 %v204
      %v237 = vunpack.c.l.bf16 %v205
      %v238 = vld [vmem:[%s1] sm:$0x1]
      %v240 = vlaneseq
      %v241 = vshrl.u32 %v240, 7
      %v242 = vsub.s32 0, %v241
      %v243 = vrot.slane %v238, %v242
      %v245 = vmul.f32 %v206, %v243
      %v246 = vmul.f32 %v207, %v243
      %v247 = vmul.f32 %v208, %v243
      %v248 = vmul.f32 %v209, %v243
      %v249 = vmul.f32 %v210, %v243
      %v250 = vmul.f32 %v211, %v243
      %v251 = vmul.f32 %v212, %v243
      %v252 = vmul.f32 %v213, %v243
      %v253 = vmul.f32 %v214, %v243
      %v254 = vmul.f32 %v215, %v243
      %v255 = vmul.f32 %v216, %v243
      %v256 = vmul.f32 %v217, %v243
      %v257 = vmul.f32 %v218, %v243
      %v258 = vmul.f32 %v219, %v243
      %v259 = vmul.f32 %v220, %v243
      %v260 = vmul.f32 %v221, %v243
      %v261 = vmul.f32 %v222, %v243
      %v262 = vmul.f32 %v223, %v243
      %v263 = vmul.f32 %v224, %v243
      %v264 = vmul.f32 %v225, %v243
      %v265 = vmul.f32 %v226, %v243
      %v266 = vmul.f32 %v227, %v243
      %v267 = vmul.f32 %v228, %v243
      %v268 = vmul.f32 %v229, %v243
      %v269 = vmul.f32 %v230, %v243
      %v270 = vmul.f32 %v231, %v243
      %v271 = vmul.f32 %v232, %v243
      %v272 = vmul.f32 %v233, %v243
      %v273 = vmul.f32 %v234, %v243
      %v274 = vmul.f32 %v235, %v243
      %v275 = vmul.f32 %v236, %v243
      %v276 = vmul.f32 %v237, %v243
      %v277 = vld [vmem:[%s2] sm:$0x1]
      %v279 = vlaneseq
      %v280 = vshrl.u32 %v279, 7
      %v281 = vsub.s32 0, %v280
      %v282 = vrot.slane %v277, %v281
      %v284 = vadd.f32 %v245, %v282
      %v285 = vadd.f32 %v246, %v282
      %v286 = vadd.f32 %v247, %v282
      %v287 = vadd.f32 %v248, %v282
      %v288 = vadd.f32 %v249, %v282
      %v289 = vadd.f32 %v250, %v282
      %v290 = vadd.f32 %v251, %v282
      %v291 = vadd.f32 %v252, %v282
      %v292 = vadd.f32 %v253, %v282
      %v293 = vadd.f32 %v254, %v282
      %v294 = vadd.f32 %v255, %v282
      %v295 = vadd.f32 %v256, %v282
      %v296 = vadd.f32 %v257, %v282
      %v297 = vadd.f32 %v258, %v282
      %v298 = vadd.f32 %v259, %v282
      %v299 = vadd.f32 %v260, %v282
      %v300 = vadd.f32 %v261, %v282
      %v301 = vadd.f32 %v262, %v282
      %v302 = vadd.f32 %v263, %v282
      %v303 = vadd.f32 %v264, %v282
      %v304 = vadd.f32 %v265, %v282
      %v305 = vadd.f32 %v266, %v282
      %v306 = vadd.f32 %v267, %v282
      %v307 = vadd.f32 %v268, %v282
      %v308 = vadd.f32 %v269, %v282
      %v309 = vadd.f32 %v270, %v282
      %v310 = vadd.f32 %v271, %v282
      %v311 = vadd.f32 %v272, %v282
      %v312 = vadd.f32 %v273, %v282
      %v313 = vadd.f32 %v274, %v282
      %v314 = vadd.f32 %v275, %v282
      %v315 = vadd.f32 %v276, %v282
      %v316 = vmax.f32 %v284, 0.0
      %v317 = vmax.f32 %v285, 0.0
      %v318 = vmax.f32 %v286, 0.0
      %v319 = vmax.f32 %v287, 0.0
      %v320 = vmax.f32 %v288, 0.0
      %v321 = vmax.f32 %v289, 0.0
      %v322 = vmax.f32 %v290, 0.0
      %v323 = vmax.f32 %v291, 0.0
      %v324 = vmax.f32 %v292, 0.0
      %v325 = vmax.f32 %v293, 0.0
      %v326 = vmax.f32 %v294, 0.0
      %v327 = vmax.f32 %v295, 0.0
      %v328 = vmax.f32 %v296, 0.0
      %v329 = vmax.f32 %v297, 0.0
      %v330 = vmax.f32 %v298, 0.0
      %v331 = vmax.f32 %v299, 0.0
      %v332 = vmax.f32 %v300, 0.0
      %v333 = vmax.f32 %v301, 0.0
      %v334 = vmax.f32 %v302, 0.0
      %v335 = vmax.f32 %v303, 0.0
      %v336 = vmax.f32 %v304, 0.0
      %v337 = vmax.f32 %v305, 0.0
      %v338 = vmax.f32 %v306, 0.0
      %v339 = vmax.f32 %v307, 0.0
      %v340 = vmax.f32 %v308, 0.0
      %v341 = vmax.f32 %v309, 0.0
      %v342 = vmax.f32 %v310, 0.0
      %v343 = vmax.f32 %v311, 0.0
      %v344 = vmax.f32 %v312, 0.0
      %v345 = vmax.f32 %v313, 0.0
      %v346 = vmax.f32 %v314, 0.0
      %v347 = vmax.f32 %v315, 0.0
      %348 = vst [vmem:[%s172] sm:$0xff] %v316
      %349 = vst [vmem:[%s172 + $0x8] sm:$0xff] %v317
      %350 = vst [vmem:[%s172 + $0x10] sm:$0xff] %v318
      %351 = vst [vmem:[%s172 + $0x18] sm:$0xff] %v319
      %352 = vst [vmem:[%s172 + $0x20] sm:$0xff] %v320
      %353 = vst [vmem:[%s172 + $0x28] sm:$0xff] %v321
      %354 = vst [vmem:[%s172 + $0x30] sm:$0xff] %v322
      %355 = vst [vmem:[%s172 + $0x38] sm:$0xff] %v323
      %356 = vst [vmem:[%s172 + $0x40] sm:$0xff] %v324
      %357 = vst [vmem:[%s172 + $0x48] sm:$0xff] %v325
      %358 = vst [vmem:[%s172 + $0x50] sm:$0xff] %v326
      %359 = vst [vmem:[%s172 + $0x58] sm:$0xff] %v327
      %360 = vst [vmem:[%s172 + $0x60] sm:$0xff] %v328
      %361 = vst [vmem:[%s172 + $0x68] sm:$0xff] %v329
      %362 = vst [vmem:[%s172 + $0x70] sm:$0xff] %v330
      %363 = vst [vmem:[%s172 + $0x78] sm:$0xff] %v331
      %364 = vst [vmem:[%s172 + $0x80] sm:$0xff] %v332
      %365 = vst [vmem:[%s172 + $0x88] sm:$0xff] %v333
      %366 = vst [vmem:[%s172 + $0x90] sm:$0xff] %v334
      %367 = vst [vmem:[%s172 + $0x98] sm:$0xff] %v335
      %368 = vst [vmem:[%s172 + $0xa0] sm:$0xff] %v336
      %369 = vst [vmem:[%s172 + $0xa8] sm:$0xff] %v337
      %370 = vst [vmem:[%s172 + $0xb0] sm:$0xff] %v338
      %371 = vst [vmem:[%s172 + $0xb8] sm:$0xff] %v339
      %372 = vst [vmem:[%s172 + $0xc0] sm:$0xff] %v340
      %373 = vst [vmem:[%s172 + $0xc8] sm:$0xff] %v341
      %374 = vst [vmem:[%s172 + $0xd0] sm:$0xff] %v342
      %375 = vst [vmem:[%s172 + $0xd8] sm:$0xff] %v343
      %376 = vst [vmem:[%s172 + $0xe0] sm:$0xff] %v344
      %377 = vst [vmem:[%s172 + $0xe8] sm:$0xff] %v345
      %378 = vst [vmem:[%s172 + $0xf0] sm:$0xff] %v346
      %379 = vst [vmem:[%s172 + $0xf8] sm:$0xff] %v347
      %s380 = smul.u32 32, %s14
      %p381 = scmp.lt.s32.totalorder %s380, 63
      %s382 = scalar_select %p381, %s380, 63
      %s383 = smul.addr %s382, 8
      %s384 = scalar_lea.vmem %s3, %s383
      // Predicated region
      $region33: #{double_conv.7} parent=31 // pred_check
        %p385 = pneg %p100
      $region34: #{double_conv.7} parent=31 // pred_check_branch
        %387 = sbr.rel (%p385) target = $region36
      $region35: #{double_conv.7} parent=31 // pred_region
        %s388 = smul.u32 32, %s14
      $region36: #{double_conv.7} parent=31 // pred_fallthru
        _
    $region32: #{double_conv.7} parent=5 // pred_fallthru
      _
    %p389 = scmp.le.s32.totalorder 2, %s9
    // Predicated region
    $region37: #{double_conv.7} parent=5 // pred_check
      %p390 = pneg %p389
    $region38: #{double_conv.7} parent=5 // pred_check_branch
      %392 = sbr.rel (%p390) target = $region40
    $region39: #{double_conv.7} parent=5 // pred_region
      %s393 = ssub.s32 %s9, 2
      // Predicated region
      $region41: #{double_conv.7} parent=39 // pred_check
        %p394 = pneg %p106
      $region42: #{double_conv.7} parent=39 // pred_check_branch
        %396 = sbr.rel (%p394) target = $region44
      $region43: #{double_conv.7} parent=39 // pred_region
        %s397 = smul.u32 32, %s15
        %p398 = scmp.lt.s32.totalorder %s397, 63
        %s399 = scalar_select %p398, %s397, 63
        %s400 = smul.addr %s399, 8
        %s401 = scalar_lea.vmem %s3, %s400
      $region44: #{double_conv.7} parent=39 // pred_fallthru
        _
    $region40: #{double_conv.7} parent=5 // pred_fallthru
      _
  $region6: #{double_conv.7} parent=0 // loop_footer
    %s13 = sadd.s32 1, %s9
  $region7: #{double_conv.7} parent=0 // loop_footer_branch
    %8 = sbr.rel target = $region3
  $region8: #{double_conv.7} parent=0 // loop_exit
    _

// kernel: double_conv.6
$region0: #{double_conv.6}
  #allocation0 [shape = 'u32[]', space=smem, size = 0x4, offset = 0x4, fixed_abs, tag = 'smem constant byte address 0x4 - core index']
  #allocation1 [shape = 'u32[144,128]{1,0:T(1,128)}', space=vmem, size = 0x12000, scoped, tag = 'internal scratch']
  %s0 = inlined_call_operand.vmem [shape: bf16[2,288,24], index: 0, kind: input, shape index: {}]
  %s1 = inlined_call_operand.vmem [shape: bf16[3,24,128], index: 1, kind: input, shape index: {}]
  %s2 = inlined_call_operand.vmem [shape: f32[1,128], index: 2, kind: input, shape index: {}]
  %s3 = inlined_call_operand.vmem [shape: bf16[512,128], index: 3, kind: output, shape index: {0}]
  %s4 = inlined_call_operand.vmem [shape: f32[2,2,128], index: 4, kind: output, shape index: {1}]
  %5 = xla_tuple %s3, %s4
  %s6 = sld [smem:[#allocation0]]
  $region53: #{double_conv.6} parent=0
    _
  %s8 = ssub.s32 1, %s6
  %s9 = scalar_select 0, %s8, %s6
  loop: start=0, step=1, limit=4
  $region2: #{double_conv.6} parent=0 // loop_pre_header
    _
  $region3: #{double_conv.6} parent=0 // loop_header
    %s11 = sphi 0, %s15
    %p12 = scmp.ge.s32.totalorder %s11, 4
    %s21 = sphi 0, %s23
    %s24 = sphi 0, %s21
    %s25 = sphi 0, %s24
    %s41 = sphi 0, %s25
    %s45 = sphi 0, %s45
    %s47 = sphi 0, %s45
    %s48 = sphi 0, %s47
    %s62 = sphi 0, %s48
    %s66 = sphi 0, %s66
    %s68 = sphi 0, %s66
    %s69 = sphi 0, %s68
    %s83 = sphi 0, %s69
    %s89 = sphi 0, %s91
    %s92 = sphi 0, %s89
    %s93 = sphi 0, %s92
    %s109 = sphi 0, %s93
    %s115 = sphi 0, %s117
    %s118 = sphi 0, %s115
    %s119 = sphi 0, %s118
    %s135 = sphi 0, %s119
  $region4: #{double_conv.6} parent=0 // loop_header_branch
    %14 = sbr.rel (%p12) target = $region8
  $region5: #{double_conv.6} parent=0 // loop_body
    %s16 = ssub.s32 %s11, 1
    %s17 = ssub.s32 %s11, 2
    %s18 = sadd.s32 %s11, 1
    %s19 = ssub.s32 %s11, %s18
    %p20 = scmp.eq.s32.totalorder %s19, 0
    %s22 = sadd.s32 %s21, 1
    %s23 = scalar_select %p20, %s21, %s22
    %p26 = pneg %p20
    %p27 = scmp.eq.s32.totalorder %s11, 1
    %p28 = por %p26, %p27
    %p29 = scmp.ne.s32.totalorder %s21, %s24
    %p30 = scmp.eq.s32.totalorder %s11, 0
    %p31 = por %p29, %p30
    %p32 = scmp.ne.s32.totalorder %s21, %s24
    %p33 = scmp.eq.s32.totalorder %s16, 1
    %p34 = por %p32, %p33
    %p35 = scmp.ne.s32.totalorder %s24, %s25
    %p36 = scmp.eq.s32.totalorder %s16, 0
    %p37 = por %p35, %p36
    %p38 = scmp.ne.s32.totalorder %s24, %s25
    %p39 = scmp.eq.s32.totalorder %s17, 1
    %p40 = por %p38, %p39
    %p42 = scmp.ne.s32.totalorder %s25, %s41
    %p43 = scmp.eq.s32.totalorder %s17, 0
    %p44 = por %p42, %p43
    %s46 = sadd.s32 %s45, 1
    %p49 = scmp.eq.s32.totalorder %s11, 1
    %p50 = scmp.ne.s32.totalorder %s45, %s47
    %p51 = scmp.eq.s32.totalorder %s11, 0
    %p52 = por %p50, %p51
    %p53 = scmp.ne.s32.totalorder %s45, %s47
    %p54 = scmp.eq.s32.totalorder %s16, 1
    %p55 = por %p53, %p54
    %p56 = scmp.ne.s32.totalorder %s47, %s48
    %p57 = scmp.eq.s32.totalorder %s16, 0
    %p58 = por %p56, %p57
    %p59 = scmp.ne.s32.totalorder %s47, %s48
    %p60 = scmp.eq.s32.totalorder %s17, 1
    %p61 = por %p59, %p60
    %p63 = scmp.ne.s32.totalorder %s48, %s62
    %p64 = scmp.eq.s32.totalorder %s17, 0
    %p65 = por %p63, %p64
    %s67 = sadd.s32 %s66, 1
    %p70 = scmp.eq.s32.totalorder %s11, 1
    %p71 = scmp.ne.s32.totalorder %s66, %s68
    %p72 = scmp.eq.s32.totalorder %s11, 0
    %p73 = por %p71, %p72
    %p74 = scmp.ne.s32.totalorder %s66, %s68
    %p75 = scmp.eq.s32.totalorder %s16, 1
    %p76 = por %p74, %p75
    %p77 = scmp.ne.s32.totalorder %s68, %s69
    %p78 = scmp.eq.s32.totalorder %s16, 0
    %p79 = por %p77, %p78
    %p80 = scmp.ne.s32.totalorder %s68, %s69
    %p81 = scmp.eq.s32.totalorder %s17, 1
    %p82 = por %p80, %p81
    %p84 = scmp.ne.s32.totalorder %s69, %s83
    %p85 = scmp.eq.s32.totalorder %s17, 0
    %p86 = por %p84, %p85
    %s87 = ssub.s32 %s11, %s18
    %p88 = scmp.eq.s32.totalorder %s87, 0
    %s90 = sadd.s32 %s89, 1
    %s91 = scalar_select %p88, %s89, %s90
    %p94 = pneg %p88
    %p95 = scmp.eq.s32.totalorder %s11, 1
    %p96 = por %p94, %p95
    %p97 = scmp.ne.s32.totalorder %s89, %s92
    %p98 = scmp.eq.s32.totalorder %s11, 0
    %p99 = por %p97, %p98
    %p100 = scmp.ne.s32.totalorder %s89, %s92
    %p101 = scmp.eq.s32.totalorder %s16, 1
    %p102 = por %p100, %p101
    %p103 = scmp.ne.s32.totalorder %s92, %s93
    %p104 = scmp.eq.s32.totalorder %s16, 0
    %p105 = por %p103, %p104
    %p106 = scmp.ne.s32.totalorder %s92, %s93
    %p107 = scmp.eq.s32.totalorder %s17, 1
    %p108 = por %p106, %p107
    %p110 = scmp.ne.s32.totalorder %s93, %s109
    %p111 = scmp.eq.s32.totalorder %s17, 0
    %p112 = por %p110, %p111
    %s113 = ssub.s32 %s11, %s18
    %p114 = scmp.eq.s32.totalorder %s113, 0
    %s116 = sadd.s32 %s115, 1
    %s117 = scalar_select %p114, %s115, %s116
    %p120 = pneg %p114
    %p121 = scmp.eq.s32.totalorder %s11, 1
    %p122 = por %p120, %p121
    %p123 = scmp.ne.s32.totalorder %s115, %s118
    %p124 = scmp.eq.s32.totalorder %s11, 0
    %p125 = por %p123, %p124
    %p126 = scmp.ne.s32.totalorder %s115, %s118
    %p127 = scmp.eq.s32.totalorder %s16, 1
    %p128 = por %p126, %p127
    %p129 = scmp.ne.s32.totalorder %s118, %s119
    %p130 = scmp.eq.s32.totalorder %s16, 0
    %p131 = por %p129, %p130
    %p132 = scmp.ne.s32.totalorder %s118, %s119
    %p133 = scmp.eq.s32.totalorder %s17, 1
    %p134 = por %p132, %p133
    %p136 = scmp.ne.s32.totalorder %s119, %s135
    %p137 = scmp.eq.s32.totalorder %s17, 0
    %p138 = por %p136, %p137
    %p139 = scmp.le.s32.totalorder 1, %s11
    %p140 = scmp.lt.s32.totalorder %s11, 3
    %p141 = pnand %p139, %p140
    %p142 = pneg %p141
    // Predicated region
    $region9: #{double_conv.6} parent=5 // pred_check
      _
    $region10: #{double_conv.6} parent=5 // pred_check_branch
      %144 = sbr.rel (%p141) target = $region12
    $region11: #{double_conv.6} parent=5 // pred_region
      %s145 = ssub.s32 %s11, 1
      // Predicated region
      $region13: #{double_conv.6} parent=11 // pred_check
        %p146 = pneg %p58
      $region14: #{double_conv.6} parent=11 // pred_check_branch
        %148 = sbr.rel (%p146) target = $region16
      $region15: #{double_conv.6} parent=11 // pred_region
        _
      $region16: #{double_conv.6} parent=11 // pred_fallthru
        _
      // Predicated region
      $region17: #{double_conv.6} parent=11 // pred_check
        %p149 = pneg %p79
      $region18: #{double_conv.6} parent=11 // pred_check_branch
        %151 = sbr.rel (%p149) target = $region20
      $region19: #{double_conv.6} parent=11 // pred_region
        _
      $region20: #{double_conv.6} parent=11 // pred_fallthru
        _
    $region12: #{double_conv.6} parent=5 // pred_fallthru
      _
    %p152 = scmp.lt.s32.totalorder %s11, 2
    // Predicated region
    $region21: #{double_conv.6} parent=5 // pred_check
      %p153 = pneg %p152
    $region22: #{double_conv.6} parent=5 // pred_check_branch
      %155 = sbr.rel (%p153) target = $region24
    $region23: #{double_conv.6} parent=5 // pred_region
      // Predicated region
      $region25: #{double_conv.6} parent=23 // pred_check
        %p156 = pneg %p31
      $region26: #{double_conv.6} parent=23 // pred_check_branch
        %158 = sbr.rel (%p156) target = $region28
      $region27: #{double_conv.6} parent=23 // pred_region
        %p159 = scmp.lt.s32.totalorder %s11, 1
        %s160 = scalar_select %p159, %s11, 1
        %s161 = smul.addr %s160, 36
        %s162 = smul.addr %s161, 4
        %s163 = scalar_lea.vmem %s0, %s162
      $region28: #{double_conv.6} parent=23 // pred_fallthru
        _
    $region24: #{double_conv.6} parent=5 // pred_fallthru
      _
    %p164 = scmp.le.s32.totalorder 1, %s11
    %p165 = scmp.lt.s32.totalorder %s11, 3
    %p166 = pnand %p164, %p165
    %p167 = pneg %p166
    // Predicated region
    $region29: #{double_conv.6} parent=5 // pred_check
      _
    $region30: #{double_conv.6} parent=5 // pred_check_branch
      %169 = sbr.rel (%p166) target = $region32
    $region31: #{double_conv.6} parent=5 // pred_region
      %s170 = ssub.s32 %s11, 1
      %p171 = scmp.lt.s32.totalorder %s16, 1
      %s172 = scalar_select %p171, %s16, 1
      %s173 = smul.addr %s172, 36
      %s174 = smul.addr %s173, 4
      %s175 = scalar_lea.vmem %s0, %s174
      %p176 = pneg %p37
      %p177 = pneg %p34
      %p178 = pneg %p58
      %p179 = pneg %p55
      %p180 = pneg %p79
      %p181 = pneg %p76
      %p182 = pneg %p105
      %p183 = pneg %p102
      %s184 = smul.u32 32, %s16
      %p185 = scmp.lt.s32.totalorder %s184, 63
      %s186 = scalar_select %p185, %s184, 63
      %s187 = smul.addr %s186, 4
      %s188 = scalar_lea.vmem %s3, %s187
      %p189 = pneg %p131
      %p190 = pneg %p128
      %p191 = scmp.lt.s32.totalorder %s16, 1
      %s192 = scalar_select %p191, %s16, 1
      %s193 = smul.addr %s192, 2
      %s194 = scalar_lea.vmem %s4, %s193
      %p195 = scmp.lt.s32.totalorder %s16, 1
      %s196 = scalar_select %p195, %s16, 1
      %s197 = smul.addr %s196, 36
      %s198 = smul.addr %s197, 4
      %s199 = scalar_lea.vmem %s0, %s198
      %s200 = smul.u32 32, %s16
      %p201 = scmp.lt.s32.totalorder %s200, 63
      %s202 = scalar_select %p201, %s200, 63
      %s203 = smul.addr %s202, 4
      %s204 = scalar_lea.vmem %s3, %s203
      %s205 = smul.u32 32, %s16
      %p206 = scmp.lt.s32.totalorder %s16, 1
      %s207 = scalar_select %p206, %s16, 1
      %s208 = smul.addr %s207, 2
      %s209 = scalar_lea.vmem %s4, %s208
      %v211 = vld [vmem:[%s199] sm:$0xf]
      %v212 = vld [vmem:[%s199 + $0x4] sm:$0xf]
      %v213 = vld [vmem:[%s199 + $0x8] sm:$0xf]
      %v214 = vld [vmem:[%s199 + $0xc] sm:$0xf]
      %v215 = vld [vmem:[%s199 + $0x10] sm:$0xf]
      %v216 = vld [vmem:[%s199 + $0x14] sm:$0xf]
      %v217 = vld [vmem:[%s199 + $0x18] sm:$0xf]
      %v218 = vld [vmem:[%s199 + $0x1c] sm:$0xf]
      %v219 = vld [vmem:[%s199 + $0x20] sm:$0xf]
      %v220 = vld [vmem:[%s199 + $0x24] sm:$0xf]
      %v221 = vld [vmem:[%s199 + $0x28] sm:$0xf]
      %v222 = vld [vmem:[%s199 + $0x2c] sm:$0xf]
      %v223 = vld [vmem:[%s199 + $0x30] sm:$0xf]
      %v224 = vld [vmem:[%s199 + $0x34] sm:$0xf]
      %v225 = vld [vmem:[%s199 + $0x38] sm:$0xf]
      %v226 = vld [vmem:[%s199 + $0x3c] sm:$0xf]
      %v227 = vld [vmem:[%s199 + $0x40] sm:$0xf]
      %v228 = vld [vmem:[%s199 + $0x44] sm:$0xf]
      %v229 = vld [vmem:[%s199 + $0x48] sm:$0xf]
      %v230 = vld [vmem:[%s199 + $0x4c] sm:$0xf]
      %v231 = vld [vmem:[%s199 + $0x50] sm:$0xf]
      %v232 = vld [vmem:[%s199 + $0x54] sm:$0xf]
      %v233 = vld [vmem:[%s199 + $0x58] sm:$0xf]
      %v234 = vld [vmem:[%s199 + $0x5c] sm:$0xf]
      %v235 = vld [vmem:[%s199 + $0x60] sm:$0xf]
      %v236 = vld [vmem:[%s199 + $0x64] sm:$0xf]
      %v237 = vld [vmem:[%s199 + $0x68] sm:$0xf]
      %v238 = vld [vmem:[%s199 + $0x6c] sm:$0xf]
      %v239 = vld [vmem:[%s199 + $0x70] sm:$0xf]
      %v240 = vld [vmem:[%s199 + $0x74] sm:$0xf]
      %v241 = vld [vmem:[%s199 + $0x78] sm:$0xf]
      %v242 = vld [vmem:[%s199 + $0x7c] sm:$0xf]
      %v243 = vld [vmem:[%s1] sm:$0xf]
      %v244 = vld [vmem:[%s1 + $0x4] sm:$0xf]
      %v245 = vld [vmem:[%s1 + $0x8] sm:$0xf]
      %v246 = vld [vmem:[%s199 + $0x80] sm:$0xf]
      %v247 = vld [vmem:[%s199 + $0x84] sm:$0xf]
      %s248 = scalar_lea.vmem %s1, 12
      %v249 = vld [vmem:[%s248] sm:$0xf]
      %v250 = vld [vmem:[%s248 + $0x4] sm:$0xf]
      %v251 = vld [vmem:[%s248 + $0x8] sm:$0xf]
      %v284 = vunpack.c.l.b16 %v213
      %v285 = vunpack.c.l.b16 %v214
      %v286 = vunpack.c.l.b16 %v215
      %v287 = vunpack.c.l.b16 %v216
      %v288 = vunpack.c.l.b16 %v217
      %v289 = vunpack.c.l.b16 %v218
      %v290 = vunpack.c.l.b16 %v219
      %v291 = vunpack.c.l.b16 %v220
      %v292 = vunpack.c.l.b16 %v221
      %v293 = vunpack.c.l.b16 %v222
      %v294 = vunpack.c.l.b16 %v223
      %v295 = vunpack.c.l.b16 %v224
      %v296 = vunpack.c.l.b16 %v225
      %v297 = vunpack.c.l.b16 %v226
      %v298 = vunpack.c.l.b16 %v227
      %v299 = vunpack.c.l.b16 %v228
      %v300 = vunpack.c.l.b16 %v229
      %v301 = vunpack.c.l.b16 %v230
      %v302 = vunpack.c.l.b16 %v231
      %v303 = vunpack.c.l.b16 %v232
      %v304 = vunpack.c.l.b16 %v233
      %v305 = vunpack.c.l.b16 %v234
      %v306 = vunpack.c.l.b16 %v235
      %v307 = vunpack.c.l.b16 %v236
      %v308 = vunpack.c.l.b16 %v237
      %v309 = vunpack.c.l.b16 %v238
      %v310 = vunpack.c.l.b16 %v239
      %v311 = vunpack.c.l.b16 %v240
      %v312 = vunpack.c.l.b16 %v241
      %v313 = vunpack.c.l.b16 %v242
      %v314 = vunpack.c.l.b16 %v246
      %v315 = vunpack.c.l.b16 %v247
      %v316 = vpack.c.b16 %v285, %v284
      %v317 = vpack.c.b16 %v287, %v286
      %v318 = vpack.c.b16 %v289, %v288
      %v319 = vpack.c.b16 %v291, %v290
      %v320 = vpack.c.b16 %v293, %v292
      %v321 = vpack.c.b16 %v295, %v294
      %v322 = vpack.c.b16 %v297, %v296
      %v323 = vpack.c.b16 %v299, %v298
      %v324 = vpack.c.b16 %v301, %v300
      %v325 = vpack.c.b16 %v303, %v302
      %v326 = vpack.c.b16 %v305, %v304
      %v327 = vpack.c.b16 %v307, %v306
      %v328 = vpack.c.b16 %v309, %v308
      %v329 = vpack.c.b16 %v311, %v310
      %v330 = vpack.c.b16 %v313, %v312
      %v331 = vpack.c.b16 %v315, %v314
      %v335 = vunpack.c.l.b16 %v249
      %v336 = vunpack.c.l.b16 %v250
      %v337 = vunpack.c.l.b16 %v251
      %v338 = vpack.c.b16 %v336, %v335
      %v339 = vpack.c.b16 %v337, %v337
      %vm341 = vcmask 195584
      %v343 = vsel %vm341, %v316, 0
      %v346 = vsel %vm341, %v317, 0
      %v349 = vsel %vm341, %v318, 0
      %v352 = vsel %vm341, %v319, 0
      %v355 = vsel %vm341, %v320, 0
      %v358 = vsel %vm341, %v321, 0
      %v361 = vsel %vm341, %v322, 0
      %v364 = vsel %vm341, %v323, 0
      %v367 = vsel %vm341, %v324, 0
      %v370 = vsel %vm341, %v325, 0
      %v373 = vsel %vm341, %v326, 0
      %v376 = vsel %vm341, %v327, 0
      %v379 = vsel %vm341, %v328, 0
      %v382 = vsel %vm341, %v329, 0
      %v385 = vsel %vm341, %v330, 0
      %v388 = vsel %vm341, %v331, 0
      %vm390 = vcmask 1043456
      %v392 = vsel %vm390, %v339, 0
      %394 = vmatprep.subr.bf16.mxu0 0
      %395 = vmatpush1.bf16.msra.mxu0 %v338
      %396 = vmatprep.subr.bf16.mxu0 0
      %397 = vmatpush1.bf16.msra.mxu0 %v392
      %398 = vmatprep.subr.bf16.mxu0 0
      %399 = vmatpush1.bf16.msra.mxu0 0
      %400 = vmatprep.subr.bf16.mxu0 0
      %401 = vmatpush1.bf16.msra.mxu0 0
      %402 = vmatprep.subr.bf16.mxu0 0
      %403 = vmatpush1.bf16.msra.mxu0 0
      %404 = vmatprep.subr.bf16.mxu0 0
      %405 = vmatpush1.bf16.msra.mxu0 0
      %406 = vmatprep.subr.bf16.mxu0 0
      %407 = vmatpush1.bf16.msra.mxu0 0
      %408 = vmatprep.subr.bf16.mxu0 0
      %409 = vmatpush1.bf16.msra.mxu0 0
      %410 = vmatprep.subr.bf16.mxu0 0
      %411 = vmatpush1.bf16.msra.mxu0 0
      %412 = vmatprep.subr.bf16.mxu0 0
      %413 = vmatpush1.bf16.msra.mxu0 0
      %414 = vmatprep.subr.bf16.mxu0 0
      %415 = vmatpush1.bf16.msra.mxu0 0
      %416 = vmatprep.subr.bf16.mxu0 0
      %417 = vmatpush1.bf16.msra.mxu0 0
      %418 = vmatprep.subr.bf16.mxu0 0
      %419 = vmatpush1.bf16.msra.mxu0 0
      %420 = vmatprep.subr.bf16.mxu0 0
      %421 = vmatpush1.bf16.msra.mxu0 0
      %422 = vmatprep.subr.bf16.mxu0 0
      %423 = vmatpush1.bf16.msra.mxu0 0
      %424 = vmatprep.subr.bf16.mxu0 0
      %425 = vmatpush1.bf16.msra.mxu0 0
      %426 = vmatprep.mubr.bf16.mxu0 0
      %427 = vmatmul.mubr.bf16.gmra.mrb[0].mxu0 %v343
      %v428 = vpop.f32.mrb[0].mxu0
      %v429 = vadd.f32 0.0, %v428
      %v430 = vpop.f32.mrb[0].mxu0
      %v431 = vpop.f32.mrb[0].mxu0
      %v432 = vadd.f32 0.0, %v431
      %v433 = vpop.f32.mrb[0].mxu0
      %434 = vmatprep.mubr.bf16.mxu0 0
      %435 = vmatmul.mubr.bf16.gmra.mrb[0].mxu0 %v346
      %v436 = vpop.f32.mrb[0].mxu0
      %v437 = vadd.f32 0.0, %v436
      %v438 = vpop.f32.mrb[0].mxu0
      %v439 = vpop.f32.mrb[0].mxu0
      %v440 = vadd.f32 0.0, %v439
      %v441 = vpop.f32.mrb[0].mxu0
      %442 = vmatprep.mubr.bf16.mxu0 0
      %443 = vmatmul.mubr.bf16.gmra.mrb[0].mxu0 %v349
      %v444 = vpop.f32.mrb[0].mxu0
      %v445 = vadd.f32 0.0, %v444
      %v446 = vpop.f32.mrb[0].mxu0
      %v447 = vpop.f32.mrb[0].mxu0
      %v448 = vadd.f32 0.0, %v447
      %v449 = vpop.f32.mrb[0].mxu0
      %450 = vmatprep.mubr.bf16.mxu0 0
      %451 = vmatmul.mubr.bf16.gmra.mrb[0].mxu0 %v352
      %v452 = vpop.f32.mrb[0].mxu0
      %v453 = vadd.f32 0.0, %v452
      %v454 = vpop.f32.mrb[0].mxu0
      %v455 = vpop.f32.mrb[0].mxu0
      %v456 = vadd.f32 0.0, %v455
      %v457 = vpop.f32.mrb[0].mxu0
      %458 = vmatprep.mubr.bf16.mxu0 0
      %459 = vmatmul.mubr.bf16.gmra.mrb[0].mxu0 %v355
      %v460 = vpop.f32.mrb[0].mxu0
      %v461 = vadd.f32 0.0, %v460
      %v462 = vpop.f32.mrb[0].mxu0
      %v463 = vpop.f32.mrb[0].mxu0
      %v464 = vadd.f32 0.0, %v463
      %v465 = vpop.f32.mrb[0].mxu0
      %466 = vmatprep.mubr.bf16.mxu0 0
      %467 = vmatmul.mubr.bf16.gmra.mrb[0].mxu0 %v358
      %v468 = vpop.f32.mrb[0].mxu0
      %v469 = vadd.f32 0.0, %v468
      %v470 = vpop.f32.mrb[0].mxu0
      %v471 = vpop.f32.mrb[0].mxu0
      %v472 = vadd.f32 0.0, %v471
      %v473 = vpop.f32.mrb[0].mxu0
      %474 = vmatprep.mubr.bf16.mxu0 0
      %475 = vmatmul.mubr.bf16.gmra.mrb[0].mxu0 %v361
      %v476 = vpop.f32.mrb[0].mxu0
      %v477 = vadd.f32 0.0, %v476
      %v478 = vpop.f32.mrb[0].mxu0
      %v479 = vpop.f32.mrb[0].mxu0
      %v480 = vadd.f32 0.0, %v479
      %v481 = vpop.f32.mrb[0].mxu0
      %482 = vmatprep.mubr.bf16.mxu0 0
      %483 = vmatmul.mubr.bf16.gmra.mrb[0].mxu0 %v364
      %v484 = vpop.f32.mrb[0].mxu0
      %v485 = vadd.f32 0.0, %v484
      %v486 = vpop.f32.mrb[0].mxu0
      %v487 = vpop.f32.mrb[0].mxu0
      %v488 = vadd.f32 0.0, %v487
      %v489 = vpop.f32.mrb[0].mxu0
      %490 = vmatprep.mubr.bf16.mxu0 0
      %491 = vmatmul.mubr.bf16.gmra.mrb[0].mxu0 %v367
      %v492 = vpop.f32.mrb[0].mxu0
      %v493 = vadd.f32 0.0, %v492
      %v494 = vpop.f32.mrb[0].mxu0
      %v495 = vpop.f32.mrb[0].mxu0
      %v496 = vadd.f32 0.0, %v495
      %v497 = vpop.f32.mrb[0].mxu0
      %498 = vmatprep.mubr.bf16.mxu0 0
      %499 = vmatmul.mubr.bf16.gmra.mrb[0].mxu0 %v370
      %v500 = vpop.f32.mrb[0].mxu0
      %v501 = vadd.f32 0.0, %v500
      %v502 = vpop.f32.mrb[0].mxu0
      %v503 = vpop.f32.mrb[0].mxu0
      %v504 = vadd.f32 0.0, %v503
      %v505 = vpop.f32.mrb[0].mxu0
      %506 = vmatprep.mubr.bf16.mxu0 0
      %507 = vmatmul.mubr.bf16.gmra.mrb[0].mxu0 %v373
      %v508 = vpop.f32.mrb[0].mxu0
      %v509 = vadd.f32 0.0, %v508
      %v510 = vpop.f32.mrb[0].mxu0
      %v511 = vpop.f32.mrb[0].mxu0
      %v512 = vadd.f32 0.0, %v511
      %v513 = vpop.f32.mrb[0].mxu0
      %514 = vmatprep.mubr.bf16.mxu0 0
      %515 = vmatmul.mubr.bf16.gmra.mrb[0].mxu0 %v376
      %v516 = vpop.f32.mrb[0].mxu0
      %v517 = vadd.f32 0.0, %v516
      %v518 = vpop.f32.mrb[0].mxu0
      %v519 = vpop.f32.mrb[0].mxu0
      %v520 = vadd.f32 0.0, %v519
      %v521 = vpop.f32.mrb[0].mxu0
      %522 = vmatprep.mubr.bf16.mxu0 0
      %523 = vmatmul.mubr.bf16.gmra.mrb[0].mxu0 %v379
      %v524 = vpop.f32.mrb[0].mxu0
      %v525 = vadd.f32 0.0, %v524
      %v526 = vpop.f32.mrb[0].mxu0
      %v527 = vpop.f32.mrb[0].mxu0
      %v528 = vadd.f32 0.0, %v527
      %v529 = vpop.f32.mrb[0].mxu0
      %530 = vmatprep.mubr.bf16.mxu0 0
      %531 = vmatmul.mubr.bf16.gmra.mrb[0].mxu0 %v382
      %v532 = vpop.f32.mrb[0].mxu0
      %v533 = vadd.f32 0.0, %v532
      %v534 = vpop.f32.mrb[0].mxu0
      %v535 = vpop.f32.mrb[0].mxu0
      %v536 = vadd.f32 0.0, %v535
      %v537 = vpop.f32.mrb[0].mxu0
      %538 = vmatprep.mubr.bf16.mxu0 0
      %539 = vmatmul.mubr.bf16.gmra.mrb[0].mxu0 %v385
      %v540 = vpop.f32.mrb[0].mxu0
      %v541 = vadd.f32 0.0, %v540
      %v542 = vpop.f32.mrb[0].mxu0
      %v543 = vpop.f32.mrb[0].mxu0
      %v544 = vadd.f32 0.0, %v543
      %v545 = vpop.f32.mrb[0].mxu0
      %546 = vmatprep.mubr.bf16.mxu0 0
      %547 = vmatmul.mubr.bf16.gmra.mrb[0].mxu0 %v388
      %v548 = vpop.f32.mrb[0].mxu0
      %v549 = vadd.f32 0.0, %v548
      %v550 = vpop.f32.mrb[0].mxu0
      %v551 = vpop.f32.mrb[0].mxu0
      %v552 = vadd.f32 0.0, %v551
      %v553 = vpop.f32.mrb[0].mxu0
      %554 = vdwg.mxu0
      %v557 = vunpack.c.l.b16 %v211
      %v558 = vunpack.c.l.b16 %v212
      %v559 = vpack.c.b16 %v558, %v557
      %v563 = vunpack.c.l.b16 %v243
      %v564 = vunpack.c.l.b16 %v244
      %v565 = vunpack.c.l.b16 %v245
      %v566 = vpack.c.b16 %v564, %v563
      %v567 = vpack.c.b16 %v565, %v565
      %v570 = vsel %vm341, %v559, 0
      %v573 = vsel %vm390, %v567, 0
      %575 = vmatprep.subr.bf16.mxu0 0
      %576 = vmatpush1.bf16.msra.mxu0 %v566
      %577 = vmatprep.subr.bf16.mxu0 0
      %578 = vmatpush1.bf16.msra.mxu0 %v573
      %579 = vmatprep.subr.bf16.mxu0 0
      %580 = vmatpush1.bf16.msra.mxu0 0
      %581 = vmatprep.subr.bf16.mxu0 0
      %582 = vmatpush1.bf16.msra.mxu0 0
      %583 = vmatprep.subr.bf16.mxu0 0
      %584 = vmatpush1.bf16.msra.mxu0 0
      %585 = vmatprep.subr.bf16.mxu0 0
      %586 = vmatpush1.bf16.msra.mxu0 0
      %587 = vmatprep.subr.bf16.mxu0 0
      %588 = vmatpush1.bf16.msra.mxu0 0
      %589 = vmatprep.subr.bf16.mxu0 0
      %590 = vmatpush1.bf16.msra.mxu0 0
      %591 = vmatprep.subr.bf16.mxu0 0
      %592 = vmatpush1.bf16.msra.mxu0 0
      %593 = vmatprep.subr.bf16.mxu0 0
      %594 = vmatpush1.bf16.msra.mxu0 0
      %595 = vmatprep.subr.bf16.mxu0 0
      %596 = vmatpush1.bf16.msra.mxu0 0
      %597 = vmatprep.subr.bf16.mxu0 0
      %598 = vmatpush1.bf16.msra.mxu0 0
      %599 = vmatprep.subr.bf16.mxu0 0
      %600 = vmatpush1.bf16.msra.mxu0 0
      %601 = vmatprep.subr.bf16.mxu0 0
      %602 = vmatpush1.bf16.msra.mxu0 0
      %603 = vmatprep.subr.bf16.mxu0 0
      %604 = vmatpush1.bf16.msra.mxu0 0
      %605 = vmatprep.subr.bf16.mxu0 0
      %606 = vmatpush1.bf16.msra.mxu0 0
      %607 = vmatprep.mubr.bf16.mxu0 0
      %608 = vmatmul.mubr.bf16.gmra.mrb[0].mxu0 %v570
      %v609 = vpop.f32.mrb[0].mxu0
      %v610 = vadd.f32 %v429, %v609
      %v611 = vpop.f32.mrb[0].mxu0
      %v612 = vpop.f32.mrb[0].mxu0
      %v613 = vadd.f32 %v432, %v612
      %v614 = vpop.f32.mrb[0].mxu0
      %615 = vmatprep.mubr.bf16.mxu0 0
      %616 = vmatmul.mubr.bf16.gmra.mrb[0].mxu0 %v343
      %v617 = vpop.f32.mrb[0].mxu0
      %v618 = vadd.f32 %v437, %v617
      %v619 = vpop.f32.mrb[0].mxu0
      %v620 = vpop.f32.mrb[0].mxu0
      %v621 = vadd.f32 %v440, %v620
      %v622 = vpop.f32.mrb[0].mxu0
      %623 = vmatprep.mubr.bf16.mxu0 0
      %624 = vmatmul.mubr.bf16.gmra.mrb[0].mxu0 %v346
      %v625 = vpop.f32.mrb[0].mxu0
      %v626 = vadd.f32 %v445, %v625
      %v627 = vpop.f32.mrb[0].mxu0
      %v628 = vpop.f32.mrb[0].mxu0
      %v629 = vadd.f32 %v448, %v628
      %v630 = vpop.f32.mrb[0].mxu0
      %631 = vmatprep.mubr.bf16.mxu0 0
      %632 = vmatmul.mubr.bf16.gmra.mrb[0].mxu0 %v349
      %v633 = vpop.f32.mrb[0].mxu0
      %v634 = vadd.f32 %v453, %v633
      %v635 = vpop.f32.mrb[0].mxu0
      %v636 = vpop.f32.mrb[0].mxu0
      %v637 = vadd.f32 %v456, %v636
      %v638 = vpop.f32.mrb[0].mxu0
      %639 = vmatprep.mubr.bf16.mxu0 0
      %640 = vmatmul.mubr.bf16.gmra.mrb[0].mxu0 %v352
      %v641 = vpop.f32.mrb[0].mxu0
      %v642 = vadd.f32 %v461, %v641
      %v643 = vpop.f32.mrb[0].mxu0
      %v644 = vpop.f32.mrb[0].mxu0
      %v645 = vadd.f32 %v464, %v644
      %v646 = vpop.f32.mrb[0].mxu0
      %647 = vmatprep.mubr.bf16.mxu0 0
      %648 = vmatmul.mubr.bf16.gmra.mrb[0].mxu0 %v355
      %v649 = vpop.f32.mrb[0].mxu0
      %v650 = vadd.f32 %v469, %v649
      %v651 = vpop.f32.mrb[0].mxu0
      %v652 = vpop.f32.mrb[0].mxu0
      %v653 = vadd.f32 %v472, %v652
      %v654 = vpop.f32.mrb[0].mxu0
      %655 = vmatprep.mubr.bf16.mxu0 0
      %656 = vmatmul.mubr.bf16.gmra.mrb[0].mxu0 %v358
      %v657 = vpop.f32.mrb[0].mxu0
      %v658 = vadd.f32 %v477, %v657
      %v659 = vpop.f32.mrb[0].mxu0
      %v660 = vpop.f32.mrb[0].mxu0
      %v661 = vadd.f32 %v480, %v660
      %v662 = vpop.f32.mrb[0].mxu0
      %663 = vmatprep.mubr.bf16.mxu0 0
      %664 = vmatmul.mubr.bf16.gmra.mrb[0].mxu0 %v361
      %v665 = vpop.f32.mrb[0].mxu0
      %v666 = vadd.f32 %v485, %v665
      %v667 = vpop.f32.mrb[0].mxu0
      %v668 = vpop.f32.mrb[0].mxu0
      %v669 = vadd.f32 %v488, %v668
      %v670 = vpop.f32.mrb[0].mxu0
      %671 = vmatprep.mubr.bf16.mxu0 0
      %672 = vmatmul.mubr.bf16.gmra.mrb[0].mxu0 %v364
      %v673 = vpop.f32.mrb[0].mxu0
      %v674 = vadd.f32 %v493, %v673
      %v675 = vpop.f32.mrb[0].mxu0
      %v676 = vpop.f32.mrb[0].mxu0
      %v677 = vadd.f32 %v496, %v676
      %v678 = vpop.f32.mrb[0].mxu0
      %679 = vmatprep.mubr.bf16.mxu0 0
      %680 = vmatmul.mubr.bf16.gmra.mrb[0].mxu0 %v367
      %v681 = vpop.f32.mrb[0].mxu0
      %v682 = vadd.f32 %v501, %v681
      %v683 = vpop.f32.mrb[0].mxu0
      %v684 = vpop.f32.mrb[0].mxu0
      %v685 = vadd.f32 %v504, %v684
      %v686 = vpop.f32.mrb[0].mxu0
      %687 = vmatprep.mubr.bf16.mxu0 0
      %688 = vmatmul.mubr.bf16.gmra.mrb[0].mxu0 %v370
      %v689 = vpop.f32.mrb[0].mxu0
      %v690 = vadd.f32 %v509, %v689
      %v691 = vpop.f32.mrb[0].mxu0
      %v692 = vpop.f32.mrb[0].mxu0
      %v693 = vadd.f32 %v512, %v692
      %v694 = vpop.f32.mrb[0].mxu0
      %695 = vmatprep.mubr.bf16.mxu0 0
      %696 = vmatmul.mubr.bf16.gmra.mrb[0].mxu0 %v373
      %v697 = vpop.f32.mrb[0].mxu0
      %v698 = vadd.f32 %v517, %v697
      %v699 = vpop.f32.mrb[0].mxu0
      %v700 = vpop.f32.mrb[0].mxu0
      %v701 = vadd.f32 %v520, %v700
      %v702 = vpop.f32.mrb[0].mxu0
      %703 = vmatprep.mubr.bf16.mxu0 0
      %704 = vmatmul.mubr.bf16.gmra.mrb[0].mxu0 %v376
      %v705 = vpop.f32.mrb[0].mxu0
      %v706 = vadd.f32 %v525, %v705
      %v707 = vpop.f32.mrb[0].mxu0
      %v708 = vpop.f32.mrb[0].mxu0
      %v709 = vadd.f32 %v528, %v708
      %v710 = vpop.f32.mrb[0].mxu0
      %711 = vmatprep.mubr.bf16.mxu0 0
      %712 = vmatmul.mubr.bf16.gmra.mrb[0].mxu0 %v379
      %v713 = vpop.f32.mrb[0].mxu0
      %v714 = vadd.f32 %v533, %v713
      %v715 = vpop.f32.mrb[0].mxu0
      %v716 = vpop.f32.mrb[0].mxu0
      %v717 = vadd.f32 %v536, %v716
      %v718 = vpop.f32.mrb[0].mxu0
      %719 = vmatprep.mubr.bf16.mxu0 0
      %720 = vmatmul.mubr.bf16.gmra.mrb[0].mxu0 %v382
      %v721 = vpop.f32.mrb[0].mxu0
      %v722 = vadd.f32 %v541, %v721
      %v723 = vpop.f32.mrb[0].mxu0
      %v724 = vpop.f32.mrb[0].mxu0
      %v725 = vadd.f32 %v544, %v724
      %v726 = vpop.f32.mrb[0].mxu0
      %727 = vmatprep.mubr.bf16.mxu0 0
      %728 = vmatmul.mubr.bf16.gmra.mrb[0].mxu0 %v385
      %v729 = vpop.f32.mrb[0].mxu0
      %v730 = vadd.f32 %v549, %v729
      %v731 = vpop.f32.mrb[0].mxu0
      %v732 = vpop.f32.mrb[0].mxu0
      %v733 = vadd.f32 %v552, %v732
      %v734 = vpop.f32.mrb[0].mxu0
      %735 = vdwg.mxu0
      %v736 = vld [vmem:[%s199 + $0x10] sm:$0xf]
      %v737 = vld [vmem:[%s199 + $0x14] sm:$0xf]
      %v738 = vld [vmem:[%s199 + $0x18] sm:$0xf]
      %v739 = vld [vmem:[%s199 + $0x1c] sm:$0xf]
      %v740 = vld [vmem:[%s199 + $0x20] sm:$0xf]
      %v741 = vld [vmem:[%s199 + $0x24] sm:$0xf]
      %v742 = vld [vmem:[%s199 + $0x28] sm:$0xf]
      %v743 = vld [vmem:[%s199 + $0x2c] sm:$0xf]
      %v744 = vld [vmem:[%s199 + $0x30] sm:$0xf]
      %v745 = vld [vmem:[%s199 + $0x34] sm:$0xf]
      %v746 = vld [vmem:[%s199 + $0x38] sm:$0xf]
      %v747 = vld [vmem:[%s199 + $0x3c] sm:$0xf]
      %v748 = vld [vmem:[%s199 + $0x40] sm:$0xf]
      %v749 = vld [vmem:[%s199 + $0x44] sm:$0xf]
      %v750 = vld [vmem:[%s199 + $0x48] sm:$0xf]
      %v751 = vld [vmem:[%s199 + $0x4c] sm:$0xf]
      %v752 = vld [vmem:[%s199 + $0x50] sm:$0xf]
      %v753 = vld [vmem:[%s199 + $0x54] sm:$0xf]
      %v754 = vld [vmem:[%s199 + $0x58] sm:$0xf]
      %v755 = vld [vmem:[%s199 + $0x5c] sm:$0xf]
      %v756 = vld [vmem:[%s199 + $0x60] sm:$0xf]
      %v757 = vld [vmem:[%s199 + $0x64] sm:$0xf]
      %v758 = vld [vmem:[%s199 + $0x68] sm:$0xf]
      %v759 = vld [vmem:[%s199 + $0x6c] sm:$0xf]
      %v760 = vld [vmem:[%s199 + $0x70] sm:$0xf]
      %v761 = vld [vmem:[%s199 + $0x74] sm:$0xf]
      %v762 = vld [vmem:[%s199 + $0x78] sm:$0xf]
      %v763 = vld [vmem:[%s199 + $0x7c] sm:$0xf]
      %v764 = vld [vmem:[%s199 + $0x80] sm:$0xf]
      %v765 = vld [vmem:[%s199 + $0x84] sm:$0xf]
      %v766 = vld [vmem:[%s199 + $0x88] sm:$0xf]
      %v767 = vld [vmem:[%s199 + $0x8c] sm:$0xf]
      %s768 = scalar_lea.vmem %s1, 24
      %v769 = vld [vmem:[%s768] sm:$0xf]
      %v770 = vld [vmem:[%s768 + $0x4] sm:$0xf]
      %v771 = vld [vmem:[%s768 + $0x8] sm:$0xf]
      %v804 = vunpack.c.l.b16 %v736
      %v805 = vunpack.c.l.b16 %v737
      %v806 = vunpack.c.l.b16 %v738
      %v807 = vunpack.c.l.b16 %v739
      %v808 = vunpack.c.l.b16 %v740
      %v809 = vunpack.c.l.b16 %v741
      %v810 = vunpack.c.l.b16 %v742
      %v811 = vunpack.c.l.b16 %v743
      %v812 = vunpack.c.l.b16 %v744
      %v813 = vunpack.c.l.b16 %v745
      %v814 = vunpack.c.l.b16 %v746
      %v815 = vunpack.c.l.b16 %v747
      %v816 = vunpack.c.l.b16 %v748
      %v817 = vunpack.c.l.b16 %v749
      %v818 = vunpack.c.l.b16 %v750
      %v819 = vunpack.c.l.b16 %v751
      %v820 = vunpack.c.l.b16 %v752
      %v821 = vunpack.c.l.b16 %v753
      %v822 = vunpack.c.l.b16 %v754
      %v823 = vunpack.c.l.b16 %v755
      %v824 = vunpack.c.l.b16 %v756
      %v825 = vunpack.c.l.b16 %v757
      %v826 = vunpack.c.l.b16 %v758
      %v827 = vunpack.c.l.b16 %v759
      %v828 = vunpack.c.l.b16 %v760
      %v829 = vunpack.c.l.b16 %v761
      %v830 = vunpack.c.l.b16 %v762
      %v831 = vunpack.c.l.b16 %v763
      %v832 = vunpack.c.l.b16 %v764
      %v833 = vunpack.c.l.b16 %v765
      %v834 = vunpack.c.l.b16 %v766
      %v835 = vunpack.c.l.b16 %v767
      %v836 = vpack.c.b16 %v805, %v804
      %v837 = vpack.c.b16 %v807, %v806
      %v838 = vpack.c.b16 %v809, %v808
      %v839 = vpack.c.b16 %v811, %v810
      %v840 = vpack.c.b16 %v813, %v812
      %v841 = vpack.c.b16 %v815, %v814
      %v842 = vpack.c.b16 %v817, %v816
      %v843 = vpack.c.b16 %v819, %v818
      %v844 = vpack.c.b16 %v821, %v820
      %v845 = vpack.c.b16 %v823, %v822
      %v846 = vpack.c.b16 %v825, %v824
      %v847 = vpack.c.b16 %v827, %v826
      %v848 = vpack.c.b16 %v829, %v828
      %v849 = vpack.c.b16 %v831, %v830
      %v850 = vpack.c.b16 %v833, %v832
      %v851 = vpack.c.b16 %v835, %v834
      %v855 = vunpack.c.l.b16 %v769
      %v856 = vunpack.c.l.b16 %v770
      %v857 = vunpack.c.l.b16 %v771
      %v858 = vpack.c.b16 %v856, %v855
      %v859 = vpack.c.b16 %v857, %v857
      %v862 = vsel %vm341, %v836, 0
      %v865 = vsel %vm341, %v837, 0
      %v868 = vsel %vm341, %v838, 0
      %v871 = vsel %vm341, %v839, 0
      %v874 = vsel %vm341, %v840, 0
      %v877 = vsel %vm341, %v841, 0
      %v880 = vsel %vm341, %v842, 0
      %v883 = vsel %vm341, %v843, 0
      %v886 = vsel %vm341, %v844, 0
      %v889 = vsel %vm341, %v845, 0
      %v892 = vsel %vm341, %v846, 0
      %v895 = vsel %vm341, %v847, 0
      %v898 = vsel %vm341, %v848, 0
      %v901 = vsel %vm341, %v849, 0
      %v904 = vsel %vm341, %v850, 0
      %v907 = vsel %vm341, %v851, 0
      %v910 = vsel %vm390, %v859, 0
      %912 = vmatprep.subr.bf16.mxu0 0
      %913 = vmatpush1.bf16.msra.mxu0 %v858
      %914 = vmatprep.subr.bf16.mxu0 0
      %915 = vmatpush1.bf16.msra.mxu0 %v910
      %916 = vmatprep.subr.bf16.mxu0 0
      %917 = vmatpush1.bf16.msra.mxu0 0
      %918 = vmatprep.subr.bf16.mxu0 0
      %919 = vmatpush1.bf16.msra.mxu0 0
      %920 = vmatprep.subr.bf16.mxu0 0
      %921 = vmatpush1.bf16.msra.mxu0 0
      %922 = vmatprep.subr.bf16.mxu0 0
      %923 = vmatpush1.bf16.msra.mxu0 0
      %924 = vmatprep.subr.bf16.mxu0 0
      %925 = vmatpush1.bf16.msra.mxu0 0
      %926 = vmatprep.subr.bf16.mxu0 0
      %927 = vmatpush1.bf16.msra.mxu0 0
      %928 = vmatprep.subr.bf16.mxu0 0
      %929 = vmatpush1.bf16.msra.mxu0 0
      %930 = vmatprep.subr.bf16.mxu0 0
      %931 = vmatpush1.bf16.msra.mxu0 0
      %932 = vmatprep.subr.bf16.mxu0 0
      %933 = vmatpush1.bf16.msra.mxu0 0
      %934 = vmatprep.subr.bf16.mxu0 0
      %935 = vmatpush1.bf16.msra.mxu0 0
      %936 = vmatprep.subr.bf16.mxu0 0
      %937 = vmatpush1.bf16.msra.mxu0 0
      %938 = vmatprep.subr.bf16.mxu0 0
      %939 = vmatpush1.bf16.msra.mxu0 0
      %940 = vmatprep.subr.bf16.mxu0 0
      %941 = vmatpush1.bf16.msra.mxu0 0
      %942 = vmatprep.subr.bf16.mxu0 0
      %943 = vmatpush1.bf16.msra.mxu0 0
      %944 = vmatprep.mubr.bf16.mxu0 0
      %945 = vmatmul.mubr.bf16.gmra.mrb[0].mxu0 %v862
      %v946 = vpop.f32.mrb[0].mxu0
      %v947 = vadd.f32 0.0, %v946
      %v948 = vpop.f32.mrb[0].mxu0
      %v949 = vpop.f32.mrb[0].mxu0
      %v950 = vadd.f32 0.0, %v949
      %v951 = vpop.f32.mrb[0].mxu0
      %952 = vmatprep.mubr.bf16.mxu0 0
      %953 = vmatmul.mubr.bf16.gmra.mrb[0].mxu0 %v865
      %v954 = vpop.f32.mrb[0].mxu0
      %v955 = vadd.f32 0.0, %v954
      %v956 = vpop.f32.mrb[0].mxu0
      %v957 = vpop.f32.mrb[0].mxu0
      %v958 = vadd.f32 0.0, %v957
      %v959 = vpop.f32.mrb[0].mxu0
      %960 = vmatprep.mubr.bf16.mxu0 0
      %961 = vmatmul.mubr.bf16.gmra.mrb[0].mxu0 %v868
      %v962 = vpop.f32.mrb[0].mxu0
      %v963 = vadd.f32 0.0, %v962
      %v964 = vpop.f32.mrb[0].mxu0
      %v965 = vpop.f32.mrb[0].mxu0
      %v966 = vadd.f32 0.0, %v965
      %v967 = vpop.f32.mrb[0].mxu0
      %968 = vmatprep.mubr.bf16.mxu0 0
      %969 = vmatmul.mubr.bf16.gmra.mrb[0].mxu0 %v871
      %v970 = vpop.f32.mrb[0].mxu0
      %v971 = vadd.f32 0.0, %v970
      %v972 = vpop.f32.mrb[0].mxu0
      %v973 = vpop.f32.mrb[0].mxu0
      %v974 = vadd.f32 0.0, %v973
      %v975 = vpop.f32.mrb[0].mxu0
      %976 = vmatprep.mubr.bf16.mxu0 0
      %977 = vmatmul.mubr.bf16.gmra.mrb[0].mxu0 %v874
      %v978 = vpop.f32.mrb[0].mxu0
      %v979 = vadd.f32 0.0, %v978
      %v980 = vpop.f32.mrb[0].mxu0
      %v981 = vpop.f32.mrb[0].mxu0
      %v982 = vadd.f32 0.0, %v981
      %v983 = vpop.f32.mrb[0].mxu0
      %984 = vmatprep.mubr.bf16.mxu0 0
      %985 = vmatmul.mubr.bf16.gmra.mrb[0].mxu0 %v877
      %v986 = vpop.f32.mrb[0].mxu0
      %v987 = vadd.f32 0.0, %v986
      %v988 = vpop.f32.mrb[0].mxu0
      %v989 = vpop.f32.mrb[0].mxu0
      %v990 = vadd.f32 0.0, %v989
      %v991 = vpop.f32.mrb[0].mxu0
      %992 = vmatprep.mubr.bf16.mxu0 0
      %993 = vmatmul.mubr.bf16.gmra.mrb[0].mxu0 %v880
      %v994 = vpop.f32.mrb[0].mxu0
      %v995 = vadd.f32 0.0, %v994
      %v996 = vpop.f32.mrb[0].mxu0
      %v997 = vpop.f32.mrb[0].mxu0
      %v998 = vadd.f32 0.0, %v997
      %v999 = vpop.f32.mrb[0].mxu0
      %1000 = vmatprep.mubr.bf16.mxu0 0
      %1001 = vmatmul.mubr.bf16.gmra.mrb[0].mxu0 %v883
      %v1002 = vpop.f32.mrb[0].mxu0
      %v1003 = vadd.f32 0.0, %v1002
      %v1004 = vpop.f32.mrb[0].mxu0
      %v1005 = vpop.f32.mrb[0].mxu0
      %v1006 = vadd.f32 0.0, %v1005
      %v1007 = vpop.f32.mrb[0].mxu0
      %1008 = vmatprep.mubr.bf16.mxu0 0
      %1009 = vmatmul.mubr.bf16.gmra.mrb[0].mxu0 %v886
      %v1010 = vpop.f32.mrb[0].mxu0
      %v1011 = vadd.f32 0.0, %v1010
      %v1012 = vpop.f32.mrb[0].mxu0
      %v1013 = vpop.f32.mrb[0].mxu0
      %v1014 = vadd.f32 0.0, %v1013
      %v1015 = vpop.f32.mrb[0].mxu0
      %1016 = vmatprep.mubr.bf16.mxu0 0
      %1017 = vmatmul.mubr.bf16.gmra.mrb[0].mxu0 %v889
      %v1018 = vpop.f32.mrb[0].mxu0
      %v1019 = vadd.f32 0.0, %v1018
      %v1020 = vpop.f32.mrb[0].mxu0
      %v1021 = vpop.f32.mrb[0].mxu0
      %v1022 = vadd.f32 0.0, %v1021
      %v1023 = vpop.f32.mrb[0].mxu0
      %1024 = vmatprep.mubr.bf16.mxu0 0
      %1025 = vmatmul.mubr.bf16.gmra.mrb[0].mxu0 %v892
      %v1026 = vpop.f32.mrb[0].mxu0
      %v1027 = vadd.f32 0.0, %v1026
      %v1028 = vpop.f32.mrb[0].mxu0
      %v1029 = vpop.f32.mrb[0].mxu0
      %v1030 = vadd.f32 0.0, %v1029
      %v1031 = vpop.f32.mrb[0].mxu0
      %1032 = vmatprep.mubr.bf16.mxu0 0
      %1033 = vmatmul.mubr.bf16.gmra.mrb[0].mxu0 %v895
      %v1034 = vpop.f32.mrb[0].mxu0
      %v1035 = vadd.f32 0.0, %v1034
      %v1036 = vpop.f32.mrb[0].mxu0
      %v1037 = vpop.f32.mrb[0].mxu0
      %v1038 = vadd.f32 0.0, %v1037
      %v1039 = vpop.f32.mrb[0].mxu0
      %1040 = vmatprep.mubr.bf16.mxu0 0
      %1041 = vmatmul.mubr.bf16.gmra.mrb[0].mxu0 %v898
      %v1042 = vpop.f32.mrb[0].mxu0
      %v1043 = vadd.f32 0.0, %v1042
      %v1044 = vpop.f32.mrb[0].mxu0
      %v1045 = vpop.f32.mrb[0].mxu0
      %v1046 = vadd.f32 0.0, %v1045
      %v1047 = vpop.f32.mrb[0].mxu0
      %1048 = vmatprep.mubr.bf16.mxu0 0
      %1049 = vmatmul.mubr.bf16.gmra.mrb[0].mxu0 %v901
      %v1050 = vpop.f32.mrb[0].mxu0
      %v1051 = vadd.f32 0.0, %v1050
      %v1052 = vpop.f32.mrb[0].mxu0
      %v1053 = vpop.f32.mrb[0].mxu0
      %v1054 = vadd.f32 0.0, %v1053
      %v1055 = vpop.f32.mrb[0].mxu0
      %1056 = vmatprep.mubr.bf16.mxu0 0
      %1057 = vmatmul.mubr.bf16.gmra.mrb[0].mxu0 %v904
      %v1058 = vpop.f32.mrb[0].mxu0
      %v1059 = vadd.f32 0.0, %v1058
      %v1060 = vpop.f32.mrb[0].mxu0
      %v1061 = vpop.f32.mrb[0].mxu0
      %v1062 = vadd.f32 0.0, %v1061
      %v1063 = vpop.f32.mrb[0].mxu0
      %1064 = vmatprep.mubr.bf16.mxu0 0
      %1065 = vmatmul.mubr.bf16.gmra.mrb[0].mxu0 %v907
      %v1066 = vpop.f32.mrb[0].mxu0
      %v1067 = vadd.f32 0.0, %v1066
      %v1068 = vpop.f32.mrb[0].mxu0
      %v1069 = vpop.f32.mrb[0].mxu0
      %v1070 = vadd.f32 0.0, %v1069
      %v1071 = vpop.f32.mrb[0].mxu0
      %1072 = vdwg.mxu0
      %v1073 = vadd.f32 %v610, %v947
      %v1074 = vadd.f32 %v613, %v950
      %v1075 = vadd.f32 %v618, %v955
      %v1076 = vadd.f32 %v621, %v958
      %v1077 = vadd.f32 %v626, %v963
      %v1078 = vadd.f32 %v629, %v966
      %v1079 = vadd.f32 %v634, %v971
      %v1080 = vadd.f32 %v637, %v974
      %v1081 = vadd.f32 %v642, %v979
      %v1082 = vadd.f32 %v645, %v982
      %v1083 = vadd.f32 %v650, %v987
      %v1084 = vadd.f32 %v653, %v990
      %v1085 = vadd.f32 %v658, %v995
      %v1086 = vadd.f32 %v661, %v998
      %v1087 = vadd.f32 %v666, %v1003
      %v1088 = vadd.f32 %v669, %v1006
      %v1089 = vadd.f32 %v674, %v1011
      %v1090 = vadd.f32 %v677, %v1014
      %v1091 = vadd.f32 %v682, %v1019
      %v1092 = vadd.f32 %v685, %v1022
      %v1093 = vadd.f32 %v690, %v1027
      %v1094 = vadd.f32 %v693, %v1030
      %v1095 = vadd.f32 %v698, %v1035
      %v1096 = vadd.f32 %v701, %v1038
      %v1097 = vadd.f32 %v706, %v1043
      %v1098 = vadd.f32 %v709, %v1046
      %v1099 = vadd.f32 %v714, %v1051
      %v1100 = vadd.f32 %v717, %v1054
      %v1101 = vadd.f32 %v722, %v1059
      %v1102 = vadd.f32 %v725, %v1062
      %v1103 = vadd.f32 %v730, %v1067
      %v1104 = vadd.f32 %v733, %v1070
      %v1105 = vld [vmem:[%s2] sm:$0x1]
      %v1107 = vlaneseq
      %v1108 = vshrl.u32 %v1107, 7
      %v1109 = vsub.s32 0, %v1108
      %v1110 = vrot.slane %v1105, %v1109
      %v1112 = vadd.f32 %v1073, %v1110
      %v1113 = vadd.f32 %v1074, %v1110
      %v1114 = vadd.f32 %v1075, %v1110
      %v1115 = vadd.f32 %v1076, %v1110
      %v1116 = vadd.f32 %v1077, %v1110
      %v1117 = vadd.f32 %v1078, %v1110
      %v1118 = vadd.f32 %v1079, %v1110
      %v1119 = vadd.f32 %v1080, %v1110
      %v1120 = vadd.f32 %v1081, %v1110
      %v1121 = vadd.f32 %v1082, %v1110
      %v1122 = vadd.f32 %v1083, %v1110
      %v1123 = vadd.f32 %v1084, %v1110
      %v1124 = vadd.f32 %v1085, %v1110
      %v1125 = vadd.f32 %v1086, %v1110
      %v1126 = vadd.f32 %v1087, %v1110
      %v1127 = vadd.f32 %v1088, %v1110
      %v1128 = vadd.f32 %v1089, %v1110
      %v1129 = vadd.f32 %v1090, %v1110
      %v1130 = vadd.f32 %v1091, %v1110
      %v1131 = vadd.f32 %v1092, %v1110
      %v1132 = vadd.f32 %v1093, %v1110
      %v1133 = vadd.f32 %v1094, %v1110
      %v1134 = vadd.f32 %v1095, %v1110
      %v1135 = vadd.f32 %v1096, %v1110
      %v1136 = vadd.f32 %v1097, %v1110
      %v1137 = vadd.f32 %v1098, %v1110
      %v1138 = vadd.f32 %v1099, %v1110
      %v1139 = vadd.f32 %v1100, %v1110
      %v1140 = vadd.f32 %v1101, %v1110
      %v1141 = vadd.f32 %v1102, %v1110
      %v1142 = vadd.f32 %v1103, %v1110
      %v1143 = vadd.f32 %v1104, %v1110
      %v1144 = vpack.c.bf16 %v1113, %v1112
      %v1145 = vpack.c.bf16 %v1115, %v1114
      %v1146 = vpack.c.bf16 %v1117, %v1116
      %v1147 = vpack.c.bf16 %v1119, %v1118
      %v1148 = vpack.c.bf16 %v1121, %v1120
      %v1149 = vpack.c.bf16 %v1123, %v1122
      %v1150 = vpack.c.bf16 %v1125, %v1124
      %v1151 = vpack.c.bf16 %v1127, %v1126
      %v1152 = vpack.c.bf16 %v1129, %v1128
      %v1153 = vpack.c.bf16 %v1131, %v1130
      %v1154 = vpack.c.bf16 %v1133, %v1132
      %v1155 = vpack.c.bf16 %v1135, %v1134
      %v1156 = vpack.c.bf16 %v1137, %v1136
      %v1157 = vpack.c.bf16 %v1139, %v1138
      %v1158 = vpack.c.bf16 %v1141, %v1140
      %v1159 = vpack.c.bf16 %v1143, %v1142
      %v1176 = vunpack.c.l.b16 %v1144
      %v1177 = vunpack.c.h.b16 %v1144
      %v1178 = vunpack.c.l.b16 %v1145
      %v1179 = vunpack.c.h.b16 %v1145
      %v1180 = vunpack.c.l.b16 %v1146
      %v1181 = vunpack.c.h.b16 %v1146
      %v1182 = vunpack.c.l.b16 %v1147
      %v1183 = vunpack.c.h.b16 %v1147
      %v1184 = vunpack.c.l.b16 %v1148
      %v1185 = vunpack.c.h.b16 %v1148
      %v1186 = vunpack.c.l.b16 %v1149
      %v1187 = vunpack.c.h.b16 %v1149
      %v1188 = vunpack.c.l.b16 %v1150
      %v1189 = vunpack.c.h.b16 %v1150
      %v1190 = vunpack.c.l.b16 %v1151
      %v1191 = vunpack.c.h.b16 %v1151
      %v1192 = vunpack.c.l.b16 %v1152
      %v1193 = vunpack.c.h.b16 %v1152
      %v1194 = vunpack.c.l.b16 %v1153
      %v1195 = vunpack.c.h.b16 %v1153
      %v1196 = vunpack.c.l.b16 %v1154
      %v1197 = vunpack.c.h.b16 %v1154
      %v1198 = vunpack.c.l.b16 %v1155
      %v1199 = vunpack.c.h.b16 %v1155
      %v1200 = vunpack.c.l.b16 %v1156
      %v1201 = vunpack.c.h.b16 %v1156
      %v1202 = vunpack.c.l.b16 %v1157
      %v1203 = vunpack.c.h.b16 %v1157
      %v1204 = vunpack.c.l.b16 %v1158
      %v1205 = vunpack.c.h.b16 %v1158
      %v1206 = vunpack.c.l.b16 %v1159
      %v1207 = vunpack.c.h.b16 %v1159
      %v1208 = vpack.c.b16 %v1176, %v1176
      %v1209 = vpack.c.b16 %v1177, %v1177
      %v1210 = vpack.c.b16 %v1178, %v1178
      %v1211 = vpack.c.b16 %v1179, %v1179
      %v1212 = vpack.c.b16 %v1180, %v1180
      %v1213 = vpack.c.b16 %v1181, %v1181
      %v1214 = vpack.c.b16 %v1182, %v1182
      %v1215 = vpack.c.b16 %v1183, %v1183
      %v1216 = vpack.c.b16 %v1184, %v1184
      %v1217 = vpack.c.b16 %v1185, %v1185
      %v1218 = vpack.c.b16 %v1186, %v1186
      %v1219 = vpack.c.b16 %v1187, %v1187
      %v1220 = vpack.c.b16 %v1188, %v1188
      %v1221 = vpack.c.b16 %v1189, %v1189
      %v1222 = vpack.c.b16 %v1190, %v1190
      %v1223 = vpack.c.b16 %v1191, %v1191
      %v1224 = vpack.c.b16 %v1192, %v1192
      %v1225 = vpack.c.b16 %v1193, %v1193
      %v1226 = vpack.c.b16 %v1194, %v1194
      %v1227 = vpack.c.b16 %v1195, %v1195
      %v1228 = vpack.c.b16 %v1196, %v1196
      %v1229 = vpack.c.b16 %v1197, %v1197
      %v1230 = vpack.c.b16 %v1198, %v1198
      %v1231 = vpack.c.b16 %v1199, %v1199
      %v1232 = vpack.c.b16 %v1200, %v1200
      %v1233 = vpack.c.b16 %v1201, %v1201
      %v1234 = vpack.c.b16 %v1202, %v1202
      %v1235 = vpack.c.b16 %v1203, %v1203
      %v1236 = vpack.c.b16 %v1204, %v1204
      %v1237 = vpack.c.b16 %v1205, %v1205
      %v1238 = vpack.c.b16 %v1206, %v1206
      %v1239 = vpack.c.b16 %v1207, %v1207
      %1272 = vst [vmem:[%s204] sm:$0xf] %v1208
      %1273 = vst [vmem:[%s204 + $0x4] sm:$0xf] %v1209
      %1274 = vst [vmem:[%s204 + $0x8] sm:$0xf] %v1210
      %1275 = vst [vmem:[%s204 + $0xc] sm:$0xf] %v1211
      %1276 = vst [vmem:[%s204 + $0x10] sm:$0xf] %v1212
      %1277 = vst [vmem:[%s204 + $0x14] sm:$0xf] %v1213
      %1278 = vst [vmem:[%s204 + $0x18] sm:$0xf] %v1214
      %1279 = vst [vmem:[%s204 + $0x1c] sm:$0xf] %v1215
      %1280 = vst [vmem:[%s204 + $0x20] sm:$0xf] %v1216
      %1281 = vst [vmem:[%s204 + $0x24] sm:$0xf] %v1217
      %1282 = vst [vmem:[%s204 + $0x28] sm:$0xf] %v1218
      %1283 = vst [vmem:[%s204 + $0x2c] sm:$0xf] %v1219
      %1284 = vst [vmem:[%s204 + $0x30] sm:$0xf] %v1220
      %1285 = vst [vmem:[%s204 + $0x34] sm:$0xf] %v1221
      %1286 = vst [vmem:[%s204 + $0x38] sm:$0xf] %v1222
      %1287 = vst [vmem:[%s204 + $0x3c] sm:$0xf] %v1223
      %1288 = vst [vmem:[%s204 + $0x40] sm:$0xf] %v1224
      %1289 = vst [vmem:[%s204 + $0x44] sm:$0xf] %v1225
      %1290 = vst [vmem:[%s204 + $0x48] sm:$0xf] %v1226
      %1291 = vst [vmem:[%s204 + $0x4c] sm:$0xf] %v1227
      %1292 = vst [vmem:[%s204 + $0x50] sm:$0xf] %v1228
      %1293 = vst [vmem:[%s204 + $0x54] sm:$0xf] %v1229
      %1294 = vst [vmem:[%s204 + $0x58] sm:$0xf] %v1230
      %1295 = vst [vmem:[%s204 + $0x5c] sm:$0xf] %v1231
      %1296 = vst [vmem:[%s204 + $0x60] sm:$0xf] %v1232
      %1297 = vst [vmem:[%s204 + $0x64] sm:$0xf] %v1233
      %1298 = vst [vmem:[%s204 + $0x68] sm:$0xf] %v1234
      %1299 = vst [vmem:[%s204 + $0x6c] sm:$0xf] %v1235
      %1300 = vst [vmem:[%s204 + $0x70] sm:$0xf] %v1236
      %1301 = vst [vmem:[%s204 + $0x74] sm:$0xf] %v1237
      %1302 = vst [vmem:[%s204 + $0x78] sm:$0xf] %v1238
      %1303 = vst [vmem:[%s204 + $0x7c] sm:$0xf] %v1239
      %v1304 = vadd.f32 %v1112, %v1113
      %v1305 = vadd.f32 %v1304, %v1114
      %v1306 = vadd.f32 %v1305, %v1115
      %v1307 = vadd.f32 %v1306, %v1116
      %v1308 = vadd.f32 %v1307, %v1117
      %v1309 = vadd.f32 %v1308, %v1118
      %v1310 = vadd.f32 %v1309, %v1119
      %v1311 = vadd.f32 %v1310, %v1120
      %v1312 = vadd.f32 %v1311, %v1121
      %v1313 = vadd.f32 %v1312, %v1122
      %v1314 = vadd.f32 %v1313, %v1123
      %v1315 = vadd.f32 %v1314, %v1124
      %v1316 = vadd.f32 %v1315, %v1125
      %v1317 = vadd.f32 %v1316, %v1126
      %v1318 = vadd.f32 %v1317, %v1127
      %v1319 = vadd.f32 %v1318, %v1128
      %v1320 = vadd.f32 %v1319, %v1129
      %v1321 = vadd.f32 %v1320, %v1130
      %v1322 = vadd.f32 %v1321, %v1131
      %v1323 = vadd.f32 %v1322, %v1132
      %v1324 = vadd.f32 %v1323, %v1133
      %v1325 = vadd.f32 %v1324, %v1134
      %v1326 = vadd.f32 %v1325, %v1135
      %v1327 = vadd.f32 %v1326, %v1136
      %v1328 = vadd.f32 %v1327, %v1137
      %v1329 = vadd.f32 %v1328, %v1138
      %v1330 = vadd.f32 %v1329, %v1139
      %v1331 = vadd.f32 %v1330, %v1140
      %v1332 = vadd.f32 %v1331, %v1141
      %v1333 = vadd.f32 %v1332, %v1142
      %v1334 = vadd.f32 %v1333, %v1143
      %v1335 = vrot.slane %v1334, 4
      %v1336 = vadd.f32 %v1334, %v1335
      %v1337 = vrot.slane %v1336, 2
      %v1338 = vadd.f32 %v1336, %v1337
      %v1339 = vrot.slane %v1338, 1
      %v1340 = vadd.f32 %v1338, %v1339
      %v1341 = vmul.f32 %v1112, %v1112
      %v1342 = vmul.f32 %v1113, %v1113
      %v1343 = vmul.f32 %v1114, %v1114
      %v1344 = vmul.f32 %v1115, %v1115
      %v1345 = vmul.f32 %v1116, %v1116
      %v1346 = vmul.f32 %v1117, %v1117
      %v1347 = vmul.f32 %v1118, %v1118
      %v1348 = vmul.f32 %v1119, %v1119
      %v1349 = vmul.f32 %v1120, %v1120
      %v1350 = vmul.f32 %v1121, %v1121
      %v1351 = vmul.f32 %v1122, %v1122
      %v1352 = vmul.f32 %v1123, %v1123
      %v1353 = vmul.f32 %v1124, %v1124
      %v1354 = vmul.f32 %v1125, %v1125
      %v1355 = vmul.f32 %v1126, %v1126
      %v1356 = vmul.f32 %v1127, %v1127
      %v1357 = vmul.f32 %v1128, %v1128
      %v1358 = vmul.f32 %v1129, %v1129
      %v1359 = vmul.f32 %v1130, %v1130
      %v1360 = vmul.f32 %v1131, %v1131
      %v1361 = vmul.f32 %v1132, %v1132
      %v1362 = vmul.f32 %v1133, %v1133
      %v1363 = vmul.f32 %v1134, %v1134
      %v1364 = vmul.f32 %v1135, %v1135
      %v1365 = vmul.f32 %v1136, %v1136
      %v1366 = vmul.f32 %v1137, %v1137
      %v1367 = vmul.f32 %v1138, %v1138
      %v1368 = vmul.f32 %v1139, %v1139
      %v1369 = vmul.f32 %v1140, %v1140
      %v1370 = vmul.f32 %v1141, %v1141
      %v1371 = vmul.f32 %v1142, %v1142
      %v1372 = vmul.f32 %v1143, %v1143
      %v1373 = vadd.f32 %v1341, %v1342
      %v1374 = vadd.f32 %v1373, %v1343
      %v1375 = vadd.f32 %v1374, %v1344
      %v1376 = vadd.f32 %v1375, %v1345
      %v1377 = vadd.f32 %v1376, %v1346
      %v1378 = vadd.f32 %v1377, %v1347
      %v1379 = vadd.f32 %v1378, %v1348
      %v1380 = vadd.f32 %v1379, %v1349
      %v1381 = vadd.f32 %v1380, %v1350
      %v1382 = vadd.f32 %v1381, %v1351
      %v1383 = vadd.f32 %v1382, %v1352
      %v1384 = vadd.f32 %v1383, %v1353
      %v1385 = vadd.f32 %v1384, %v1354
      %v1386 = vadd.f32 %v1385, %v1355
      %v1387 = vadd.f32 %v1386, %v1356
      %v1388 = vadd.f32 %v1387, %v1357
      %v1389 = vadd.f32 %v1388, %v1358
      %v1390 = vadd.f32 %v1389, %v1359
      %v1391 = vadd.f32 %v1390, %v1360
      %v1392 = vadd.f32 %v1391, %v1361
      %v1393 = vadd.f32 %v1392, %v1362
      %v1394 = vadd.f32 %v1393, %v1363
      %v1395 = vadd.f32 %v1394, %v1364
      %v1396 = vadd.f32 %v1395, %v1365
      %v1397 = vadd.f32 %v1396, %v1366
      %v1398 = vadd.f32 %v1397, %v1367
      %v1399 = vadd.f32 %v1398, %v1368
      %v1400 = vadd.f32 %v1399, %v1369
      %v1401 = vadd.f32 %v1400, %v1370
      %v1402 = vadd.f32 %v1401, %v1371
      %v1403 = vadd.f32 %v1402, %v1372
      %v1404 = vrot.slane %v1403, 4
      %v1405 = vadd.f32 %v1403, %v1404
      %v1406 = vrot.slane %v1405, 2
      %v1407 = vadd.f32 %v1405, %v1406
      %v1408 = vrot.slane %v1407, 1
      %v1409 = vadd.f32 %v1407, %v1408
      %vm1410 = vcmask 1040384
      %v1411 = vsel %vm1410, %v1340, %v1409
      %1412 = vst [vmem:[%s209] sm:$0x3] %v1411
      %s1413 = smul.u32 32, %s16
      %p1414 = scmp.lt.s32.totalorder %s1413, 63
      %s1415 = scalar_select %p1414, %s1413, 63
      %s1416 = smul.addr %s1415, 4
      %s1417 = scalar_lea.vmem %s3, %s1416
      %p1418 = scmp.lt.s32.totalorder %s16, 1
      %s1419 = scalar_select %p1418, %s16, 1
      %s1420 = smul.addr %s1419, 2
      %s1421 = scalar_lea.vmem %s4, %s1420
      // Predicated region
      $region33: #{double_conv.6} parent=31 // pred_check
        %p1422 = pneg %p102
      $region34: #{double_conv.6} parent=31 // pred_check_branch
        %1424 = sbr.rel (%p1422) target = $region36
      $region35: #{double_conv.6} parent=31 // pred_region
        %s1425 = smul.u32 32, %s16
      $region36: #{double_conv.6} parent=31 // pred_fallthru
        _
      // Predicated region
      $region37: #{double_conv.6} parent=31 // pred_check
        %p1426 = pneg %p128
      $region38: #{double_conv.6} parent=31 // pred_check_branch
        %1428 = sbr.rel (%p1426) target = $region40
      $region39: #{double_conv.6} parent=31 // pred_region
        _
      $region40: #{double_conv.6} parent=31 // pred_fallthru
        _
    $region32: #{double_conv.6} parent=5 // pred_fallthru
      _
    %p1429 = scmp.le.s32.totalorder 2, %s11
    // Predicated region
    $region41: #{double_conv.6} parent=5 // pred_check
      %p1430 = pneg %p1429
    $region42: #{double_conv.6} parent=5 // pred_check_branch
      %1432 = sbr.rel (%p1430) target = $region44
    $region43: #{double_conv.6} parent=5 // pred_region
      %s1433 = ssub.s32 %s11, 2
      // Predicated region
      $region45: #{double_conv.6} parent=43 // pred_check
        %p1434 = pneg %p108
      $region46: #{double_conv.6} parent=43 // pred_check_branch
        %1436 = sbr.rel (%p1434) target = $region48
      $region47: #{double_conv.6} parent=43 // pred_region
        %s1437 = smul.u32 32, %s17
        %p1438 = scmp.lt.s32.totalorder %s1437, 63
        %s1439 = scalar_select %p1438, %s1437, 63
        %s1440 = smul.addr %s1439, 4
        %s1441 = scalar_lea.vmem %s3, %s1440
      $region48: #{double_conv.6} parent=43 // pred_fallthru
        _
      // Predicated region
      $region49: #{double_conv.6} parent=43 // pred_check
        %p1442 = pneg %p134
      $region50: #{double_conv.6} parent=43 // pred_check_branch
        %1444 = sbr.rel (%p1442) target = $region52
      $region51: #{double_conv.6} parent=43 // pred_region
        %p1445 = scmp.lt.s32.totalorder %s17, 1
        %s1446 = scalar_select %p1445, %s17, 1
        %s1447 = smul.addr %s1446, 2
        %s1448 = scalar_lea.vmem %s4, %s1447
      $region52: #{double_conv.6} parent=43 // pred_fallthru
        _
    $region44: #{double_conv.6} parent=5 // pred_fallthru
      _
  $region6: #{double_conv.6} parent=0 // loop_footer
    %s15 = sadd.s32 1, %s11
  $region7: #{double_conv.6} parent=0 // loop_footer_branch
    %10 = sbr.rel target = $region3
  $region8: #{double_conv.6} parent=0 // loop_exit
    _

</llo_original>
